<compile_context>
chip_gen: v7x
topology: tpu7x:2x2x1
jax: 0.10.0
libtpu: 0.0.40
codegen_flags: <defaults>
</compile_context>

<pallas_src>
import functools

import jax
import jax.numpy as jnp
from jax.experimental import pallas as pl
from jax.experimental.pallas import tpu as pltpu


def event_layer_kernel(
    tgt_ref, mem_ref,
    ln_w_ref, ln_b_ref,
    sa_wqkv_ref, sa_bqkv_ref, sa_wo_ref, sa_bo_ref,
    ca_wq_ref, ca_bq_ref, ca_wkv_ref, ca_bkv_ref, ca_wo_ref, ca_bo_ref,
    lin1_w_ref, lin1_b_ref, lin2_w_ref, lin2_b_ref,
    out_ref, attn_ref,
    *, nhead,
):
    f32 = jnp.float32
    B, L, E = tgt_ref.shape
    S = mem_ref.shape[1]
    H = nhead
    hd = E // H
    scale = 1.0 / float(hd) ** 0.5

    ln_w = ln_w_ref[...]          # (5, E)
    ln_b = ln_b_ref[...]          # (5, E)

    def layernorm(x, i, eps=1e-5):
        mu = jnp.mean(x, axis=-1, keepdims=True)
        xc = x - mu
        var = jnp.mean(xc * xc, axis=-1, keepdims=True)
        return xc * jax.lax.rsqrt(var + eps) * ln_w[i:i + 1, :] + ln_b[i:i + 1, :]

    def split_heads(x2, seq):
        # (B*seq, E) -> (H*B, seq, hd); only lane slices + leading-dim reshapes.
        parts = [x2[:, h * hd:(h + 1) * hd].reshape(B, seq, hd) for h in range(H)]
        return jnp.concatenate(parts, axis=0)

    def merge_heads(xg, seq):
        # (H*B, seq, hd) -> (B*seq, E); in-register head concat (no scratch stores).
        parts = [xg[h * B:(h + 1) * B].reshape(B * seq, hd) for h in range(H)]
        return jnp.concatenate(parts, axis=-1)

    def attention(q2, k2, v2, lq, lk, wo, bo):
        # q2: (B*lq, E), k2/v2: (B*lk, E); weights already in x @ W layout.
        qh = split_heads(q2, lq) * scale                   # (G, lq, hd), G = H*B
        kh = split_heads(k2, lk)                           # (G, lk, hd)
        vh = split_heads(v2, lk)                           # (G, lk, hd)
        s = jnp.einsum('gqd,gkd->gqk', qh, kh, preferred_element_type=f32)
        s = s - jnp.max(s, axis=-1, keepdims=True)
        e = jnp.exp(s)
        p = e * pl.reciprocal(jnp.sum(e, axis=-1, keepdims=True), approx=True)
        ctx = jnp.einsum('gqk,gkd->gqd', p, vh, preferred_element_type=f32)
        o = jnp.dot(merge_heads(ctx, lq), wo, preferred_element_type=f32) + bo
        return o, p

    # Flatten (B, L, E) -> (B*L, E): leading-dim merge only (rows ordered (b, l)).
    x = tgt_ref[...].reshape(B * L, E).astype(f32)
    m = mem_ref[...].reshape(B * S, E).astype(f32)

    x = layernorm(x, 0)           # norm1(tgt)
    m = layernorm(m, 1)           # norm2(memory)

    # --- self-attention (result replaces tgt, exactly as in the reference forward) ---
    qkv = jnp.dot(x, sa_wqkv_ref[...], preferred_element_type=f32) + sa_bqkv_ref[...]
    x, _ = attention(qkv[:, :E], qkv[:, E:2 * E], qkv[:, 2 * E:], L, L,
                     sa_wo_ref[...], sa_bo_ref[...])
    x = layernorm(x, 2)           # norm3

    # --- cross-attention + residual (dropout1 identity in eval mode) ---
    q = jnp.dot(x, ca_wq_ref[...], preferred_element_type=f32) + ca_bq_ref[...]
    kv = jnp.dot(m, ca_wkv_ref[...], preferred_element_type=f32) + ca_bkv_ref[...]
    x2, p = attention(q, kv[:, :E], kv[:, E:], L, S, ca_wo_ref[...], ca_bo_ref[...])
    x = layernorm(x + x2, 3)      # norm4

    # attention weights averaged over heads (PyTorch default) -> (B, L, S)
    attn = p[0:B]
    for h in range(1, H):
        attn = attn + p[h * B:(h + 1) * B]
    attn_ref[...] = (attn * (1.0 / H)).astype(attn_ref.dtype)

    # --- feed-forward + residual (dropout / dropout2 identity in eval mode) ---
    hid = jnp.maximum(
        jnp.dot(x, lin1_w_ref[...], preferred_element_type=f32) + lin1_b_ref[...], 0.0)
    ff = jnp.dot(hid, lin2_w_ref[...], preferred_element_type=f32) + lin2_b_ref[...]
    x = layernorm(x + ff, 4)      # norm5

    out_ref[...] = x.reshape(B, L, E).astype(out_ref.dtype)


def _choose_batch_tile(n, l):
    """Largest divisor of n (bounded so B_tile*L stays modest), but keep >= 2 grid
    steps when possible so both v7x TensorCores get work via 'parallel' semantics."""
    cap = max(1, 512 // max(l, 1))
    bt = 1
    for d in range(1, n + 1):
        if n % d == 0 and d <= cap:
            bt = d
    if bt == n and n >= 2:
        best = 1
        for d in range(1, n):
            if n % d == 0:
                best = d
        bt = best
    return bt


def event_layer_forward(tgt, memory, params, nhead):
    """tgt: (L, N, E), memory: (S, N, E) -> (out (L, N, E), attn_weights (N, L, S)).

    `params` uses PyTorch naming/layout; all splitting/transposing happens here
    (host side) so the kernel never transposes or slices packed weights."""
    L, N, E = tgt.shape
    S = memory.shape[0]

    # ---- host-side parameter preprocessing: x @ W layout everywhere ----
    ln_w = jnp.stack([params[f"norm{i}.weight"] for i in range(1, 6)])   # (5, E)
    ln_b = jnp.stack([params[f"norm{i}.bias"] for i in range(1, 6)])     # (5, E)

    sa_wqkv = params["self_attn.in_proj_weight"].T                       # (E, 3E)
    sa_bqkv = params["self_attn.in_proj_bias"][None, :]                  # (1, 3E)
    sa_wo = params["self_attn.out_proj.weight"].T                        # (E, E)
    sa_bo = params["self_attn.out_proj.bias"][None, :]                   # (1, E)

    ca_in_w = params["multihead_attn.in_proj_weight"]
    ca_in_b = params["multihead_attn.in_proj_bias"]
    ca_wq = ca_in_w[:E].T                                                # (E, E)
    ca_bq = ca_in_b[None, :E]                                            # (1, E)
    ca_wkv = ca_in_w[E:].T                                               # (E, 2E)
    ca_bkv = ca_in_b[None, E:]                                           # (1, 2E)
    ca_wo = params["multihead_attn.out_proj.weight"].T                   # (E, E)
    ca_bo = params["multihead_attn.out_proj.bias"][None, :]              # (1, E)

    lin1_w = params["linear1.weight"].T                                  # (E, F)
    lin1_b = params["linear1.bias"][None, :]                             # (1, F)
    lin2_w = params["linear2.weight"].T                                  # (F, E)
    lin2_b = params["linear2.bias"][None, :]                             # (1, E)

    param_arrays = [ln_w, ln_b, sa_wqkv, sa_bqkv, sa_wo, sa_bo,
                    ca_wq, ca_bq, ca_wkv, ca_bkv, ca_wo, ca_bo,
                    lin1_w, lin1_b, lin2_w, lin2_b]

    # Batch-major so the grid tiles the leading axis with full (seq, E) minor dims.
    tgt_b = jnp.transpose(tgt, (1, 0, 2))     # (N, L, E)
    mem_b = jnp.transpose(memory, (1, 0, 2))  # (N, S, E)

    bt = _choose_batch_tile(N, L)
    grid = (N // bt,)

    def resident(p):
        nd = p.ndim
        return pl.BlockSpec(p.shape, lambda b, _n=nd: (0,) * _n)  # constant -> stays resident

    in_specs = [
        pl.BlockSpec((bt, L, E), lambda b: (b, 0, 0)),
        pl.BlockSpec((bt, S, E), lambda b: (b, 0, 0)),
    ] + [resident(p) for p in param_arrays]
    out_specs = [
        pl.BlockSpec((bt, L, E), lambda b: (b, 0, 0)),
        pl.BlockSpec((bt, L, S), lambda b: (b, 0, 0)),
    ]
    out_shape = [
        jax.ShapeDtypeStruct((N, L, E), tgt.dtype),
        jax.ShapeDtypeStruct((N, L, S), jnp.float32),
    ]

    kernel = functools.partial(event_layer_kernel, nhead=nhead)
    out_b, attn = pl.pallas_call(
        kernel,
        grid=grid,
        in_specs=in_specs,
        out_specs=out_specs,
        out_shape=out_shape,
        compiler_params=pltpu.CompilerParams(dimension_semantics=("parallel",)),
    )(tgt_b, mem_b, *param_arrays)

    return jnp.transpose(out_b, (1, 0, 2)), attn


def init_params(d_model, nhead, dim_ff, key):
    """Parameters in PyTorch naming / layout (LayerNorm default init: w=1, b=0)."""
    keys = iter(jax.random.split(key, 12))

    def rnd(shape, scale=0.1):
        return (scale * jax.random.normal(next(keys), shape)).astype(jnp.float32)

    p = {}
    for i in range(1, 6):
        p[f"norm{i}.weight"] = jnp.ones((d_model,), jnp.float32)
        p[f"norm{i}.bias"] = jnp.zeros((d_model,), jnp.float32)
    for name in ("self_attn", "multihead_attn"):
        p[f"{name}.in_proj_weight"] = rnd((3 * d_model, d_model))
        p[f"{name}.in_proj_bias"] = rnd((3 * d_model,))
        p[f"{name}.out_proj.weight"] = rnd((d_model, d_model))
        p[f"{name}.out_proj.bias"] = rnd((d_model,))
    p["linear1.weight"] = rnd((dim_ff, d_model))
    p["linear1.bias"] = rnd((dim_ff,))
    p["linear2.weight"] = rnd((d_model, dim_ff))
    p["linear2.bias"] = rnd((d_model,))
    return p


if __name__ == "__main__":
    d_model, nhead, dim_ff = 32, 4, 64
    L, S, N = 8, 16, 4      # target seq len, memory seq len, batch

    key = jax.random.PRNGKey(0)
    k_tgt, k_mem, k_par = jax.random.split(key, 3)

    tgt = jax.random.normal(k_tgt, (L, N, d_model), dtype=jnp.float32)
    memory = jax.random.normal(k_mem, (S, N, d_model), dtype=jnp.float32)
    params = init_params(d_model, nhead, dim_ff, k_par)

    out, attn_w = event_layer_forward(tgt, memory, params, nhead)
    out = jax.block_until_ready(out)
    attn_w = jax.block_until_ready(attn_w)

    assert out.shape == (L, N, d_model)
    assert attn_w.shape == (N, L, S)
    assert bool(jnp.all(jnp.isfinite(out))) and bool(jnp.all(jnp.isfinite(attn_w)))
    # attention weight rows sum to ~1 (approx EUP reciprocal in the softmax)
    assert bool(jnp.allclose(jnp.sum(attn_w, axis=-1), 1.0, atol=1e-2))

    print("KERNEL_OK")
</pallas_src>

<mosaic_0001>
module attributes {stable_mosaic.version = 11 : i64} {
  func.func @event_layer_kernel(%arg0: i32, %arg1: memref<2x8x32xf32, #tpu.memory_space<vmem>>, %arg2: memref<2x16x32xf32, #tpu.memory_space<vmem>>, %arg3: memref<5x32xf32, #tpu.memory_space<vmem>>, %arg4: memref<5x32xf32, #tpu.memory_space<vmem>>, %arg5: memref<32x96xf32, #tpu.memory_space<vmem>>, %arg6: memref<1x96xf32, #tpu.memory_space<vmem>>, %arg7: memref<32x32xf32, #tpu.memory_space<vmem>>, %arg8: memref<1x32xf32, #tpu.memory_space<vmem>>, %arg9: memref<32x32xf32, #tpu.memory_space<vmem>>, %arg10: memref<1x32xf32, #tpu.memory_space<vmem>>, %arg11: memref<32x64xf32, #tpu.memory_space<vmem>>, %arg12: memref<1x64xf32, #tpu.memory_space<vmem>>, %arg13: memref<32x32xf32, #tpu.memory_space<vmem>>, %arg14: memref<1x32xf32, #tpu.memory_space<vmem>>, %arg15: memref<32x64xf32, #tpu.memory_space<vmem>>, %arg16: memref<1x64xf32, #tpu.memory_space<vmem>>, %arg17: memref<64x32xf32, #tpu.memory_space<vmem>>, %arg18: memref<1x32xf32, #tpu.memory_space<vmem>>, %arg19: memref<2x8x32xf32, #tpu.memory_space<vmem>>, %arg20: memref<2x8x16xf32, #tpu.memory_space<vmem>>) attributes {dimension_semantics = [#tpu.dimension_semantics<parallel>], iteration_bounds = array<i64: 2>, scalar_prefetch = 0 : i64, scratch_operands = 0 : i64, tpu.core_type = #tpu.core_type<tc>, window_params = [{transform_indices = @transform_0, window_bounds = array<i64: 2, 8, 32>}, {transform_indices = @transform_1, window_bounds = array<i64: 2, 16, 32>}, {pipeline_mode = #tpu.pipeline_mode<synchronous>, transform_indices = @transform_2, window_bounds = array<i64: 5, 32>}, {pipeline_mode = #tpu.pipeline_mode<synchronous>, transform_indices = @transform_3, window_bounds = array<i64: 5, 32>}, {pipeline_mode = #tpu.pipeline_mode<synchronous>, transform_indices = @transform_4, window_bounds = array<i64: 32, 96>}, {pipeline_mode = #tpu.pipeline_mode<synchronous>, transform_indices = @transform_5, window_bounds = array<i64: 1, 96>}, {pipeline_mode = #tpu.pipeline_mode<synchronous>, transform_indices = @transform_6, window_bounds = array<i64: 32, 32>}, {pipeline_mode = #tpu.pipeline_mode<synchronous>, transform_indices = @transform_7, window_bounds = array<i64: 1, 32>}, {pipeline_mode = #tpu.pipeline_mode<synchronous>, transform_indices = @transform_8, window_bounds = array<i64: 32, 32>}, {pipeline_mode = #tpu.pipeline_mode<synchronous>, transform_indices = @transform_9, window_bounds = array<i64: 1, 32>}, {pipeline_mode = #tpu.pipeline_mode<synchronous>, transform_indices = @transform_10, window_bounds = array<i64: 32, 64>}, {pipeline_mode = #tpu.pipeline_mode<synchronous>, transform_indices = @transform_11, window_bounds = array<i64: 1, 64>}, {pipeline_mode = #tpu.pipeline_mode<synchronous>, transform_indices = @transform_12, window_bounds = array<i64: 32, 32>}, {pipeline_mode = #tpu.pipeline_mode<synchronous>, transform_indices = @transform_13, window_bounds = array<i64: 1, 32>}, {pipeline_mode = #tpu.pipeline_mode<synchronous>, transform_indices = @transform_14, window_bounds = array<i64: 32, 64>}, {pipeline_mode = #tpu.pipeline_mode<synchronous>, transform_indices = @transform_15, window_bounds = array<i64: 1, 64>}, {pipeline_mode = #tpu.pipeline_mode<synchronous>, transform_indices = @transform_16, window_bounds = array<i64: 64, 32>}, {pipeline_mode = #tpu.pipeline_mode<synchronous>, transform_indices = @transform_17, window_bounds = array<i64: 1, 32>}, {transform_indices = @transform_18, window_bounds = array<i64: 2, 8, 32>}, {transform_indices = @transform_19, window_bounds = array<i64: 2, 8, 16>}]} {
    %c0 = arith.constant 0 : index
    %c0_0 = arith.constant 0 : index
    %0 = vector.load %arg3[%c0, %c0_0] : memref<5x32xf32, #tpu.memory_space<vmem>>, vector<5x32xf32>
    %c0_1 = arith.constant 0 : index
    %c0_2 = arith.constant 0 : index
    %1 = vector.load %arg4[%c0_1, %c0_2] : memref<5x32xf32, #tpu.memory_space<vmem>>, vector<5x32xf32>
    %c0_3 = arith.constant 0 : index
    %c0_4 = arith.constant 0 : index
    %c0_5 = arith.constant 0 : index
    %2 = vector.load %arg1[%c0_3, %c0_4, %c0_5] : memref<2x8x32xf32, #tpu.memory_space<vmem>>, vector<2x8x32xf32>
    %3 = vector.shape_cast %2 : vector<2x8x32xf32> to vector<16x32xf32>
    %c0_6 = arith.constant 0 : index
    %c0_7 = arith.constant 0 : index
    %c0_8 = arith.constant 0 : index
    %4 = vector.load %arg2[%c0_6, %c0_7, %c0_8] : memref<2x16x32xf32, #tpu.memory_space<vmem>>, vector<2x16x32xf32>
    %5 = vector.shape_cast %4 : vector<2x16x32xf32> to vector<32x32xf32>
    %cst = arith.constant dense<0.000000e+00> : vector<16xf32>
    %6 = vector.multi_reduction <add>, %3, %cst [1] : vector<16x32xf32> to vector<16xf32>
    %7 = vector.shape_cast %6 : vector<16xf32> to vector<16x1xf32>
    %cst_9 = arith.constant 3.200000e+01 : f32
    %8 = vector.broadcast %cst_9 : f32 to vector<16x1xf32>
    %9 = arith.divf %7, %8 : vector<16x1xf32>
    %10 = vector.broadcast %9 : vector<16x1xf32> to vector<16x32xf32>
    %11 = arith.subf %3, %10 : vector<16x32xf32>
    %12 = arith.mulf %11, %11 : vector<16x32xf32>
    %cst_10 = arith.constant dense<0.000000e+00> : vector<16xf32>
    %13 = vector.multi_reduction <add>, %12, %cst_10 [1] : vector<16x32xf32> to vector<16xf32>
    %14 = vector.shape_cast %13 : vector<16xf32> to vector<16x1xf32>
    %cst_11 = arith.constant 3.200000e+01 : f32
    %15 = vector.broadcast %cst_11 : f32 to vector<16x1xf32>
    %16 = arith.divf %14, %15 : vector<16x1xf32>
    %cst_12 = arith.constant 9.99999974E-6 : f32
    %17 = vector.broadcast %cst_12 : f32 to vector<16x1xf32>
    %18 = arith.addf %16, %17 : vector<16x1xf32>
    %19 = math.rsqrt %18 : vector<16x1xf32>
    %20 = vector.broadcast %19 : vector<16x1xf32> to vector<16x32xf32>
    %21 = arith.mulf %11, %20 : vector<16x32xf32>
    %22 = vector.extract_strided_slice %0 {offsets = [0, 0], sizes = [1, 32], strides = [1, 1]} : vector<5x32xf32> to vector<1x32xf32>
    %23 = vector.broadcast %22 : vector<1x32xf32> to vector<16x32xf32>
    %24 = arith.mulf %21, %23 : vector<16x32xf32>
    %25 = vector.extract_strided_slice %1 {offsets = [0, 0], sizes = [1, 32], strides = [1, 1]} : vector<5x32xf32> to vector<1x32xf32>
    %26 = vector.broadcast %25 : vector<1x32xf32> to vector<16x32xf32>
    %27 = arith.addf %24, %26 : vector<16x32xf32>
    %cst_13 = arith.constant dense<0.000000e+00> : vector<32xf32>
    %28 = vector.multi_reduction <add>, %5, %cst_13 [1] : vector<32x32xf32> to vector<32xf32>
    %29 = vector.shape_cast %28 : vector<32xf32> to vector<32x1xf32>
    %cst_14 = arith.constant 3.200000e+01 : f32
    %30 = vector.broadcast %cst_14 : f32 to vector<32x1xf32>
    %31 = arith.divf %29, %30 : vector<32x1xf32>
    %32 = vector.broadcast %31 : vector<32x1xf32> to vector<32x32xf32>
    %33 = arith.subf %5, %32 : vector<32x32xf32>
    %34 = arith.mulf %33, %33 : vector<32x32xf32>
    %cst_15 = arith.constant dense<0.000000e+00> : vector<32xf32>
    %35 = vector.multi_reduction <add>, %34, %cst_15 [1] : vector<32x32xf32> to vector<32xf32>
    %36 = vector.shape_cast %35 : vector<32xf32> to vector<32x1xf32>
    %cst_16 = arith.constant 3.200000e+01 : f32
    %37 = vector.broadcast %cst_16 : f32 to vector<32x1xf32>
    %38 = arith.divf %36, %37 : vector<32x1xf32>
    %cst_17 = arith.constant 9.99999974E-6 : f32
    %39 = vector.broadcast %cst_17 : f32 to vector<32x1xf32>
    %40 = arith.addf %38, %39 : vector<32x1xf32>
    %41 = math.rsqrt %40 : vector<32x1xf32>
    %42 = vector.broadcast %41 : vector<32x1xf32> to vector<32x32xf32>
    %43 = arith.mulf %33, %42 : vector<32x32xf32>
    %44 = vector.extract_strided_slice %0 {offsets = [1, 0], sizes = [1, 32], strides = [1, 1]} : vector<5x32xf32> to vector<1x32xf32>
    %45 = vector.broadcast %44 : vector<1x32xf32> to vector<32x32xf32>
    %46 = arith.mulf %43, %45 : vector<32x32xf32>
    %47 = vector.extract_strided_slice %1 {offsets = [1, 0], sizes = [1, 32], strides = [1, 1]} : vector<5x32xf32> to vector<1x32xf32>
    %48 = vector.broadcast %47 : vector<1x32xf32> to vector<32x32xf32>
    %49 = arith.addf %46, %48 : vector<32x32xf32>
    %c0_18 = arith.constant 0 : index
    %c0_19 = arith.constant 0 : index
    %50 = vector.load %arg5[%c0_18, %c0_19] : memref<32x96xf32, #tpu.memory_space<vmem>>, vector<32x96xf32>
    %cst_20 = arith.constant dense<0.000000e+00> : vector<16x96xf32>
    %51 = tpu.matmul %27, %50, %cst_20 {dimension_numbers = #tpu.dot_dimension_numbers<[1], [0], [0], [1], [0, 0, 1, 1], [], []>} : vector<16x32xf32>, vector<32x96xf32>, vector<16x96xf32> -> vector<16x96xf32>
    %c0_21 = arith.constant 0 : index
    %c0_22 = arith.constant 0 : index
    %52 = vector.load %arg6[%c0_21, %c0_22] : memref<1x96xf32, #tpu.memory_space<vmem>>, vector<1x96xf32>
    %53 = vector.broadcast %52 : vector<1x96xf32> to vector<16x96xf32>
    %54 = arith.addf %51, %53 : vector<16x96xf32>
    %55 = vector.extract_strided_slice %54 {offsets = [0, 0], sizes = [16, 32], strides = [1, 1]} : vector<16x96xf32> to vector<16x32xf32>
    %56 = vector.extract_strided_slice %54 {offsets = [0, 32], sizes = [16, 32], strides = [1, 1]} : vector<16x96xf32> to vector<16x32xf32>
    %57 = vector.extract_strided_slice %54 {offsets = [0, 64], sizes = [16, 32], strides = [1, 1]} : vector<16x96xf32> to vector<16x32xf32>
    %c0_23 = arith.constant 0 : index
    %c0_24 = arith.constant 0 : index
    %58 = vector.load %arg7[%c0_23, %c0_24] : memref<32x32xf32, #tpu.memory_space<vmem>>, vector<32x32xf32>
    %c0_25 = arith.constant 0 : index
    %c0_26 = arith.constant 0 : index
    %59 = vector.load %arg8[%c0_25, %c0_26] : memref<1x32xf32, #tpu.memory_space<vmem>>, vector<1x32xf32>
    %60 = vector.extract_strided_slice %55 {offsets = [0, 0], sizes = [16, 8], strides = [1, 1]} : vector<16x32xf32> to vector<16x8xf32>
    %61 = vector.shape_cast %60 : vector<16x8xf32> to vector<2x8x8xf32>
    %62 = vector.extract_strided_slice %55 {offsets = [0, 8], sizes = [16, 8], strides = [1, 1]} : vector<16x32xf32> to vector<16x8xf32>
    %63 = vector.shape_cast %62 : vector<16x8xf32> to vector<2x8x8xf32>
    %64 = vector.extract_strided_slice %55 {offsets = [0, 16], sizes = [16, 8], strides = [1, 1]} : vector<16x32xf32> to vector<16x8xf32>
    %65 = vector.shape_cast %64 : vector<16x8xf32> to vector<2x8x8xf32>
    %66 = vector.extract_strided_slice %55 {offsets = [0, 24], sizes = [16, 8], strides = [1, 1]} : vector<16x32xf32> to vector<16x8xf32>
    %67 = vector.shape_cast %66 : vector<16x8xf32> to vector<2x8x8xf32>
    %68 = tpu.concatenate %61, %63, %65, %67 in 0 : vector<2x8x8xf32>, vector<2x8x8xf32>, vector<2x8x8xf32>, vector<2x8x8xf32> -> vector<8x8x8xf32>
    %cst_27 = arith.constant 0.353553385 : f32
    %69 = vector.broadcast %cst_27 : f32 to vector<8x8x8xf32>
    %70 = arith.mulf %68, %69 : vector<8x8x8xf32>
    %71 = vector.extract_strided_slice %56 {offsets = [0, 0], sizes = [16, 8], strides = [1, 1]} : vector<16x32xf32> to vector<16x8xf32>
    %72 = vector.shape_cast %71 : vector<16x8xf32> to vector<2x8x8xf32>
    %73 = vector.extract_strided_slice %56 {offsets = [0, 8], sizes = [16, 8], strides = [1, 1]} : vector<16x32xf32> to vector<16x8xf32>
    %74 = vector.shape_cast %73 : vector<16x8xf32> to vector<2x8x8xf32>
    %75 = vector.extract_strided_slice %56 {offsets = [0, 16], sizes = [16, 8], strides = [1, 1]} : vector<16x32xf32> to vector<16x8xf32>
    %76 = vector.shape_cast %75 : vector<16x8xf32> to vector<2x8x8xf32>
    %77 = vector.extract_strided_slice %56 {offsets = [0, 24], sizes = [16, 8], strides = [1, 1]} : vector<16x32xf32> to vector<16x8xf32>
    %78 = vector.shape_cast %77 : vector<16x8xf32> to vector<2x8x8xf32>
    %79 = tpu.concatenate %72, %74, %76, %78 in 0 : vector<2x8x8xf32>, vector<2x8x8xf32>, vector<2x8x8xf32>, vector<2x8x8xf32> -> vector<8x8x8xf32>
    %80 = vector.extract_strided_slice %57 {offsets = [0, 0], sizes = [16, 8], strides = [1, 1]} : vector<16x32xf32> to vector<16x8xf32>
    %81 = vector.shape_cast %80 : vector<16x8xf32> to vector<2x8x8xf32>
    %82 = vector.extract_strided_slice %57 {offsets = [0, 8], sizes = [16, 8], strides = [1, 1]} : vector<16x32xf32> to vector<16x8xf32>
    %83 = vector.shape_cast %82 : vector<16x8xf32> to vector<2x8x8xf32>
    %84 = vector.extract_strided_slice %57 {offsets = [0, 16], sizes = [16, 8], strides = [1, 1]} : vector<16x32xf32> to vector<16x8xf32>
    %85 = vector.shape_cast %84 : vector<16x8xf32> to vector<2x8x8xf32>
    %86 = vector.extract_strided_slice %57 {offsets = [0, 24], sizes = [16, 8], strides = [1, 1]} : vector<16x32xf32> to vector<16x8xf32>
    %87 = vector.shape_cast %86 : vector<16x8xf32> to vector<2x8x8xf32>
    %88 = tpu.concatenate %81, %83, %85, %87 in 0 : vector<2x8x8xf32>, vector<2x8x8xf32>, vector<2x8x8xf32>, vector<2x8x8xf32> -> vector<8x8x8xf32>
    "tpu.trace_start"() <{level = 10 : i32, message = "gqd,gkd->gqk"}> : () -> ()
    %cst_28 = arith.constant dense<0.000000e+00> : vector<8x8x8xf32>
    %89 = tpu.matmul %70, %79, %cst_28 {dimension_numbers = #tpu.dot_dimension_numbers<[2], [2], [1], [1], [0, 0, 0, 1, 1, 1], [0], [0]>} : vector<8x8x8xf32>, vector<8x8x8xf32>, vector<8x8x8xf32> -> vector<8x8x8xf32>
    "tpu.trace_stop"() : () -> ()
    %cst_29 = arith.constant dense<0xFF800000> : vector<8x8xf32>
    %90 = vector.multi_reduction <maximumf>, %89, %cst_29 [2] : vector<8x8x8xf32> to vector<8x8xf32>
    %91 = vector.shape_cast %90 : vector<8x8xf32> to vector<8x8x1xf32>
    %92 = vector.broadcast %91 : vector<8x8x1xf32> to vector<8x8x8xf32>
    %93 = arith.subf %89, %92 : vector<8x8x8xf32>
    %94 = math.exp %93 : vector<8x8x8xf32>
    %cst_30 = arith.constant dense<0.000000e+00> : vector<8x8xf32>
    %95 = vector.multi_reduction <add>, %94, %cst_30 [2] : vector<8x8x8xf32> to vector<8x8xf32>
    %96 = vector.shape_cast %95 : vector<8x8xf32> to vector<8x8x1xf32>
    %97 = tpu.reciprocal %96 {approx = true} : vector<8x8x1xf32> -> vector<8x8x1xf32>
    %98 = vector.broadcast %97 : vector<8x8x1xf32> to vector<8x8x8xf32>
    %99 = arith.mulf %94, %98 : vector<8x8x8xf32>
    "tpu.trace_start"() <{level = 10 : i32, message = "gqk,gkd->gqd"}> : () -> ()
    %cst_31 = arith.constant dense<0.000000e+00> : vector<8x8x8xf32>
    %100 = tpu.matmul %99, %88, %cst_31 {dimension_numbers = #tpu.dot_dimension_numbers<[2], [1], [1], [2], [0, 0, 0, 1, 1, 2], [0], [0]>} : vector<8x8x8xf32>, vector<8x8x8xf32>, vector<8x8x8xf32> -> vector<8x8x8xf32>
    "tpu.trace_stop"() : () -> ()
    %101 = vector.extract_strided_slice %100 {offsets = [0, 0, 0], sizes = [2, 8, 8], strides = [1, 1, 1]} : vector<8x8x8xf32> to vector<2x8x8xf32>
    %102 = vector.shape_cast %101 : vector<2x8x8xf32> to vector<16x8xf32>
    %103 = vector.extract_strided_slice %100 {offsets = [2, 0, 0], sizes = [2, 8, 8], strides = [1, 1, 1]} : vector<8x8x8xf32> to vector<2x8x8xf32>
    %104 = vector.shape_cast %103 : vector<2x8x8xf32> to vector<16x8xf32>
    %105 = vector.extract_strided_slice %100 {offsets = [4, 0, 0], sizes = [2, 8, 8], strides = [1, 1, 1]} : vector<8x8x8xf32> to vector<2x8x8xf32>
    %106 = vector.shape_cast %105 : vector<2x8x8xf32> to vector<16x8xf32>
    %107 = vector.extract_strided_slice %100 {offsets = [6, 0, 0], sizes = [2, 8, 8], strides = [1, 1, 1]} : vector<8x8x8xf32> to vector<2x8x8xf32>
    %108 = vector.shape_cast %107 : vector<2x8x8xf32> to vector<16x8xf32>
    %109 = tpu.concatenate %102, %104, %106, %108 in 1 : vector<16x8xf32>, vector<16x8xf32>, vector<16x8xf32>, vector<16x8xf32> -> vector<16x32xf32>
    %cst_32 = arith.constant dense<0.000000e+00> : vector<16x32xf32>
    %110 = tpu.matmul %109, %58, %cst_32 {dimension_numbers = #tpu.dot_dimension_numbers<[1], [0], [0], [1], [0, 0, 1, 1], [], []>} : vector<16x32xf32>, vector<32x32xf32>, vector<16x32xf32> -> vector<16x32xf32>
    %111 = vector.broadcast %59 : vector<1x32xf32> to vector<16x32xf32>
    %112 = arith.addf %110, %111 : vector<16x32xf32>
    %cst_33 = arith.constant dense<0.000000e+00> : vector<16xf32>
    %113 = vector.multi_reduction <add>, %112, %cst_33 [1] : vector<16x32xf32> to vector<16xf32>
    %114 = vector.shape_cast %113 : vector<16xf32> to vector<16x1xf32>
    %cst_34 = arith.constant 3.200000e+01 : f32
    %115 = vector.broadcast %cst_34 : f32 to vector<16x1xf32>
    %116 = arith.divf %114, %115 : vector<16x1xf32>
    %117 = vector.broadcast %116 : vector<16x1xf32> to vector<16x32xf32>
    %118 = arith.subf %112, %117 : vector<16x32xf32>
    %119 = arith.mulf %118, %118 : vector<16x32xf32>
    %cst_35 = arith.constant dense<0.000000e+00> : vector<16xf32>
    %120 = vector.multi_reduction <add>, %119, %cst_35 [1] : vector<16x32xf32> to vector<16xf32>
    %121 = vector.shape_cast %120 : vector<16xf32> to vector<16x1xf32>
    %cst_36 = arith.constant 3.200000e+01 : f32
    %122 = vector.broadcast %cst_36 : f32 to vector<16x1xf32>
    %123 = arith.divf %121, %122 : vector<16x1xf32>
    %cst_37 = arith.constant 9.99999974E-6 : f32
    %124 = vector.broadcast %cst_37 : f32 to vector<16x1xf32>
    %125 = arith.addf %123, %124 : vector<16x1xf32>
    %126 = math.rsqrt %125 : vector<16x1xf32>
    %127 = vector.broadcast %126 : vector<16x1xf32> to vector<16x32xf32>
    %128 = arith.mulf %118, %127 : vector<16x32xf32>
    %129 = vector.extract_strided_slice %0 {offsets = [2, 0], sizes = [1, 32], strides = [1, 1]} : vector<5x32xf32> to vector<1x32xf32>
    %130 = vector.broadcast %129 : vector<1x32xf32> to vector<16x32xf32>
    %131 = arith.mulf %128, %130 : vector<16x32xf32>
    %132 = vector.extract_strided_slice %1 {offsets = [2, 0], sizes = [1, 32], strides = [1, 1]} : vector<5x32xf32> to vector<1x32xf32>
    %133 = vector.broadcast %132 : vector<1x32xf32> to vector<16x32xf32>
    %134 = arith.addf %131, %133 : vector<16x32xf32>
    %c0_38 = arith.constant 0 : index
    %c0_39 = arith.constant 0 : index
    %135 = vector.load %arg9[%c0_38, %c0_39] : memref<32x32xf32, #tpu.memory_space<vmem>>, vector<32x32xf32>
    %cst_40 = arith.constant dense<0.000000e+00> : vector<16x32xf32>
    %136 = tpu.matmul %134, %135, %cst_40 {dimension_numbers = #tpu.dot_dimension_numbers<[1], [0], [0], [1], [0, 0, 1, 1], [], []>} : vector<16x32xf32>, vector<32x32xf32>, vector<16x32xf32> -> vector<16x32xf32>
    %c0_41 = arith.constant 0 : index
    %c0_42 = arith.constant 0 : index
    %137 = vector.load %arg10[%c0_41, %c0_42] : memref<1x32xf32, #tpu.memory_space<vmem>>, vector<1x32xf32>
    %138 = vector.broadcast %137 : vector<1x32xf32> to vector<16x32xf32>
    %139 = arith.addf %136, %138 : vector<16x32xf32>
    %c0_43 = arith.constant 0 : index
    %c0_44 = arith.constant 0 : index
    %140 = vector.load %arg11[%c0_43, %c0_44] : memref<32x64xf32, #tpu.memory_space<vmem>>, vector<32x64xf32>
    %cst_45 = arith.constant dense<0.000000e+00> : vector<32x64xf32>
    %141 = tpu.matmul %49, %140, %cst_45 {dimension_numbers = #tpu.dot_dimension_numbers<[1], [0], [0], [1], [0, 0, 1, 1], [], []>} : vector<32x32xf32>, vector<32x64xf32>, vector<32x64xf32> -> vector<32x64xf32>
    %c0_46 = arith.constant 0 : index
    %c0_47 = arith.constant 0 : index
    %142 = vector.load %arg12[%c0_46, %c0_47] : memref<1x64xf32, #tpu.memory_space<vmem>>, vector<1x64xf32>
    %143 = vector.broadcast %142 : vector<1x64xf32> to vector<32x64xf32>
    %144 = arith.addf %141, %143 : vector<32x64xf32>
    %145 = vector.extract_strided_slice %144 {offsets = [0, 0], sizes = [32, 32], strides = [1, 1]} : vector<32x64xf32> to vector<32x32xf32>
    %146 = vector.extract_strided_slice %144 {offsets = [0, 32], sizes = [32, 32], strides = [1, 1]} : vector<32x64xf32> to vector<32x32xf32>
    %c0_48 = arith.constant 0 : index
    %c0_49 = arith.constant 0 : index
    %147 = vector.load %arg13[%c0_48, %c0_49] : memref<32x32xf32, #tpu.memory_space<vmem>>, vector<32x32xf32>
    %c0_50 = arith.constant 0 : index
    %c0_51 = arith.constant 0 : index
    %148 = vector.load %arg14[%c0_50, %c0_51] : memref<1x32xf32, #tpu.memory_space<vmem>>, vector<1x32xf32>
    %149 = vector.extract_strided_slice %139 {offsets = [0, 0], sizes = [16, 8], strides = [1, 1]} : vector<16x32xf32> to vector<16x8xf32>
    %150 = vector.shape_cast %149 : vector<16x8xf32> to vector<2x8x8xf32>
    %151 = vector.extract_strided_slice %139 {offsets = [0, 8], sizes = [16, 8], strides = [1, 1]} : vector<16x32xf32> to vector<16x8xf32>
    %152 = vector.shape_cast %151 : vector<16x8xf32> to vector<2x8x8xf32>
    %153 = vector.extract_strided_slice %139 {offsets = [0, 16], sizes = [16, 8], strides = [1, 1]} : vector<16x32xf32> to vector<16x8xf32>
    %154 = vector.shape_cast %153 : vector<16x8xf32> to vector<2x8x8xf32>
    %155 = vector.extract_strided_slice %139 {offsets = [0, 24], sizes = [16, 8], strides = [1, 1]} : vector<16x32xf32> to vector<16x8xf32>
    %156 = vector.shape_cast %155 : vector<16x8xf32> to vector<2x8x8xf32>
    %157 = tpu.concatenate %150, %152, %154, %156 in 0 : vector<2x8x8xf32>, vector<2x8x8xf32>, vector<2x8x8xf32>, vector<2x8x8xf32> -> vector<8x8x8xf32>
    %cst_52 = arith.constant 0.353553385 : f32
    %158 = vector.broadcast %cst_52 : f32 to vector<8x8x8xf32>
    %159 = arith.mulf %157, %158 : vector<8x8x8xf32>
    %160 = vector.extract_strided_slice %145 {offsets = [0, 0], sizes = [32, 8], strides = [1, 1]} : vector<32x32xf32> to vector<32x8xf32>
    %161 = vector.shape_cast %160 : vector<32x8xf32> to vector<2x16x8xf32>
    %162 = vector.extract_strided_slice %145 {offsets = [0, 8], sizes = [32, 8], strides = [1, 1]} : vector<32x32xf32> to vector<32x8xf32>
    %163 = vector.shape_cast %162 : vector<32x8xf32> to vector<2x16x8xf32>
    %164 = vector.extract_strided_slice %145 {offsets = [0, 16], sizes = [32, 8], strides = [1, 1]} : vector<32x32xf32> to vector<32x8xf32>
    %165 = vector.shape_cast %164 : vector<32x8xf32> to vector<2x16x8xf32>
    %166 = vector.extract_strided_slice %145 {offsets = [0, 24], sizes = [32, 8], strides = [1, 1]} : vector<32x32xf32> to vector<32x8xf32>
    %167 = vector.shape_cast %166 : vector<32x8xf32> to vector<2x16x8xf32>
    %168 = tpu.concatenate %161, %163, %165, %167 in 0 : vector<2x16x8xf32>, vector<2x16x8xf32>, vector<2x16x8xf32>, vector<2x16x8xf32> -> vector<8x16x8xf32>
    %169 = vector.extract_strided_slice %146 {offsets = [0, 0], sizes = [32, 8], strides = [1, 1]} : vector<32x32xf32> to vector<32x8xf32>
    %170 = vector.shape_cast %169 : vector<32x8xf32> to vector<2x16x8xf32>
    %171 = vector.extract_strided_slice %146 {offsets = [0, 8], sizes = [32, 8], strides = [1, 1]} : vector<32x32xf32> to vector<32x8xf32>
    %172 = vector.shape_cast %171 : vector<32x8xf32> to vector<2x16x8xf32>
    %173 = vector.extract_strided_slice %146 {offsets = [0, 16], sizes = [32, 8], strides = [1, 1]} : vector<32x32xf32> to vector<32x8xf32>
    %174 = vector.shape_cast %173 : vector<32x8xf32> to vector<2x16x8xf32>
    %175 = vector.extract_strided_slice %146 {offsets = [0, 24], sizes = [32, 8], strides = [1, 1]} : vector<32x32xf32> to vector<32x8xf32>
    %176 = vector.shape_cast %175 : vector<32x8xf32> to vector<2x16x8xf32>
    %177 = tpu.concatenate %170, %172, %174, %176 in 0 : vector<2x16x8xf32>, vector<2x16x8xf32>, vector<2x16x8xf32>, vector<2x16x8xf32> -> vector<8x16x8xf32>
    "tpu.trace_start"() <{level = 10 : i32, message = "gqd,gkd->gqk"}> : () -> ()
    %cst_53 = arith.constant dense<0.000000e+00> : vector<8x8x16xf32>
    %178 = tpu.matmul %159, %168, %cst_53 {dimension_numbers = #tpu.dot_dimension_numbers<[2], [2], [1], [1], [0, 0, 0, 1, 1, 1], [0], [0]>} : vector<8x8x8xf32>, vector<8x16x8xf32>, vector<8x8x16xf32> -> vector<8x8x16xf32>
    "tpu.trace_stop"() : () -> ()
    %cst_54 = arith.constant dense<0xFF800000> : vector<8x8xf32>
    %179 = vector.multi_reduction <maximumf>, %178, %cst_54 [2] : vector<8x8x16xf32> to vector<8x8xf32>
    %180 = vector.shape_cast %179 : vector<8x8xf32> to vector<8x8x1xf32>
    %181 = vector.broadcast %180 : vector<8x8x1xf32> to vector<8x8x16xf32>
    %182 = arith.subf %178, %181 : vector<8x8x16xf32>
    %183 = math.exp %182 : vector<8x8x16xf32>
    %cst_55 = arith.constant dense<0.000000e+00> : vector<8x8xf32>
    %184 = vector.multi_reduction <add>, %183, %cst_55 [2] : vector<8x8x16xf32> to vector<8x8xf32>
    %185 = vector.shape_cast %184 : vector<8x8xf32> to vector<8x8x1xf32>
    %186 = tpu.reciprocal %185 {approx = true} : vector<8x8x1xf32> -> vector<8x8x1xf32>
    %187 = vector.broadcast %186 : vector<8x8x1xf32> to vector<8x8x16xf32>
    %188 = arith.mulf %183, %187 : vector<8x8x16xf32>
    "tpu.trace_start"() <{level = 10 : i32, message = "gqk,gkd->gqd"}> : () -> ()
    %cst_56 = arith.constant dense<0.000000e+00> : vector<8x8x8xf32>
    %189 = tpu.matmul %188, %177, %cst_56 {dimension_numbers = #tpu.dot_dimension_numbers<[2], [1], [1], [2], [0, 0, 0, 1, 1, 2], [0], [0]>} : vector<8x8x16xf32>, vector<8x16x8xf32>, vector<8x8x8xf32> -> vector<8x8x8xf32>
    "tpu.trace_stop"() : () -> ()
    %190 = vector.extract_strided_slice %189 {offsets = [0, 0, 0], sizes = [2, 8, 8], strides = [1, 1, 1]} : vector<8x8x8xf32> to vector<2x8x8xf32>
    %191 = vector.shape_cast %190 : vector<2x8x8xf32> to vector<16x8xf32>
    %192 = vector.extract_strided_slice %189 {offsets = [2, 0, 0], sizes = [2, 8, 8], strides = [1, 1, 1]} : vector<8x8x8xf32> to vector<2x8x8xf32>
    %193 = vector.shape_cast %192 : vector<2x8x8xf32> to vector<16x8xf32>
    %194 = vector.extract_strided_slice %189 {offsets = [4, 0, 0], sizes = [2, 8, 8], strides = [1, 1, 1]} : vector<8x8x8xf32> to vector<2x8x8xf32>
    %195 = vector.shape_cast %194 : vector<2x8x8xf32> to vector<16x8xf32>
    %196 = vector.extract_strided_slice %189 {offsets = [6, 0, 0], sizes = [2, 8, 8], strides = [1, 1, 1]} : vector<8x8x8xf32> to vector<2x8x8xf32>
    %197 = vector.shape_cast %196 : vector<2x8x8xf32> to vector<16x8xf32>
    %198 = tpu.concatenate %191, %193, %195, %197 in 1 : vector<16x8xf32>, vector<16x8xf32>, vector<16x8xf32>, vector<16x8xf32> -> vector<16x32xf32>
    %cst_57 = arith.constant dense<0.000000e+00> : vector<16x32xf32>
    %199 = tpu.matmul %198, %147, %cst_57 {dimension_numbers = #tpu.dot_dimension_numbers<[1], [0], [0], [1], [0, 0, 1, 1], [], []>} : vector<16x32xf32>, vector<32x32xf32>, vector<16x32xf32> -> vector<16x32xf32>
    %200 = vector.broadcast %148 : vector<1x32xf32> to vector<16x32xf32>
    %201 = arith.addf %199, %200 : vector<16x32xf32>
    %202 = arith.addf %134, %201 : vector<16x32xf32>
    %cst_58 = arith.constant dense<0.000000e+00> : vector<16xf32>
    %203 = vector.multi_reduction <add>, %202, %cst_58 [1] : vector<16x32xf32> to vector<16xf32>
    %204 = vector.shape_cast %203 : vector<16xf32> to vector<16x1xf32>
    %cst_59 = arith.constant 3.200000e+01 : f32
    %205 = vector.broadcast %cst_59 : f32 to vector<16x1xf32>
    %206 = arith.divf %204, %205 : vector<16x1xf32>
    %207 = vector.broadcast %206 : vector<16x1xf32> to vector<16x32xf32>
    %208 = arith.subf %202, %207 : vector<16x32xf32>
    %209 = arith.mulf %208, %208 : vector<16x32xf32>
    %cst_60 = arith.constant dense<0.000000e+00> : vector<16xf32>
    %210 = vector.multi_reduction <add>, %209, %cst_60 [1] : vector<16x32xf32> to vector<16xf32>
    %211 = vector.shape_cast %210 : vector<16xf32> to vector<16x1xf32>
    %cst_61 = arith.constant 3.200000e+01 : f32
    %212 = vector.broadcast %cst_61 : f32 to vector<16x1xf32>
    %213 = arith.divf %211, %212 : vector<16x1xf32>
    %cst_62 = arith.constant 9.99999974E-6 : f32
    %214 = vector.broadcast %cst_62 : f32 to vector<16x1xf32>
    %215 = arith.addf %213, %214 : vector<16x1xf32>
    %216 = math.rsqrt %215 : vector<16x1xf32>
    %217 = vector.broadcast %216 : vector<16x1xf32> to vector<16x32xf32>
    %218 = arith.mulf %208, %217 : vector<16x32xf32>
    %219 = vector.extract_strided_slice %0 {offsets = [3, 0], sizes = [1, 32], strides = [1, 1]} : vector<5x32xf32> to vector<1x32xf32>
    %220 = vector.broadcast %219 : vector<1x32xf32> to vector<16x32xf32>
    %221 = arith.mulf %218, %220 : vector<16x32xf32>
    %222 = vector.extract_strided_slice %1 {offsets = [3, 0], sizes = [1, 32], strides = [1, 1]} : vector<5x32xf32> to vector<1x32xf32>
    %223 = vector.broadcast %222 : vector<1x32xf32> to vector<16x32xf32>
    %224 = arith.addf %221, %223 : vector<16x32xf32>
    %225 = vector.extract_strided_slice %188 {offsets = [0, 0, 0], sizes = [2, 8, 16], strides = [1, 1, 1]} : vector<8x8x16xf32> to vector<2x8x16xf32>
    %226 = vector.extract_strided_slice %188 {offsets = [2, 0, 0], sizes = [2, 8, 16], strides = [1, 1, 1]} : vector<8x8x16xf32> to vector<2x8x16xf32>
    %227 = arith.addf %225, %226 : vector<2x8x16xf32>
    %228 = vector.extract_strided_slice %188 {offsets = [4, 0, 0], sizes = [2, 8, 16], strides = [1, 1, 1]} : vector<8x8x16xf32> to vector<2x8x16xf32>
    %229 = arith.addf %227, %228 : vector<2x8x16xf32>
    %230 = vector.extract_strided_slice %188 {offsets = [6, 0, 0], sizes = [2, 8, 16], strides = [1, 1, 1]} : vector<8x8x16xf32> to vector<2x8x16xf32>
    %231 = arith.addf %229, %230 : vector<2x8x16xf32>
    %cst_63 = arith.constant 2.500000e-01 : f32
    %232 = vector.broadcast %cst_63 : f32 to vector<2x8x16xf32>
    %233 = arith.mulf %231, %232 : vector<2x8x16xf32>
    %c0_64 = arith.constant 0 : index
    %c0_65 = arith.constant 0 : index
    %c0_66 = arith.constant 0 : index
    %234 = vector.load %arg20[%c0_64, %c0_65, %c0_66] : memref<2x8x16xf32, #tpu.memory_space<vmem>>, vector<2x8x16xf32>
    tpu.vector_store %arg20[%c0_64, %c0_65, %c0_66], %233 {strides = array<i32>} : memref<2x8x16xf32, #tpu.memory_space<vmem>>, vector<2x8x16xf32>,
    %c0_67 = arith.constant 0 : index
    %c0_68 = arith.constant 0 : index
    %235 = vector.load %arg15[%c0_67, %c0_68] : memref<32x64xf32, #tpu.memory_space<vmem>>, vector<32x64xf32>
    %cst_69 = arith.constant dense<0.000000e+00> : vector<16x64xf32>
    %236 = tpu.matmul %224, %235, %cst_69 {dimension_numbers = #tpu.dot_dimension_numbers<[1], [0], [0], [1], [0, 0, 1, 1], [], []>} : vector<16x32xf32>, vector<32x64xf32>, vector<16x64xf32> -> vector<16x64xf32>
    %c0_70 = arith.constant 0 : index
    %c0_71 = arith.constant 0 : index
    %237 = vector.load %arg16[%c0_70, %c0_71] : memref<1x64xf32, #tpu.memory_space<vmem>>, vector<1x64xf32>
    %238 = vector.broadcast %237 : vector<1x64xf32> to vector<16x64xf32>
    %239 = arith.addf %236, %238 : vector<16x64xf32>
    %cst_72 = arith.constant 0.000000e+00 : f32
    %240 = vector.broadcast %cst_72 : f32 to vector<16x64xf32>
    %241 = arith.maximumf %239, %240 : vector<16x64xf32>
    %c0_73 = arith.constant 0 : index
    %c0_74 = arith.constant 0 : index
    %242 = vector.load %arg17[%c0_73, %c0_74] : memref<64x32xf32, #tpu.memory_space<vmem>>, vector<64x32xf32>
    %cst_75 = arith.constant dense<0.000000e+00> : vector<16x32xf32>
    %243 = tpu.matmul %241, %242, %cst_75 {dimension_numbers = #tpu.dot_dimension_numbers<[1], [0], [0], [1], [0, 0, 1, 1], [], []>} : vector<16x64xf32>, vector<64x32xf32>, vector<16x32xf32> -> vector<16x32xf32>
    %c0_76 = arith.constant 0 : index
    %c0_77 = arith.constant 0 : index
    %244 = vector.load %arg18[%c0_76, %c0_77] : memref<1x32xf32, #tpu.memory_space<vmem>>, vector<1x32xf32>
    %245 = vector.broadcast %244 : vector<1x32xf32> to vector<16x32xf32>
    %246 = arith.addf %243, %245 : vector<16x32xf32>
    %247 = arith.addf %224, %246 : vector<16x32xf32>
    %cst_78 = arith.constant dense<0.000000e+00> : vector<16xf32>
    %248 = vector.multi_reduction <add>, %247, %cst_78 [1] : vector<16x32xf32> to vector<16xf32>
    %249 = vector.shape_cast %248 : vector<16xf32> to vector<16x1xf32>
    %cst_79 = arith.constant 3.200000e+01 : f32
    %250 = vector.broadcast %cst_79 : f32 to vector<16x1xf32>
    %251 = arith.divf %249, %250 : vector<16x1xf32>
    %252 = vector.broadcast %251 : vector<16x1xf32> to vector<16x32xf32>
    %253 = arith.subf %247, %252 : vector<16x32xf32>
    %254 = arith.mulf %253, %253 : vector<16x32xf32>
    %cst_80 = arith.constant dense<0.000000e+00> : vector<16xf32>
    %255 = vector.multi_reduction <add>, %254, %cst_80 [1] : vector<16x32xf32> to vector<16xf32>
    %256 = vector.shape_cast %255 : vector<16xf32> to vector<16x1xf32>
    %cst_81 = arith.constant 3.200000e+01 : f32
    %257 = vector.broadcast %cst_81 : f32 to vector<16x1xf32>
    %258 = arith.divf %256, %257 : vector<16x1xf32>
    %cst_82 = arith.constant 9.99999974E-6 : f32
    %259 = vector.broadcast %cst_82 : f32 to vector<16x1xf32>
    %260 = arith.addf %258, %259 : vector<16x1xf32>
    %261 = math.rsqrt %260 : vector<16x1xf32>
    %262 = vector.broadcast %261 : vector<16x1xf32> to vector<16x32xf32>
    %263 = arith.mulf %253, %262 : vector<16x32xf32>
    %264 = vector.extract_strided_slice %0 {offsets = [4, 0], sizes = [1, 32], strides = [1, 1]} : vector<5x32xf32> to vector<1x32xf32>
    %265 = vector.broadcast %264 : vector<1x32xf32> to vector<16x32xf32>
    %266 = arith.mulf %263, %265 : vector<16x32xf32>
    %267 = vector.extract_strided_slice %1 {offsets = [4, 0], sizes = [1, 32], strides = [1, 1]} : vector<5x32xf32> to vector<1x32xf32>
    %268 = vector.broadcast %267 : vector<1x32xf32> to vector<16x32xf32>
    %269 = arith.addf %266, %268 : vector<16x32xf32>
    %270 = vector.shape_cast %269 : vector<16x32xf32> to vector<2x8x32xf32>
    %c0_83 = arith.constant 0 : index
    %c0_84 = arith.constant 0 : index
    %c0_85 = arith.constant 0 : index
    %271 = vector.load %arg19[%c0_83, %c0_84, %c0_85] : memref<2x8x32xf32, #tpu.memory_space<vmem>>, vector<2x8x32xf32>
    tpu.vector_store %arg19[%c0_83, %c0_84, %c0_85], %270 {strides = array<i32>} : memref<2x8x32xf32, #tpu.memory_space<vmem>>, vector<2x8x32xf32>,
    return
  }
  func.func @transform_0(%arg0: i32) -> (i32, i32, i32) {
    %c0_i32 = arith.constant 0 : i32
    %c0_i32_0 = arith.constant 0 : i32
    %c0_i32_1 = arith.constant 0 : i32
    return %arg0, %c0_i32, %c0_i32_0 : i32, i32, i32
  }
  func.func @transform_1(%arg0: i32) -> (i32, i32, i32) {
    %c0_i32 = arith.constant 0 : i32
    %c0_i32_0 = arith.constant 0 : i32
    %c0_i32_1 = arith.constant 0 : i32
    return %arg0, %c0_i32, %c0_i32_0 : i32, i32, i32
  }
  func.func @transform_2(%arg0: i32) -> (i32, i32) {
    %c0_i32 = arith.constant 0 : i32
    %c0_i32_0 = arith.constant 0 : i32
    %c0_i32_1 = arith.constant 0 : i32
    return %c0_i32, %c0_i32_0 : i32, i32
  }
  func.func @transform_3(%arg0: i32) -> (i32, i32) {
    %c0_i32 = arith.constant 0 : i32
    %c0_i32_0 = arith.constant 0 : i32
    %c0_i32_1 = arith.constant 0 : i32
    return %c0_i32, %c0_i32_0 : i32, i32
  }
  func.func @transform_4(%arg0: i32) -> (i32, i32) {
    %c0_i32 = arith.constant 0 : i32
    %c0_i32_0 = arith.constant 0 : i32
    %c0_i32_1 = arith.constant 0 : i32
    return %c0_i32, %c0_i32_0 : i32, i32
  }
  func.func @transform_5(%arg0: i32) -> (i32, i32) {
    %c0_i32 = arith.constant 0 : i32
    %c0_i32_0 = arith.constant 0 : i32
    %c0_i32_1 = arith.constant 0 : i32
    return %c0_i32, %c0_i32_0 : i32, i32
  }
  func.func @transform_6(%arg0: i32) -> (i32, i32) {
    %c0_i32 = arith.constant 0 : i32
    %c0_i32_0 = arith.constant 0 : i32
    %c0_i32_1 = arith.constant 0 : i32
    return %c0_i32, %c0_i32_0 : i32, i32
  }
  func.func @transform_7(%arg0: i32) -> (i32, i32) {
    %c0_i32 = arith.constant 0 : i32
    %c0_i32_0 = arith.constant 0 : i32
    %c0_i32_1 = arith.constant 0 : i32
    return %c0_i32, %c0_i32_0 : i32, i32
  }
  func.func @transform_8(%arg0: i32) -> (i32, i32) {
    %c0_i32 = arith.constant 0 : i32
    %c0_i32_0 = arith.constant 0 : i32
    %c0_i32_1 = arith.constant 0 : i32
    return %c0_i32, %c0_i32_0 : i32, i32
  }
  func.func @transform_9(%arg0: i32) -> (i32, i32) {
    %c0_i32 = arith.constant 0 : i32
    %c0_i32_0 = arith.constant 0 : i32
    %c0_i32_1 = arith.constant 0 : i32
    return %c0_i32, %c0_i32_0 : i32, i32
  }
  func.func @transform_10(%arg0: i32) -> (i32, i32) {
    %c0_i32 = arith.constant 0 : i32
    %c0_i32_0 = arith.constant 0 : i32
    %c0_i32_1 = arith.constant 0 : i32
    return %c0_i32, %c0_i32_0 : i32, i32
  }
  func.func @transform_11(%arg0: i32) -> (i32, i32) {
    %c0_i32 = arith.constant 0 : i32
    %c0_i32_0 = arith.constant 0 : i32
    %c0_i32_1 = arith.constant 0 : i32
    return %c0_i32, %c0_i32_0 : i32, i32
  }
  func.func @transform_12(%arg0: i32) -> (i32, i32) {
    %c0_i32 = arith.constant 0 : i32
    %c0_i32_0 = arith.constant 0 : i32
    %c0_i32_1 = arith.constant 0 : i32
    return %c0_i32, %c0_i32_0 : i32, i32
  }
  func.func @transform_13(%arg0: i32) -> (i32, i32) {
    %c0_i32 = arith.constant 0 : i32
    %c0_i32_0 = arith.constant 0 : i32
    %c0_i32_1 = arith.constant 0 : i32
    return %c0_i32, %c0_i32_0 : i32, i32
  }
  func.func @transform_14(%arg0: i32) -> (i32, i32) {
    %c0_i32 = arith.constant 0 : i32
    %c0_i32_0 = arith.constant 0 : i32
    %c0_i32_1 = arith.constant 0 : i32
    return %c0_i32, %c0_i32_0 : i32, i32
  }
  func.func @transform_15(%arg0: i32) -> (i32, i32) {
    %c0_i32 = arith.constant 0 : i32
    %c0_i32_0 = arith.constant 0 : i32
    %c0_i32_1 = arith.constant 0 : i32
    return %c0_i32, %c0_i32_0 : i32, i32
  }
  func.func @transform_16(%arg0: i32) -> (i32, i32) {
    %c0_i32 = arith.constant 0 : i32
    %c0_i32_0 = arith.constant 0 : i32
    %c0_i32_1 = arith.constant 0 : i32
    return %c0_i32, %c0_i32_0 : i32, i32
  }
  func.func @transform_17(%arg0: i32) -> (i32, i32) {
    %c0_i32 = arith.constant 0 : i32
    %c0_i32_0 = arith.constant 0 : i32
    %c0_i32_1 = arith.constant 0 : i32
    return %c0_i32, %c0_i32_0 : i32, i32
  }
  func.func @transform_18(%arg0: i32) -> (i32, i32, i32) {
    %c0_i32 = arith.constant 0 : i32
    %c0_i32_0 = arith.constant 0 : i32
    %c0_i32_1 = arith.constant 0 : i32
    return %arg0, %c0_i32, %c0_i32_0 : i32, i32, i32
  }
  func.func @transform_19(%arg0: i32) -> (i32, i32, i32) {
    %c0_i32 = arith.constant 0 : i32
    %c0_i32_0 = arith.constant 0 : i32
    %c0_i32_1 = arith.constant 0 : i32
    return %arg0, %c0_i32, %c0_i32_0 : i32, i32, i32
  }
}

</mosaic_0001>

<llo_original>
// kernel: tpu_custom_call.1
$region0: #{tpu_custom_call.1}
  #allocation0 [shape = 'u32[]', space=smem, size = 0x4, offset = 0x4, fixed_abs, tag = 'smem constant byte address 0x4 - core index']
  #allocation1 [shape = 'u32[144,128]{1,0:T(1,128)}', space=vmem, size = 0x12000, scoped, tag = 'internal scratch']
  %s0 = inlined_call_operand.vmem [shape: f32[4,8,32], index: 0, kind: input, shape index: {}]
  %s1 = inlined_call_operand.vmem [shape: f32[4,16,32], index: 1, kind: input, shape index: {}]
  %s2 = inlined_call_operand.hbm [shape: f32[5,32], index: 2, kind: input, shape index: {}]
  %s3 = inlined_call_operand.vmem [shape: f32[5,32], index: 3, kind: input, shape index: {}]
  %s4 = inlined_call_operand.hbm [shape: f32[32,96], index: 4, kind: input, shape index: {}]
  %s5 = inlined_call_operand.vmem [shape: f32[1,96], index: 5, kind: input, shape index: {}]
  %s6 = inlined_call_operand.hbm [shape: f32[32,32], index: 6, kind: input, shape index: {}]
  %s7 = inlined_call_operand.vmem [shape: f32[1,32], index: 7, kind: input, shape index: {}]
  %s8 = inlined_call_operand.hbm [shape: f32[32,32], index: 8, kind: input, shape index: {}]
  %s9 = inlined_call_operand.vmem [shape: f32[1,32], index: 9, kind: input, shape index: {}]
  %s10 = inlined_call_operand.hbm [shape: f32[32,64], index: 10, kind: input, shape index: {}]
  %s11 = inlined_call_operand.vmem [shape: f32[1,64], index: 11, kind: input, shape index: {}]
  %s12 = inlined_call_operand.hbm [shape: f32[32,32], index: 12, kind: input, shape index: {}]
  %s13 = inlined_call_operand.vmem [shape: f32[1,32], index: 13, kind: input, shape index: {}]
  %s14 = inlined_call_operand.hbm [shape: f32[32,64], index: 14, kind: input, shape index: {}]
  %s15 = inlined_call_operand.vmem [shape: f32[1,64], index: 15, kind: input, shape index: {}]
  %s16 = inlined_call_operand.vmem [shape: f32[64,32], index: 16, kind: input, shape index: {}]
  %s17 = inlined_call_operand.vmem [shape: f32[1,32], index: 17, kind: input, shape index: {}]
  %s18 = inlined_call_operand.hbm [shape: f32[4,8,32], index: 18, kind: output, shape index: {0}]
  %s19 = inlined_call_operand.hbm [shape: f32[4,8,16], index: 19, kind: output, shape index: {1}]
  %20 = xla_tuple %s18, %s19
  %s21 = sld [smem:[#allocation0]]
  $region141: #{tpu_custom_call.1} parent=0
    _
  %s23 = ssub.s32 1, %s21
  %s24 = scalar_select 0, %s23, %s21
  $region1: #{tpu_custom_call.1} parent=0
    #allocation2 [shape = 'u8[4096]{0}', space=vmem, size = 0x1000, scoped, tag = 'input window, operand 2, single buffered']
    #allocation3 [shape = 's32[2]{0}', space=sflag, size = 0x8, scoped, tag = 'scoped memory for tpu_custom_call.1']
    #allocation4 [shape = 's32[2]{0}', space=sflag, size = 0x8, scoped, tag = 'scoped memory for tpu_custom_call.1']
    #allocation5 [shape = 'u8[16384]{0}', space=vmem, size = 0x4000, scoped, tag = 'input window, operand 4, single buffered']
    #allocation6 [shape = 's32[1]{0}', space=sflag, size = 0x4, scoped, tag = 'scoped memory for tpu_custom_call.1']
    #allocation7 [shape = 'u8[16384]{0}', space=vmem, size = 0x4000, scoped, tag = 'input window, operand 6, single buffered']
    #allocation8 [shape = 'u8[16384]{0}', space=vmem, size = 0x4000, scoped, tag = 'input window, operand 8, single buffered']
    #allocation9 [shape = 's32[1]{0}', space=sflag, size = 0x4, scoped, tag = 'scoped memory for tpu_custom_call.1']
    #allocation10 [shape = 'u8[16384]{0}', space=vmem, size = 0x4000, scoped, tag = 'input window, operand 10, single buffered']
    #allocation11 [shape = 'u8[16384]{0}', space=vmem, size = 0x4000, scoped, tag = 'input window, operand 12, single buffered']
    #allocation12 [shape = 's32[1]{0}', space=sflag, size = 0x4, scoped, tag = 'scoped memory for tpu_custom_call.1']
    #allocation13 [shape = 'u8[16384]{0}', space=vmem, size = 0x4000, scoped, tag = 'input window, operand 14, single buffered']
    #allocation14 [shape = 'u8[16384]{0}', space=vmem, size = 0x4000, scoped, tag = 'output window, operand 0']
    #allocation15 [shape = 'u8[16384]{0}', space=vmem, size = 0x4000, scoped, tag = 'output window, operand 1']
    #allocation16 [shape = 's32[2]{0}', space=sflag, size = 0x8, scoped, tag = 'scoped memory for tpu_custom_call.1']
    %25 = vsyncpa [#allocation3], 0
    %26 = vsyncpa [#allocation6], 0
    %27 = vsyncpa [#allocation9], 0
    %28 = vsyncpa [#allocation12], 0
    %29 = vsyncpa [#allocation4], 0
    %s30 = scalar_lea.sflag [#allocation4], 1
    %31 = vsyncpa %s30, 0
    %32 = vsyncpa [#allocation16], 0
    %s33 = scalar_lea.sflag [#allocation16], 1
    %34 = vsyncpa %s33, 0
    loop: start=0, step=1, limit=4
    $region2: #{tpu_custom_call.1} parent=1 // loop_pre_header
      _
    $region3: #{tpu_custom_call.1} parent=1 // loop_header
      %s36 = sphi 0, %s40
      %p37 = scmp.ge.s32.totalorder %s36, 4
      %s46 = sphi 0, %s48
      %s49 = sphi 0, %s46
      %s50 = sphi 0, %s49
      %s66 = sphi 0, %s50
      %s72 = sphi 0, %s74
      %s75 = sphi 0, %s72
      %s76 = sphi 0, %s75
      %s92 = sphi 0, %s76
      %s96 = sphi 0, %s96
      %s98 = sphi 0, %s96
      %s99 = sphi 0, %s98
      %s113 = sphi 0, %s99
      %s117 = sphi 0, %s117
      %s119 = sphi 0, %s117
      %s120 = sphi 0, %s119
      %s134 = sphi 0, %s120
      %s138 = sphi 0, %s138
      %s140 = sphi 0, %s138
      %s141 = sphi 0, %s140
      %s155 = sphi 0, %s141
      %s159 = sphi 0, %s159
      %s161 = sphi 0, %s159
      %s162 = sphi 0, %s161
      %s176 = sphi 0, %s162
      %s180 = sphi 0, %s180
      %s182 = sphi 0, %s180
      %s183 = sphi 0, %s182
      %s197 = sphi 0, %s183
      %s201 = sphi 0, %s201
      %s203 = sphi 0, %s201
      %s204 = sphi 0, %s203
      %s218 = sphi 0, %s204
      %s222 = sphi 0, %s222
      %s224 = sphi 0, %s222
      %s225 = sphi 0, %s224
      %s239 = sphi 0, %s225
      %s243 = sphi 0, %s243
      %s245 = sphi 0, %s243
      %s246 = sphi 0, %s245
      %s260 = sphi 0, %s246
      %s264 = sphi 0, %s264
      %s266 = sphi 0, %s264
      %s267 = sphi 0, %s266
      %s281 = sphi 0, %s267
      %s285 = sphi 0, %s285
      %s287 = sphi 0, %s285
      %s288 = sphi 0, %s287
      %s302 = sphi 0, %s288
      %s306 = sphi 0, %s306
      %s308 = sphi 0, %s306
      %s309 = sphi 0, %s308
      %s323 = sphi 0, %s309
      %s327 = sphi 0, %s327
      %s329 = sphi 0, %s327
      %s330 = sphi 0, %s329
      %s344 = sphi 0, %s330
      %s348 = sphi 0, %s348
      %s350 = sphi 0, %s348
      %s351 = sphi 0, %s350
      %s365 = sphi 0, %s351
      %s369 = sphi 0, %s369
      %s371 = sphi 0, %s369
      %s372 = sphi 0, %s371
      %s386 = sphi 0, %s372
      %s390 = sphi 0, %s390
      %s392 = sphi 0, %s390
      %s393 = sphi 0, %s392
      %s407 = sphi 0, %s393
      %s411 = sphi 0, %s411
      %s413 = sphi 0, %s411
      %s414 = sphi 0, %s413
      %s428 = sphi 0, %s414
      %s434 = sphi 0, %s436
      %s437 = sphi 0, %s434
      %s438 = sphi 0, %s437
      %s454 = sphi 0, %s438
      %s460 = sphi 0, %s462
      %s463 = sphi 0, %s460
      %s464 = sphi 0, %s463
      %s480 = sphi 0, %s464
    $region4: #{tpu_custom_call.1} parent=1 // loop_header_branch
      %39 = sbr.rel (%p37) target = $region8
    $region5: #{tpu_custom_call.1} parent=1 // loop_body
      %s41 = ssub.s32 %s36, 1
      %s42 = ssub.s32 %s36, 2
      %s43 = sadd.s32 %s36, 1
      %s44 = ssub.s32 %s36, %s43
      %p45 = scmp.eq.s32.totalorder %s44, 0
      %s47 = sadd.s32 %s46, 1
      %s48 = scalar_select %p45, %s46, %s47
      %p51 = pneg %p45
      %p52 = scmp.eq.s32.totalorder %s36, 1
      %p53 = por %p51, %p52
      %p54 = scmp.ne.s32.totalorder %s46, %s49
      %p55 = scmp.eq.s32.totalorder %s36, 0
      %p56 = por %p54, %p55
      %p57 = scmp.ne.s32.totalorder %s46, %s49
      %p58 = scmp.eq.s32.totalorder %s41, 1
      %p59 = por %p57, %p58
      %p60 = scmp.ne.s32.totalorder %s49, %s50
      %p61 = scmp.eq.s32.totalorder %s41, 0
      %p62 = por %p60, %p61
      %p63 = scmp.ne.s32.totalorder %s49, %s50
      %p64 = scmp.eq.s32.totalorder %s42, 1
      %p65 = por %p63, %p64
      %p67 = scmp.ne.s32.totalorder %s50, %s66
      %p68 = scmp.eq.s32.totalorder %s42, 0
      %p69 = por %p67, %p68
      %s70 = ssub.s32 %s36, %s43
      %p71 = scmp.eq.s32.totalorder %s70, 0
      %s73 = sadd.s32 %s72, 1
      %s74 = scalar_select %p71, %s72, %s73
      %p77 = pneg %p71
      %p78 = scmp.eq.s32.totalorder %s36, 1
      %p79 = por %p77, %p78
      %p80 = scmp.ne.s32.totalorder %s72, %s75
      %p81 = scmp.eq.s32.totalorder %s36, 0
      %p82 = por %p80, %p81
      %p83 = scmp.ne.s32.totalorder %s72, %s75
      %p84 = scmp.eq.s32.totalorder %s41, 1
      %p85 = por %p83, %p84
      %p86 = scmp.ne.s32.totalorder %s75, %s76
      %p87 = scmp.eq.s32.totalorder %s41, 0
      %p88 = por %p86, %p87
      %p89 = scmp.ne.s32.totalorder %s75, %s76
      %p90 = scmp.eq.s32.totalorder %s42, 1
      %p91 = por %p89, %p90
      %p93 = scmp.ne.s32.totalorder %s76, %s92
      %p94 = scmp.eq.s32.totalorder %s42, 0
      %p95 = por %p93, %p94
      %s97 = sadd.s32 %s96, 1
      %p100 = scmp.eq.s32.totalorder %s36, 1
      %p101 = scmp.ne.s32.totalorder %s96, %s98
      %p102 = scmp.eq.s32.totalorder %s36, 0
      %p103 = por %p101, %p102
      %p104 = scmp.ne.s32.totalorder %s96, %s98
      %p105 = scmp.eq.s32.totalorder %s41, 1
      %p106 = por %p104, %p105
      %p107 = scmp.ne.s32.totalorder %s98, %s99
      %p108 = scmp.eq.s32.totalorder %s41, 0
      %p109 = por %p107, %p108
      %p110 = scmp.ne.s32.totalorder %s98, %s99
      %p111 = scmp.eq.s32.totalorder %s42, 1
      %p112 = por %p110, %p111
      %p114 = scmp.ne.s32.totalorder %s99, %s113
      %p115 = scmp.eq.s32.totalorder %s42, 0
      %p116 = por %p114, %p115
      %s118 = sadd.s32 %s117, 1
      %p121 = scmp.eq.s32.totalorder %s36, 1
      %p122 = scmp.ne.s32.totalorder %s117, %s119
      %p123 = scmp.eq.s32.totalorder %s36, 0
      %p124 = por %p122, %p123
      %p125 = scmp.ne.s32.totalorder %s117, %s119
      %p126 = scmp.eq.s32.totalorder %s41, 1
      %p127 = por %p125, %p126
      %p128 = scmp.ne.s32.totalorder %s119, %s120
      %p129 = scmp.eq.s32.totalorder %s41, 0
      %p130 = por %p128, %p129
      %p131 = scmp.ne.s32.totalorder %s119, %s120
      %p132 = scmp.eq.s32.totalorder %s42, 1
      %p133 = por %p131, %p132
      %p135 = scmp.ne.s32.totalorder %s120, %s134
      %p136 = scmp.eq.s32.totalorder %s42, 0
      %p137 = por %p135, %p136
      %s139 = sadd.s32 %s138, 1
      %p142 = scmp.eq.s32.totalorder %s36, 1
      %p143 = scmp.ne.s32.totalorder %s138, %s140
      %p144 = scmp.eq.s32.totalorder %s36, 0
      %p145 = por %p143, %p144
      %p146 = scmp.ne.s32.totalorder %s138, %s140
      %p147 = scmp.eq.s32.totalorder %s41, 1
      %p148 = por %p146, %p147
      %p149 = scmp.ne.s32.totalorder %s140, %s141
      %p150 = scmp.eq.s32.totalorder %s41, 0
      %p151 = por %p149, %p150
      %p152 = scmp.ne.s32.totalorder %s140, %s141
      %p153 = scmp.eq.s32.totalorder %s42, 1
      %p154 = por %p152, %p153
      %p156 = scmp.ne.s32.totalorder %s141, %s155
      %p157 = scmp.eq.s32.totalorder %s42, 0
      %p158 = por %p156, %p157
      %s160 = sadd.s32 %s159, 1
      %p163 = scmp.eq.s32.totalorder %s36, 1
      %p164 = scmp.ne.s32.totalorder %s159, %s161
      %p165 = scmp.eq.s32.totalorder %s36, 0
      %p166 = por %p164, %p165
      %p167 = scmp.ne.s32.totalorder %s159, %s161
      %p168 = scmp.eq.s32.totalorder %s41, 1
      %p169 = por %p167, %p168
      %p170 = scmp.ne.s32.totalorder %s161, %s162
      %p171 = scmp.eq.s32.totalorder %s41, 0
      %p172 = por %p170, %p171
      %p173 = scmp.ne.s32.totalorder %s161, %s162
      %p174 = scmp.eq.s32.totalorder %s42, 1
      %p175 = por %p173, %p174
      %p177 = scmp.ne.s32.totalorder %s162, %s176
      %p178 = scmp.eq.s32.totalorder %s42, 0
      %p179 = por %p177, %p178
      %s181 = sadd.s32 %s180, 1
      %p184 = scmp.eq.s32.totalorder %s36, 1
      %p185 = scmp.ne.s32.totalorder %s180, %s182
      %p186 = scmp.eq.s32.totalorder %s36, 0
      %p187 = por %p185, %p186
      %p188 = scmp.ne.s32.totalorder %s180, %s182
      %p189 = scmp.eq.s32.totalorder %s41, 1
      %p190 = por %p188, %p189
      %p191 = scmp.ne.s32.totalorder %s182, %s183
      %p192 = scmp.eq.s32.totalorder %s41, 0
      %p193 = por %p191, %p192
      %p194 = scmp.ne.s32.totalorder %s182, %s183
      %p195 = scmp.eq.s32.totalorder %s42, 1
      %p196 = por %p194, %p195
      %p198 = scmp.ne.s32.totalorder %s183, %s197
      %p199 = scmp.eq.s32.totalorder %s42, 0
      %p200 = por %p198, %p199
      %s202 = sadd.s32 %s201, 1
      %p205 = scmp.eq.s32.totalorder %s36, 1
      %p206 = scmp.ne.s32.totalorder %s201, %s203
      %p207 = scmp.eq.s32.totalorder %s36, 0
      %p208 = por %p206, %p207
      %p209 = scmp.ne.s32.totalorder %s201, %s203
      %p210 = scmp.eq.s32.totalorder %s41, 1
      %p211 = por %p209, %p210
      %p212 = scmp.ne.s32.totalorder %s203, %s204
      %p213 = scmp.eq.s32.totalorder %s41, 0
      %p214 = por %p212, %p213
      %p215 = scmp.ne.s32.totalorder %s203, %s204
      %p216 = scmp.eq.s32.totalorder %s42, 1
      %p217 = por %p215, %p216
      %p219 = scmp.ne.s32.totalorder %s204, %s218
      %p220 = scmp.eq.s32.totalorder %s42, 0
      %p221 = por %p219, %p220
      %s223 = sadd.s32 %s222, 1
      %p226 = scmp.eq.s32.totalorder %s36, 1
      %p227 = scmp.ne.s32.totalorder %s222, %s224
      %p228 = scmp.eq.s32.totalorder %s36, 0
      %p229 = por %p227, %p228
      %p230 = scmp.ne.s32.totalorder %s222, %s224
      %p231 = scmp.eq.s32.totalorder %s41, 1
      %p232 = por %p230, %p231
      %p233 = scmp.ne.s32.totalorder %s224, %s225
      %p234 = scmp.eq.s32.totalorder %s41, 0
      %p235 = por %p233, %p234
      %p236 = scmp.ne.s32.totalorder %s224, %s225
      %p237 = scmp.eq.s32.totalorder %s42, 1
      %p238 = por %p236, %p237
      %p240 = scmp.ne.s32.totalorder %s225, %s239
      %p241 = scmp.eq.s32.totalorder %s42, 0
      %p242 = por %p240, %p241
      %s244 = sadd.s32 %s243, 1
      %p247 = scmp.eq.s32.totalorder %s36, 1
      %p248 = scmp.ne.s32.totalorder %s243, %s245
      %p249 = scmp.eq.s32.totalorder %s36, 0
      %p250 = por %p248, %p249
      %p251 = scmp.ne.s32.totalorder %s243, %s245
      %p252 = scmp.eq.s32.totalorder %s41, 1
      %p253 = por %p251, %p252
      %p254 = scmp.ne.s32.totalorder %s245, %s246
      %p255 = scmp.eq.s32.totalorder %s41, 0
      %p256 = por %p254, %p255
      %p257 = scmp.ne.s32.totalorder %s245, %s246
      %p258 = scmp.eq.s32.totalorder %s42, 1
      %p259 = por %p257, %p258
      %p261 = scmp.ne.s32.totalorder %s246, %s260
      %p262 = scmp.eq.s32.totalorder %s42, 0
      %p263 = por %p261, %p262
      %s265 = sadd.s32 %s264, 1
      %p268 = scmp.eq.s32.totalorder %s36, 1
      %p269 = scmp.ne.s32.totalorder %s264, %s266
      %p270 = scmp.eq.s32.totalorder %s36, 0
      %p271 = por %p269, %p270
      %p272 = scmp.ne.s32.totalorder %s264, %s266
      %p273 = scmp.eq.s32.totalorder %s41, 1
      %p274 = por %p272, %p273
      %p275 = scmp.ne.s32.totalorder %s266, %s267
      %p276 = scmp.eq.s32.totalorder %s41, 0
      %p277 = por %p275, %p276
      %p278 = scmp.ne.s32.totalorder %s266, %s267
      %p279 = scmp.eq.s32.totalorder %s42, 1
      %p280 = por %p278, %p279
      %p282 = scmp.ne.s32.totalorder %s267, %s281
      %p283 = scmp.eq.s32.totalorder %s42, 0
      %p284 = por %p282, %p283
      %s286 = sadd.s32 %s285, 1
      %p289 = scmp.eq.s32.totalorder %s36, 1
      %p290 = scmp.ne.s32.totalorder %s285, %s287
      %p291 = scmp.eq.s32.totalorder %s36, 0
      %p292 = por %p290, %p291
      %p293 = scmp.ne.s32.totalorder %s285, %s287
      %p294 = scmp.eq.s32.totalorder %s41, 1
      %p295 = por %p293, %p294
      %p296 = scmp.ne.s32.totalorder %s287, %s288
      %p297 = scmp.eq.s32.totalorder %s41, 0
      %p298 = por %p296, %p297
      %p299 = scmp.ne.s32.totalorder %s287, %s288
      %p300 = scmp.eq.s32.totalorder %s42, 1
      %p301 = por %p299, %p300
      %p303 = scmp.ne.s32.totalorder %s288, %s302
      %p304 = scmp.eq.s32.totalorder %s42, 0
      %p305 = por %p303, %p304
      %s307 = sadd.s32 %s306, 1
      %p310 = scmp.eq.s32.totalorder %s36, 1
      %p311 = scmp.ne.s32.totalorder %s306, %s308
      %p312 = scmp.eq.s32.totalorder %s36, 0
      %p313 = por %p311, %p312
      %p314 = scmp.ne.s32.totalorder %s306, %s308
      %p315 = scmp.eq.s32.totalorder %s41, 1
      %p316 = por %p314, %p315
      %p317 = scmp.ne.s32.totalorder %s308, %s309
      %p318 = scmp.eq.s32.totalorder %s41, 0
      %p319 = por %p317, %p318
      %p320 = scmp.ne.s32.totalorder %s308, %s309
      %p321 = scmp.eq.s32.totalorder %s42, 1
      %p322 = por %p320, %p321
      %p324 = scmp.ne.s32.totalorder %s309, %s323
      %p325 = scmp.eq.s32.totalorder %s42, 0
      %p326 = por %p324, %p325
      %s328 = sadd.s32 %s327, 1
      %p331 = scmp.eq.s32.totalorder %s36, 1
      %p332 = scmp.ne.s32.totalorder %s327, %s329
      %p333 = scmp.eq.s32.totalorder %s36, 0
      %p334 = por %p332, %p333
      %p335 = scmp.ne.s32.totalorder %s327, %s329
      %p336 = scmp.eq.s32.totalorder %s41, 1
      %p337 = por %p335, %p336
      %p338 = scmp.ne.s32.totalorder %s329, %s330
      %p339 = scmp.eq.s32.totalorder %s41, 0
      %p340 = por %p338, %p339
      %p341 = scmp.ne.s32.totalorder %s329, %s330
      %p342 = scmp.eq.s32.totalorder %s42, 1
      %p343 = por %p341, %p342
      %p345 = scmp.ne.s32.totalorder %s330, %s344
      %p346 = scmp.eq.s32.totalorder %s42, 0
      %p347 = por %p345, %p346
      %s349 = sadd.s32 %s348, 1
      %p352 = scmp.eq.s32.totalorder %s36, 1
      %p353 = scmp.ne.s32.totalorder %s348, %s350
      %p354 = scmp.eq.s32.totalorder %s36, 0
      %p355 = por %p353, %p354
      %p356 = scmp.ne.s32.totalorder %s348, %s350
      %p357 = scmp.eq.s32.totalorder %s41, 1
      %p358 = por %p356, %p357
      %p359 = scmp.ne.s32.totalorder %s350, %s351
      %p360 = scmp.eq.s32.totalorder %s41, 0
      %p361 = por %p359, %p360
      %p362 = scmp.ne.s32.totalorder %s350, %s351
      %p363 = scmp.eq.s32.totalorder %s42, 1
      %p364 = por %p362, %p363
      %p366 = scmp.ne.s32.totalorder %s351, %s365
      %p367 = scmp.eq.s32.totalorder %s42, 0
      %p368 = por %p366, %p367
      %s370 = sadd.s32 %s369, 1
      %p373 = scmp.eq.s32.totalorder %s36, 1
      %p374 = scmp.ne.s32.totalorder %s369, %s371
      %p375 = scmp.eq.s32.totalorder %s36, 0
      %p376 = por %p374, %p375
      %p377 = scmp.ne.s32.totalorder %s369, %s371
      %p378 = scmp.eq.s32.totalorder %s41, 1
      %p379 = por %p377, %p378
      %p380 = scmp.ne.s32.totalorder %s371, %s372
      %p381 = scmp.eq.s32.totalorder %s41, 0
      %p382 = por %p380, %p381
      %p383 = scmp.ne.s32.totalorder %s371, %s372
      %p384 = scmp.eq.s32.totalorder %s42, 1
      %p385 = por %p383, %p384
      %p387 = scmp.ne.s32.totalorder %s372, %s386
      %p388 = scmp.eq.s32.totalorder %s42, 0
      %p389 = por %p387, %p388
      %s391 = sadd.s32 %s390, 1
      %p394 = scmp.eq.s32.totalorder %s36, 1
      %p395 = scmp.ne.s32.totalorder %s390, %s392
      %p396 = scmp.eq.s32.totalorder %s36, 0
      %p397 = por %p395, %p396
      %p398 = scmp.ne.s32.totalorder %s390, %s392
      %p399 = scmp.eq.s32.totalorder %s41, 1
      %p400 = por %p398, %p399
      %p401 = scmp.ne.s32.totalorder %s392, %s393
      %p402 = scmp.eq.s32.totalorder %s41, 0
      %p403 = por %p401, %p402
      %p404 = scmp.ne.s32.totalorder %s392, %s393
      %p405 = scmp.eq.s32.totalorder %s42, 1
      %p406 = por %p404, %p405
      %p408 = scmp.ne.s32.totalorder %s393, %s407
      %p409 = scmp.eq.s32.totalorder %s42, 0
      %p410 = por %p408, %p409
      %s412 = sadd.s32 %s411, 1
      %p415 = scmp.eq.s32.totalorder %s36, 1
      %p416 = scmp.ne.s32.totalorder %s411, %s413
      %p417 = scmp.eq.s32.totalorder %s36, 0
      %p418 = por %p416, %p417
      %p419 = scmp.ne.s32.totalorder %s411, %s413
      %p420 = scmp.eq.s32.totalorder %s41, 1
      %p421 = por %p419, %p420
      %p422 = scmp.ne.s32.totalorder %s413, %s414
      %p423 = scmp.eq.s32.totalorder %s41, 0
      %p424 = por %p422, %p423
      %p425 = scmp.ne.s32.totalorder %s413, %s414
      %p426 = scmp.eq.s32.totalorder %s42, 1
      %p427 = por %p425, %p426
      %p429 = scmp.ne.s32.totalorder %s414, %s428
      %p430 = scmp.eq.s32.totalorder %s42, 0
      %p431 = por %p429, %p430
      %s432 = ssub.s32 %s36, %s43
      %p433 = scmp.eq.s32.totalorder %s432, 0
      %s435 = sadd.s32 %s434, 1
      %s436 = scalar_select %p433, %s434, %s435
      %p439 = pneg %p433
      %p440 = scmp.eq.s32.totalorder %s36, 1
      %p441 = por %p439, %p440
      %p442 = scmp.ne.s32.totalorder %s434, %s437
      %p443 = scmp.eq.s32.totalorder %s36, 0
      %p444 = por %p442, %p443
      %p445 = scmp.ne.s32.totalorder %s434, %s437
      %p446 = scmp.eq.s32.totalorder %s41, 1
      %p447 = por %p445, %p446
      %p448 = scmp.ne.s32.totalorder %s437, %s438
      %p449 = scmp.eq.s32.totalorder %s41, 0
      %p450 = por %p448, %p449
      %p451 = scmp.ne.s32.totalorder %s437, %s438
      %p452 = scmp.eq.s32.totalorder %s42, 1
      %p453 = por %p451, %p452
      %p455 = scmp.ne.s32.totalorder %s438, %s454
      %p456 = scmp.eq.s32.totalorder %s42, 0
      %p457 = por %p455, %p456
      %s458 = ssub.s32 %s36, %s43
      %p459 = scmp.eq.s32.totalorder %s458, 0
      %s461 = sadd.s32 %s460, 1
      %s462 = scalar_select %p459, %s460, %s461
      %p465 = pneg %p459
      %p466 = scmp.eq.s32.totalorder %s36, 1
      %p467 = por %p465, %p466
      %p468 = scmp.ne.s32.totalorder %s460, %s463
      %p469 = scmp.eq.s32.totalorder %s36, 0
      %p470 = por %p468, %p469
      %p471 = scmp.ne.s32.totalorder %s460, %s463
      %p472 = scmp.eq.s32.totalorder %s41, 1
      %p473 = por %p471, %p472
      %p474 = scmp.ne.s32.totalorder %s463, %s464
      %p475 = scmp.eq.s32.totalorder %s41, 0
      %p476 = por %p474, %p475
      %p477 = scmp.ne.s32.totalorder %s463, %s464
      %p478 = scmp.eq.s32.totalorder %s42, 1
      %p479 = por %p477, %p478
      %p481 = scmp.ne.s32.totalorder %s464, %s480
      %p482 = scmp.eq.s32.totalorder %s42, 0
      %p483 = por %p481, %p482
      %p484 = scmp.le.s32.totalorder 1, %s36
      %p485 = scmp.lt.s32.totalorder %s36, 3
      %p486 = pnand %p484, %p485
      %p487 = pneg %p486
      // Predicated region
      $region9: #{tpu_custom_call.1} parent=5 // pred_check
        _
      $region10: #{tpu_custom_call.1} parent=5 // pred_check_branch
        %489 = sbr.rel (%p486) target = $region12
      $region11: #{tpu_custom_call.1} parent=5 // pred_region
        %s490 = ssub.s32 %s36, 1
        // Predicated region
        $region13: #{tpu_custom_call.1} parent=11 // pred_check
          %p491 = pneg %p109
        $region14: #{tpu_custom_call.1} parent=11 // pred_check_branch
          %493 = sbr.rel (%p491) target = $region16
        $region15: #{tpu_custom_call.1} parent=11 // pred_region
          %s495 = ssub.s32 128, 128
          %496 = vsyncadd [#allocation3], %s495
          %s498 = sshll.u32 [#allocation2], 4
          %s499 = int_to_ptr.vmem [resolvable:$true] %s498
          %501 = dma.hbm_to_vmem [thread:$0]  %s2, 128, %s499, [#allocation3]
        $region16: #{tpu_custom_call.1} parent=11 // pred_fallthru
          _
        // Predicated region
        $region17: #{tpu_custom_call.1} parent=11 // pred_check
          %p502 = pneg %p130
        $region18: #{tpu_custom_call.1} parent=11 // pred_check_branch
          %504 = sbr.rel (%p502) target = $region20
        $region19: #{tpu_custom_call.1} parent=11 // pred_region
          _
        $region20: #{tpu_custom_call.1} parent=11 // pred_fallthru
          _
        // Predicated region
        $region21: #{tpu_custom_call.1} parent=11 // pred_check
          %p505 = pneg %p151
        $region22: #{tpu_custom_call.1} parent=11 // pred_check_branch
          %507 = sbr.rel (%p505) target = $region24
        $region23: #{tpu_custom_call.1} parent=11 // pred_region
          %s509 = ssub.s32 512, 512
          %510 = vsyncadd [#allocation6], %s509
          %s511 = sshll.u32 [#allocation5], 4
          %s512 = int_to_ptr.vmem [resolvable:$true] %s511
          %517 = dma.hbm_to_vmem [thread:$0]  %s4, 512, %s512, [#allocation6], 128, 128, 8
        $region24: #{tpu_custom_call.1} parent=11 // pred_fallthru
          _
        // Predicated region
        $region25: #{tpu_custom_call.1} parent=11 // pred_check
          %p518 = pneg %p172
        $region26: #{tpu_custom_call.1} parent=11 // pred_check_branch
          %520 = sbr.rel (%p518) target = $region28
        $region27: #{tpu_custom_call.1} parent=11 // pred_region
          _
        $region28: #{tpu_custom_call.1} parent=11 // pred_fallthru
          _
        // Predicated region
        $region29: #{tpu_custom_call.1} parent=11 // pred_check
          %p521 = pneg %p193
        $region30: #{tpu_custom_call.1} parent=11 // pred_check_branch
          %523 = sbr.rel (%p521) target = $region32
        $region31: #{tpu_custom_call.1} parent=11 // pred_region
          %s525 = ssub.s32 512, 512
          %526 = vsyncadd [#allocation6], %s525
          %s527 = sshll.u32 [#allocation7], 4
          %s528 = int_to_ptr.vmem [resolvable:$true] %s527
          %533 = dma.hbm_to_vmem [thread:$0]  %s6, 512, %s528, [#allocation6], 128, 128, 8
        $region32: #{tpu_custom_call.1} parent=11 // pred_fallthru
          _
        // Predicated region
        $region33: #{tpu_custom_call.1} parent=11 // pred_check
          %p534 = pneg %p214
        $region34: #{tpu_custom_call.1} parent=11 // pred_check_branch
          %536 = sbr.rel (%p534) target = $region36
        $region35: #{tpu_custom_call.1} parent=11 // pred_region
          _
        $region36: #{tpu_custom_call.1} parent=11 // pred_fallthru
          _
        // Predicated region
        $region37: #{tpu_custom_call.1} parent=11 // pred_check
          %p537 = pneg %p235
        $region38: #{tpu_custom_call.1} parent=11 // pred_check_branch
          %539 = sbr.rel (%p537) target = $region40
        $region39: #{tpu_custom_call.1} parent=11 // pred_region
          %s541 = ssub.s32 512, 512
          %542 = vsyncadd [#allocation9], %s541
          %s543 = sshll.u32 [#allocation8], 4
          %s544 = int_to_ptr.vmem [resolvable:$true] %s543
          %549 = dma.hbm_to_vmem [thread:$0]  %s8, 512, %s544, [#allocation9], 128, 128, 8
        $region40: #{tpu_custom_call.1} parent=11 // pred_fallthru
          _
        // Predicated region
        $region41: #{tpu_custom_call.1} parent=11 // pred_check
          %p550 = pneg %p256
        $region42: #{tpu_custom_call.1} parent=11 // pred_check_branch
          %552 = sbr.rel (%p550) target = $region44
        $region43: #{tpu_custom_call.1} parent=11 // pred_region
          _
        $region44: #{tpu_custom_call.1} parent=11 // pred_fallthru
          _
        // Predicated region
        $region45: #{tpu_custom_call.1} parent=11 // pred_check
          %p553 = pneg %p277
        $region46: #{tpu_custom_call.1} parent=11 // pred_check_branch
          %555 = sbr.rel (%p553) target = $region48
        $region47: #{tpu_custom_call.1} parent=11 // pred_region
          %s557 = ssub.s32 512, 512
          %558 = vsyncadd [#allocation9], %s557
          %s559 = sshll.u32 [#allocation10], 4
          %s560 = int_to_ptr.vmem [resolvable:$true] %s559
          %565 = dma.hbm_to_vmem [thread:$0]  %s10, 512, %s560, [#allocation9], 128, 128, 8
        $region48: #{tpu_custom_call.1} parent=11 // pred_fallthru
          _
        // Predicated region
        $region49: #{tpu_custom_call.1} parent=11 // pred_check
          %p566 = pneg %p298
        $region50: #{tpu_custom_call.1} parent=11 // pred_check_branch
          %568 = sbr.rel (%p566) target = $region52
        $region51: #{tpu_custom_call.1} parent=11 // pred_region
          _
        $region52: #{tpu_custom_call.1} parent=11 // pred_fallthru
          _
        // Predicated region
        $region53: #{tpu_custom_call.1} parent=11 // pred_check
          %p569 = pneg %p319
        $region54: #{tpu_custom_call.1} parent=11 // pred_check_branch
          %571 = sbr.rel (%p569) target = $region56
        $region55: #{tpu_custom_call.1} parent=11 // pred_region
          %s573 = ssub.s32 512, 512
          %574 = vsyncadd [#allocation12], %s573
          %s575 = sshll.u32 [#allocation11], 4
          %s576 = int_to_ptr.vmem [resolvable:$true] %s575
          %581 = dma.hbm_to_vmem [thread:$0]  %s12, 512, %s576, [#allocation12], 128, 128, 8
        $region56: #{tpu_custom_call.1} parent=11 // pred_fallthru
          _
        // Predicated region
        $region57: #{tpu_custom_call.1} parent=11 // pred_check
          %p582 = pneg %p340
        $region58: #{tpu_custom_call.1} parent=11 // pred_check_branch
          %584 = sbr.rel (%p582) target = $region60
        $region59: #{tpu_custom_call.1} parent=11 // pred_region
          _
        $region60: #{tpu_custom_call.1} parent=11 // pred_fallthru
          _
        // Predicated region
        $region61: #{tpu_custom_call.1} parent=11 // pred_check
          %p585 = pneg %p361
        $region62: #{tpu_custom_call.1} parent=11 // pred_check_branch
          %587 = sbr.rel (%p585) target = $region64
        $region63: #{tpu_custom_call.1} parent=11 // pred_region
          %s589 = ssub.s32 512, 512
          %590 = vsyncadd [#allocation12], %s589
          %s591 = sshll.u32 [#allocation13], 4
          %s592 = int_to_ptr.vmem [resolvable:$true] %s591
          %597 = dma.hbm_to_vmem [thread:$0]  %s14, 512, %s592, [#allocation12], 128, 128, 8
        $region64: #{tpu_custom_call.1} parent=11 // pred_fallthru
          _
        // Predicated region
        $region65: #{tpu_custom_call.1} parent=11 // pred_check
          %p598 = pneg %p382
        $region66: #{tpu_custom_call.1} parent=11 // pred_check_branch
          %600 = sbr.rel (%p598) target = $region68
        $region67: #{tpu_custom_call.1} parent=11 // pred_region
          _
        $region68: #{tpu_custom_call.1} parent=11 // pred_fallthru
          _
        // Predicated region
        $region69: #{tpu_custom_call.1} parent=11 // pred_check
          %p601 = pneg %p403
        $region70: #{tpu_custom_call.1} parent=11 // pred_check_branch
          %603 = sbr.rel (%p601) target = $region72
        $region71: #{tpu_custom_call.1} parent=11 // pred_region
          _
        $region72: #{tpu_custom_call.1} parent=11 // pred_fallthru
          _
        // Predicated region
        $region73: #{tpu_custom_call.1} parent=11 // pred_check
          %p604 = pneg %p424
        $region74: #{tpu_custom_call.1} parent=11 // pred_check_branch
          %606 = sbr.rel (%p604) target = $region76
        $region75: #{tpu_custom_call.1} parent=11 // pred_region
          _
        $region76: #{tpu_custom_call.1} parent=11 // pred_fallthru
          _
      $region12: #{tpu_custom_call.1} parent=5 // pred_fallthru
        _
      %p607 = scmp.lt.s32.totalorder %s36, 2
      // Predicated region
      $region77: #{tpu_custom_call.1} parent=5 // pred_check
        %p608 = pneg %p607
      $region78: #{tpu_custom_call.1} parent=5 // pred_check_branch
        %610 = sbr.rel (%p608) target = $region80
      $region79: #{tpu_custom_call.1} parent=5 // pred_region
        // Predicated region
        $region81: #{tpu_custom_call.1} parent=79 // pred_check
          %p611 = pneg %p56
        $region82: #{tpu_custom_call.1} parent=79 // pred_check_branch
          %613 = sbr.rel (%p611) target = $region84
        $region83: #{tpu_custom_call.1} parent=79 // pred_region
          %s614 = smul.u32 2, %s36
          %p615 = scmp.lt.s32.totalorder %s614, 3
          %s616 = scalar_select %p615, %s614, 3
          %s617 = smul.addr %s616, 8
          %s618 = scalar_lea.vmem %s0, %s617
          %s619 = smul.u32 2, %s36
        $region84: #{tpu_custom_call.1} parent=79 // pred_fallthru
          _
        // Predicated region
        $region85: #{tpu_custom_call.1} parent=79 // pred_check
          %p620 = pneg %p82
        $region86: #{tpu_custom_call.1} parent=79 // pred_check_branch
          %622 = sbr.rel (%p620) target = $region88
        $region87: #{tpu_custom_call.1} parent=79 // pred_region
          %s623 = smul.u32 2, %s36
          %p624 = scmp.lt.s32.totalorder %s623, 3
          %s625 = scalar_select %p624, %s623, 3
          %s626 = smul.addr %s625, 2
          %s627 = smul.addr %s626, 8
          %s628 = scalar_lea.vmem %s1, %s627
          %s629 = smul.u32 2, %s36
        $region88: #{tpu_custom_call.1} parent=79 // pred_fallthru
          _
      $region80: #{tpu_custom_call.1} parent=5 // pred_fallthru
        _
      %p630 = scmp.le.s32.totalorder 1, %s36
      %p631 = scmp.lt.s32.totalorder %s36, 3
      %p632 = pnand %p630, %p631
      %p633 = pneg %p632
      // Predicated region
      $region89: #{tpu_custom_call.1} parent=5 // pred_check
        _
      $region90: #{tpu_custom_call.1} parent=5 // pred_check_branch
        %635 = sbr.rel (%p632) target = $region92
      $region91: #{tpu_custom_call.1} parent=5 // pred_region
        %s636 = ssub.s32 %s36, 1
        // Predicated region
        $region93: #{tpu_custom_call.1} parent=91 // pred_check
          %p637 = pneg %p109
        $region94: #{tpu_custom_call.1} parent=91 // pred_check_branch
          %639 = sbr.rel (%p637) target = $region96
        $region95: #{tpu_custom_call.1} parent=91 // pred_region
          %640 = dma.done [#allocation3], 128
        $region96: #{tpu_custom_call.1} parent=91 // pred_fallthru
          _
        // Predicated region
        $region97: #{tpu_custom_call.1} parent=91 // pred_check
          %p641 = pneg %p151
        $region98: #{tpu_custom_call.1} parent=91 // pred_check_branch
          %643 = sbr.rel (%p641) target = $region100
        $region99: #{tpu_custom_call.1} parent=91 // pred_region
          %644 = dma.done [#allocation6], 512
        $region100: #{tpu_custom_call.1} parent=91 // pred_fallthru
          _
        // Predicated region
        $region101: #{tpu_custom_call.1} parent=91 // pred_check
          %p645 = pneg %p193
        $region102: #{tpu_custom_call.1} parent=91 // pred_check_branch
          %647 = sbr.rel (%p645) target = $region104
        $region103: #{tpu_custom_call.1} parent=91 // pred_region
          %648 = dma.done [#allocation6], 512
        $region104: #{tpu_custom_call.1} parent=91 // pred_fallthru
          _
        // Predicated region
        $region105: #{tpu_custom_call.1} parent=91 // pred_check
          %p649 = pneg %p235
        $region106: #{tpu_custom_call.1} parent=91 // pred_check_branch
          %651 = sbr.rel (%p649) target = $region108
        $region107: #{tpu_custom_call.1} parent=91 // pred_region
          %652 = dma.done [#allocation9], 512
        $region108: #{tpu_custom_call.1} parent=91 // pred_fallthru
          _
        // Predicated region
        $region109: #{tpu_custom_call.1} parent=91 // pred_check
          %p653 = pneg %p277
        $region110: #{tpu_custom_call.1} parent=91 // pred_check_branch
          %655 = sbr.rel (%p653) target = $region112
        $region111: #{tpu_custom_call.1} parent=91 // pred_region
          %656 = dma.done [#allocation9], 512
        $region112: #{tpu_custom_call.1} parent=91 // pred_fallthru
          _
        // Predicated region
        $region113: #{tpu_custom_call.1} parent=91 // pred_check
          %p657 = pneg %p319
        $region114: #{tpu_custom_call.1} parent=91 // pred_check_branch
          %659 = sbr.rel (%p657) target = $region116
        $region115: #{tpu_custom_call.1} parent=91 // pred_region
          %660 = dma.done [#allocation12], 512
        $region116: #{tpu_custom_call.1} parent=91 // pred_fallthru
          _
        // Predicated region
        $region117: #{tpu_custom_call.1} parent=91 // pred_check
          %p661 = pneg %p361
        $region118: #{tpu_custom_call.1} parent=91 // pred_check_branch
          %663 = sbr.rel (%p661) target = $region120
        $region119: #{tpu_custom_call.1} parent=91 // pred_region
          %664 = dma.done [#allocation12], 512
        $region120: #{tpu_custom_call.1} parent=91 // pred_fallthru
          _
        %s665 = smul.u32 2, %s41
        %p666 = scmp.lt.s32.totalorder %s665, 3
        %s667 = scalar_select %p666, %s665, 3
        %s668 = smul.addr %s667, 8
        %s669 = scalar_lea.vmem %s0, %s668
        %p670 = pneg %p62
        %p671 = pneg %p59
        %s672 = smul.u32 2, %s41
        %p673 = scmp.lt.s32.totalorder %s672, 3
        %s674 = scalar_select %p673, %s672, 3
        %s675 = smul.addr %s674, 2
        %s676 = smul.addr %s675, 8
        %s677 = scalar_lea.vmem %s1, %s676
        %p678 = pneg %p88
        %p679 = pneg %p85
        %p680 = pneg %p109
        %p681 = pneg %p106
        %p682 = pneg %p130
        %p683 = pneg %p127
        %p684 = pneg %p151
        %p685 = pneg %p148
        %p686 = pneg %p172
        %p687 = pneg %p169
        %p688 = pneg %p193
        %p689 = pneg %p190
        %p690 = pneg %p214
        %p691 = pneg %p211
        %p692 = pneg %p235
        %p693 = pneg %p232
        %p694 = pneg %p256
        %p695 = pneg %p253
        %p696 = pneg %p277
        %p697 = pneg %p274
        %p698 = pneg %p298
        %p699 = pneg %p295
        %p700 = pneg %p319
        %p701 = pneg %p316
        %p702 = pneg %p340
        %p703 = pneg %p337
        %p704 = pneg %p361
        %p705 = pneg %p358
        %p706 = pneg %p382
        %p707 = pneg %p379
        %p708 = pneg %p403
        %p709 = pneg %p400
        %p710 = pneg %p424
        %p711 = pneg %p421
        %p712 = pneg %p450
        %p713 = pneg %p447
        %s714 = sand.u32 %s437, 1
        %s715 = scalar_lea.sflag [#allocation4], %s714
        %s716 = sand.u32 %s437, 1
        %s717 = smul.addr %s716, 16
        %s718 = scalar_lea.vmem [#allocation14], %s717
        %p719 = pneg %p476
        %p720 = pneg %p473
        %s721 = sand.u32 %s463, 1
        %s722 = scalar_lea.sflag [#allocation16], %s721
        %s723 = sand.u32 %s463, 1
        %s724 = smul.addr %s723, 16
        %s725 = scalar_lea.vmem [#allocation15], %s724
        %s726 = smul.u32 2, %s41
        %p727 = scmp.lt.s32.totalorder %s726, 3
        %s728 = scalar_select %p727, %s726, 3
        %s729 = smul.addr %s728, 8
        %s730 = scalar_lea.vmem %s0, %s729
        %s731 = smul.u32 2, %s41
        %s732 = smul.u32 2, %s41
        %p733 = scmp.lt.s32.totalorder %s732, 3
        %s734 = scalar_select %p733, %s732, 3
        %s735 = smul.addr %s734, 2
        %s736 = smul.addr %s735, 8
        %s737 = scalar_lea.vmem %s1, %s736
        %s738 = smul.u32 2, %s41
        %s739 = smul.u32 2, %s41
        %s740 = smul.u32 2, %s41
        %v741 = vld [vmem:[#allocation2] sm:$0x1f]
        %v742 = vld [vmem:[%s3] sm:$0x1f]
        %v743 = vld [vmem:[%s730] sm:$0xff]
        %v744 = vld [vmem:[%s730 + $0x8] sm:$0xff]
        %v745 = vld [vmem:[%s737] sm:$0xff]
        %v746 = vld [vmem:[%s737 + $0x8] sm:$0xff]
        %v747 = vld [vmem:[%s737 + $0x10] sm:$0xff]
        %v748 = vld [vmem:[%s737 + $0x18] sm:$0xff]
        %vm749 = vcmask 261120
        %v750 = vsel %vm749, %v743, 0.0
        %751 = vadd.xlane.f32.xlu0 %v750
        %v752 = vpop.xlane.xlu0 %751
        %v753 = vsel %vm749, %v744, 0.0
        %754 = vadd.xlane.f32.xlu0 %v753
        %v755 = vpop.xlane.xlu0 %754
        %v756 = vrcp.pop 32.0
        %v757 = vmul.f32 %v752, %v756
        %v758 = vmul.f32 %v755, %v756
        %v759 = vsub.f32 %v743, %v757
        %v760 = vsub.f32 %v744, %v758
        %v761 = vmul.f32 %v759, %v759
        %v762 = vmul.f32 %v760, %v760
        %v763 = vsel %vm749, %v761, 0.0
        %764 = vadd.xlane.f32.xlu0 %v763
        %v765 = vpop.xlane.xlu0 %764
        %v766 = vsel %vm749, %v762, 0.0
        %767 = vadd.xlane.f32.xlu0 %v766
        %v768 = vpop.xlane.xlu0 %767
        %v769 = vmul.f32 %v765, %v756
        %v770 = vmul.f32 %v768, %v756
        %v771 = vadd.f32 %v769, 1e-05
        %v772 = vadd.f32 %v770, 1e-05
        %v773 = vrsqrt.pop %v771
        %v774 = vrsqrt.pop %v772
        %v775 = vmul.f32 %v759, %v773
        %v776 = vmul.f32 %v760, %v774
        %v777 = vlaneseq
        %v778 = vshrl.u32 %v777, 7
        %v779 = vsub.s32 0, %v778
        %v780 = vrot.slane %v741, %v779
        %v781 = vmul.f32 %v775, %v780
        %v782 = vmul.f32 %v776, %v780
        %v783 = vlaneseq
        %v784 = vshrl.u32 %v783, 7
        %v785 = vsub.s32 0, %v784
        %v786 = vrot.slane %v742, %v785
        %v787 = vadd.f32 %v781, %v786
        %v788 = vadd.f32 %v782, %v786
        %v789 = vsel %vm749, %v745, 0.0
        %790 = vadd.xlane.f32.xlu0 %v789
        %v791 = vpop.xlane.xlu0 %790
        %v792 = vsel %vm749, %v746, 0.0
        %793 = vadd.xlane.f32.xlu0 %v792
        %v794 = vpop.xlane.xlu0 %793
        %v795 = vsel %vm749, %v747, 0.0
        %796 = vadd.xlane.f32.xlu0 %v795
        %v797 = vpop.xlane.xlu0 %796
        %v798 = vsel %vm749, %v748, 0.0
        %799 = vadd.xlane.f32.xlu0 %v798
        %v800 = vpop.xlane.xlu0 %799
        %v801 = vmul.f32 %v791, %v756
        %v802 = vmul.f32 %v794, %v756
        %v803 = vmul.f32 %v797, %v756
        %v804 = vmul.f32 %v800, %v756
        %v805 = vsub.f32 %v745, %v801
        %v806 = vsub.f32 %v746, %v802
        %v807 = vsub.f32 %v747, %v803
        %v808 = vsub.f32 %v748, %v804
        %v809 = vmul.f32 %v805, %v805
        %v810 = vmul.f32 %v806, %v806
        %v811 = vmul.f32 %v807, %v807
        %v812 = vmul.f32 %v808, %v808
        %v813 = vsel %vm749, %v809, 0.0
        %814 = vadd.xlane.f32.xlu0 %v813
        %v815 = vpop.xlane.xlu0 %814
        %v816 = vsel %vm749, %v810, 0.0
        %817 = vadd.xlane.f32.xlu0 %v816
        %v818 = vpop.xlane.xlu0 %817
        %v819 = vsel %vm749, %v811, 0.0
        %820 = vadd.xlane.f32.xlu0 %v819
        %v821 = vpop.xlane.xlu0 %820
        %v822 = vsel %vm749, %v812, 0.0
        %823 = vadd.xlane.f32.xlu0 %v822
        %v824 = vpop.xlane.xlu0 %823
        %v825 = vmul.f32 %v815, %v756
        %v826 = vmul.f32 %v818, %v756
        %v827 = vmul.f32 %v821, %v756
        %v828 = vmul.f32 %v824, %v756
        %v829 = vadd.f32 %v825, 1e-05
        %v830 = vadd.f32 %v826, 1e-05
        %v831 = vadd.f32 %v827, 1e-05
        %v832 = vadd.f32 %v828, 1e-05
        %v833 = vrsqrt.pop %v829
        %v834 = vrsqrt.pop %v830
        %v835 = vrsqrt.pop %v831
        %v836 = vrsqrt.pop %v832
        %v837 = vmul.f32 %v805, %v833
        %v838 = vmul.f32 %v806, %v834
        %v839 = vmul.f32 %v807, %v835
        %v840 = vmul.f32 %v808, %v836
        %v841 = vlaneseq
        %v842 = vshrl.u32 %v841, 7
        %v843 = vsub.s32 1, %v842
        %v844 = vrot.slane %v741, %v843
        %v845 = vmul.f32 %v837, %v844
        %v846 = vmul.f32 %v838, %v844
        %v847 = vmul.f32 %v839, %v844
        %v848 = vmul.f32 %v840, %v844
        %v849 = vlaneseq
        %v850 = vshrl.u32 %v849, 7
        %v851 = vsub.s32 1, %v850
        %v852 = vrot.slane %v742, %v851
        %v853 = vadd.f32 %v845, %v852
        %v854 = vadd.f32 %v846, %v852
        %v855 = vadd.f32 %v847, %v852
        %v856 = vadd.f32 %v848, %v852
        %v857 = vld [vmem:[#allocation5] sm:$0xff]
        %v858 = vld [vmem:[#allocation5 + $0x8] sm:$0xff]
        %v859 = vld [vmem:[#allocation5 + $0x10] sm:$0xff]
        %v860 = vld [vmem:[#allocation5 + $0x18] sm:$0xff]
        %v861 = vld [vmem:[%s5] sm:$0x1]
        %v863 = vlaneseq
        %v864 = vshrl.u32 %v863, 7
        %v865 = vsub.s32 0, %v864
        %v866 = vrot.slane %v861, %v865
        %v869 = vsel %vm749, %v787, 0
        %v872 = vsel %vm749, %v788, 0
        %874 = vmatprep.subr.mxu0 0.0
        %875 = vmatpush1.msra.mxu0 %v857
        %876 = vmatprep.subr.mxu0 0.0
        %877 = vmatpush1.msra.mxu0 %v858
        %878 = vmatprep.subr.mxu0 0.0
        %879 = vmatpush1.msra.mxu0 %v859
        %880 = vmatprep.subr.mxu0 0.0
        %881 = vmatpush1.msra.mxu0 %v860
        %882 = vmatprep.subr.mxu0 0.0
        %883 = vmatpush1.msra.mxu0 0.0
        %884 = vmatprep.subr.mxu0 0.0
        %885 = vmatpush1.msra.mxu0 0.0
        %886 = vmatprep.subr.mxu0 0.0
        %887 = vmatpush1.msra.mxu0 0.0
        %888 = vmatprep.subr.mxu0 0.0
        %889 = vmatpush1.msra.mxu0 0.0
        %890 = vmatprep.subr.mxu0 0.0
        %891 = vmatpush1.msra.mxu0 0.0
        %892 = vmatprep.subr.mxu0 0.0
        %893 = vmatpush1.msra.mxu0 0.0
        %894 = vmatprep.subr.mxu0 0.0
        %895 = vmatpush1.msra.mxu0 0.0
        %896 = vmatprep.subr.mxu0 0.0
        %897 = vmatpush1.msra.mxu0 0.0
        %898 = vmatprep.subr.mxu0 0.0
        %899 = vmatpush1.msra.mxu0 0.0
        %900 = vmatprep.subr.mxu0 0.0
        %901 = vmatpush1.msra.mxu0 0.0
        %902 = vmatprep.subr.mxu0 0.0
        %903 = vmatpush1.msra.mxu0 0.0
        %904 = vmatprep.subr.mxu0 0.0
        %905 = vmatpush1.msra.mxu0 0.0
        %906 = vmatprep.subr.mxu0 0.0
        %907 = vmatpush1.msra.mxu0 0.0
        %908 = vmatprep.subr.mxu0 0.0
        %909 = vmatpush1.msra.mxu0 0.0
        %910 = vmatprep.subr.mxu0 0.0
        %911 = vmatpush1.msra.mxu0 0.0
        %912 = vmatprep.subr.mxu0 0.0
        %913 = vmatpush1.msra.mxu0 0.0
        %914 = vmatprep.subr.mxu0 0.0
        %915 = vmatpush1.msra.mxu0 0.0
        %916 = vmatprep.subr.mxu0 0.0
        %917 = vmatpush1.msra.mxu0 0.0
        %918 = vmatprep.subr.mxu0 0.0
        %919 = vmatpush1.msra.mxu0 0.0
        %920 = vmatprep.subr.mxu0 0.0
        %921 = vmatpush1.msra.mxu0 0.0
        %922 = vmatprep.subr.mxu0 0.0
        %923 = vmatpush1.msra.mxu0 0.0
        %924 = vmatprep.subr.mxu0 0.0
        %925 = vmatpush1.msra.mxu0 0.0
        %926 = vmatprep.subr.mxu0 0.0
        %927 = vmatpush1.msra.mxu0 0.0
        %928 = vmatprep.subr.mxu0 0.0
        %929 = vmatpush1.msra.mxu0 0.0
        %930 = vmatprep.subr.mxu0 0.0
        %931 = vmatpush1.msra.mxu0 0.0
        %932 = vmatprep.subr.mxu0 0.0
        %933 = vmatpush1.msra.mxu0 0.0
        %934 = vmatprep.subr.mxu0 0.0
        %935 = vmatpush1.msra.mxu0 0.0
        %936 = vmatprep.subr.mxu0 0.0
        %937 = vmatpush1.msra.mxu0 0.0
        %938 = vmatprep.mubr.f32.mxu0 0.0
        %939 = vmatmul.mubr.f32.gmra.mrb[0].mxu0 %v869
        %v940 = vpop.f32.mrb[0].mxu0
        %v941 = vadd.f32 %v866, %v940
        %v942 = vpop.f32.mrb[0].mxu0
        %943 = vmatprep.mubr.f32.mxu0 0.0
        %944 = vmatmul.mubr.f32.gmra.mrb[0].mxu0 %v872
        %v945 = vpop.f32.mrb[0].mxu0
        %v946 = vadd.f32 %v866, %v945
        %v947 = vpop.f32.mrb[0].mxu0
        %948 = vdwg.mxu0
        %v949 = vld [vmem:[#allocation7] sm:$0xff]
        %v950 = vld [vmem:[#allocation7 + $0x8] sm:$0xff]
        %v951 = vld [vmem:[#allocation7 + $0x10] sm:$0xff]
        %v952 = vld [vmem:[#allocation7 + $0x18] sm:$0xff]
        %v953 = vld [vmem:[%s7] sm:$0x1]
        %956 = vrot.lane.b32.xlu0 %v941, 120
        %v957 = vpop.permute.xlu0 %956
        %958 = vrot.lane.b32.xlu0 %v946, 120
        %v959 = vpop.permute.xlu0 %958
        %962 = vrot.lane.b32.xlu0 %v941, 112
        %v963 = vpop.permute.xlu0 %962
        %964 = vrot.lane.b32.xlu0 %v946, 112
        %v965 = vpop.permute.xlu0 %964
        %968 = vrot.lane.b32.xlu0 %v941, 104
        %v969 = vpop.permute.xlu0 %968
        %970 = vrot.lane.b32.xlu0 %v946, 104
        %v971 = vpop.permute.xlu0 %970
        %v974 = vmul.f32 %v941, 0.35355338
        %v975 = vmul.f32 %v946, 0.35355338
        %v976 = vmul.f32 %v957, 0.35355338
        %v977 = vmul.f32 %v959, 0.35355338
        %v978 = vmul.f32 %v963, 0.35355338
        %v979 = vmul.f32 %v965, 0.35355338
        %v980 = vmul.f32 %v969, 0.35355338
        %v981 = vmul.f32 %v971, 0.35355338
        %982 = vrot.lane.b32.xlu0 %v941, 96
        %v983 = vpop.permute.xlu0 %982
        %vm984 = vcmask 64512
        %v986 = vsel %vm984, %v974, 0
        %v988 = vsel %vm984, %v983, 0
        %990 = vmatprep.subr.mxu0 0.0
        %991 = vmatpush1.xpose.msra.mxu0 %v988
        %992 = vmatprep.subr.mxu0 0.0
        %993 = vmatpush1.xpose.msra.mxu0 0.0
        %994 = vmatprep.subr.mxu0 0.0
        %995 = vmatpush1.xpose.msra.mxu0 0.0
        %996 = vmatprep.subr.mxu0 0.0
        %997 = vmatpush1.xpose.msra.mxu0 0.0
        %998 = vmatprep.subr.mxu0 0.0
        %999 = vmatpush1.xpose.msra.mxu0 0.0
        %1000 = vmatprep.subr.mxu0 0.0
        %1001 = vmatpush1.xpose.msra.mxu0 0.0
        %1002 = vmatprep.subr.mxu0 0.0
        %1003 = vmatpush1.xpose.msra.mxu0 0.0
        %1004 = vmatprep.subr.mxu0 0.0
        %1005 = vmatpush1.xpose.msra.mxu0 0.0
        %1006 = vmatprep.subr.mxu0 0.0
        %1007 = vmatpush1.xpose.msra.mxu0 0.0
        %1008 = vmatprep.subr.mxu0 0.0
        %1009 = vmatpush1.xpose.msra.mxu0 0.0
        %1010 = vmatprep.subr.mxu0 0.0
        %1011 = vmatpush1.xpose.msra.mxu0 0.0
        %1012 = vmatprep.subr.mxu0 0.0
        %1013 = vmatpush1.xpose.msra.mxu0 0.0
        %1014 = vmatprep.subr.mxu0 0.0
        %1015 = vmatpush1.xpose.msra.mxu0 0.0
        %1016 = vmatprep.subr.mxu0 0.0
        %1017 = vmatpush1.xpose.msra.mxu0 0.0
        %1018 = vmatprep.subr.mxu0 0.0
        %1019 = vmatpush1.xpose.msra.mxu0 0.0
        %1020 = vmatprep.subr.mxu0 0.0
        %1021 = vmatpush1.xpose.msra.mxu0 0.0
        %1022 = vmatprep.subr.mxu0 0.0
        %1023 = vmatpush1.xpose.msra.mxu0 0.0
        %1024 = vmatprep.subr.mxu0 0.0
        %1025 = vmatpush1.xpose.msra.mxu0 0.0
        %1026 = vmatprep.subr.mxu0 0.0
        %1027 = vmatpush1.xpose.msra.mxu0 0.0
        %1028 = vmatprep.subr.mxu0 0.0
        %1029 = vmatpush1.xpose.msra.mxu0 0.0
        %1030 = vmatprep.subr.mxu0 0.0
        %1031 = vmatpush1.xpose.msra.mxu0 0.0
        %1032 = vmatprep.subr.mxu0 0.0
        %1033 = vmatpush1.xpose.msra.mxu0 0.0
        %1034 = vmatprep.subr.mxu0 0.0
        %1035 = vmatpush1.xpose.msra.mxu0 0.0
        %1036 = vmatprep.subr.mxu0 0.0
        %1037 = vmatpush1.xpose.msra.mxu0 0.0
        %1038 = vmatprep.subr.mxu0 0.0
        %1039 = vmatpush1.xpose.msra.mxu0 0.0
        %1040 = vmatprep.subr.mxu0 0.0
        %1041 = vmatpush1.xpose.msra.mxu0 0.0
        %1042 = vmatprep.subr.mxu0 0.0
        %1043 = vmatpush1.xpose.msra.mxu0 0.0
        %1044 = vmatprep.subr.mxu0 0.0
        %1045 = vmatpush1.xpose.msra.mxu0 0.0
        %1046 = vmatprep.subr.mxu0 0.0
        %1047 = vmatpush1.xpose.msra.mxu0 0.0
        %1048 = vmatprep.subr.mxu0 0.0
        %1049 = vmatpush1.xpose.msra.mxu0 0.0
        %1050 = vmatprep.subr.mxu0 0.0
        %1051 = vmatpush1.xpose.msra.mxu0 0.0
        %1052 = vmatprep.subr.mxu0 0.0
        %1053 = vmatpush1.xpose.msra.mxu0 0.0
        %1054 = vmatprep.mubr.f32.mxu0 0.0
        %1055 = vmatmul.mubr.f32.gmra.mrb[0].mxu0 %v986
        %v1056 = vpop.f32.mrb[0].mxu0
        %v1057 = vadd.f32 0.0, %v1056
        %v1058 = vpop.f32.mrb[0].mxu0
        %1059 = vdwg.mxu0
        %1060 = vrot.lane.b32.xlu0 %v946, 96
        %v1061 = vpop.permute.xlu0 %1060
        %v1063 = vsel %vm984, %v975, 0
        %v1065 = vsel %vm984, %v1061, 0
        %1067 = vmatprep.subr.mxu0 0.0
        %1068 = vmatpush1.xpose.msra.mxu0 %v1065
        %1069 = vmatprep.subr.mxu0 0.0
        %1070 = vmatpush1.xpose.msra.mxu0 0.0
        %1071 = vmatprep.subr.mxu0 0.0
        %1072 = vmatpush1.xpose.msra.mxu0 0.0
        %1073 = vmatprep.subr.mxu0 0.0
        %1074 = vmatpush1.xpose.msra.mxu0 0.0
        %1075 = vmatprep.subr.mxu0 0.0
        %1076 = vmatpush1.xpose.msra.mxu0 0.0
        %1077 = vmatprep.subr.mxu0 0.0
        %1078 = vmatpush1.xpose.msra.mxu0 0.0
        %1079 = vmatprep.subr.mxu0 0.0
        %1080 = vmatpush1.xpose.msra.mxu0 0.0
        %1081 = vmatprep.subr.mxu0 0.0
        %1082 = vmatpush1.xpose.msra.mxu0 0.0
        %1083 = vmatprep.subr.mxu0 0.0
        %1084 = vmatpush1.xpose.msra.mxu0 0.0
        %1085 = vmatprep.subr.mxu0 0.0
        %1086 = vmatpush1.xpose.msra.mxu0 0.0
        %1087 = vmatprep.subr.mxu0 0.0
        %1088 = vmatpush1.xpose.msra.mxu0 0.0
        %1089 = vmatprep.subr.mxu0 0.0
        %1090 = vmatpush1.xpose.msra.mxu0 0.0
        %1091 = vmatprep.subr.mxu0 0.0
        %1092 = vmatpush1.xpose.msra.mxu0 0.0
        %1093 = vmatprep.subr.mxu0 0.0
        %1094 = vmatpush1.xpose.msra.mxu0 0.0
        %1095 = vmatprep.subr.mxu0 0.0
        %1096 = vmatpush1.xpose.msra.mxu0 0.0
        %1097 = vmatprep.subr.mxu0 0.0
        %1098 = vmatpush1.xpose.msra.mxu0 0.0
        %1099 = vmatprep.subr.mxu0 0.0
        %1100 = vmatpush1.xpose.msra.mxu0 0.0
        %1101 = vmatprep.subr.mxu0 0.0
        %1102 = vmatpush1.xpose.msra.mxu0 0.0
        %1103 = vmatprep.subr.mxu0 0.0
        %1104 = vmatpush1.xpose.msra.mxu0 0.0
        %1105 = vmatprep.subr.mxu0 0.0
        %1106 = vmatpush1.xpose.msra.mxu0 0.0
        %1107 = vmatprep.subr.mxu0 0.0
        %1108 = vmatpush1.xpose.msra.mxu0 0.0
        %1109 = vmatprep.subr.mxu0 0.0
        %1110 = vmatpush1.xpose.msra.mxu0 0.0
        %1111 = vmatprep.subr.mxu0 0.0
        %1112 = vmatpush1.xpose.msra.mxu0 0.0
        %1113 = vmatprep.subr.mxu0 0.0
        %1114 = vmatpush1.xpose.msra.mxu0 0.0
        %1115 = vmatprep.subr.mxu0 0.0
        %1116 = vmatpush1.xpose.msra.mxu0 0.0
        %1117 = vmatprep.subr.mxu0 0.0
        %1118 = vmatpush1.xpose.msra.mxu0 0.0
        %1119 = vmatprep.subr.mxu0 0.0
        %1120 = vmatpush1.xpose.msra.mxu0 0.0
        %1121 = vmatprep.subr.mxu0 0.0
        %1122 = vmatpush1.xpose.msra.mxu0 0.0
        %1123 = vmatprep.subr.mxu0 0.0
        %1124 = vmatpush1.xpose.msra.mxu0 0.0
        %1125 = vmatprep.subr.mxu0 0.0
        %1126 = vmatpush1.xpose.msra.mxu0 0.0
        %1127 = vmatprep.subr.mxu0 0.0
        %1128 = vmatpush1.xpose.msra.mxu0 0.0
        %1129 = vmatprep.subr.mxu0 0.0
        %1130 = vmatpush1.xpose.msra.mxu0 0.0
        %1131 = vmatprep.mubr.f32.mxu0 0.0
        %1132 = vmatmul.mubr.f32.gmra.mrb[0].mxu0 %v1063
        %v1133 = vpop.f32.mrb[0].mxu0
        %v1134 = vadd.f32 0.0, %v1133
        %v1135 = vpop.f32.mrb[0].mxu0
        %1136 = vdwg.mxu0
        %1137 = vrot.lane.b32.xlu0 %v957, 96
        %v1138 = vpop.permute.xlu0 %1137
        %v1140 = vsel %vm984, %v976, 0
        %v1142 = vsel %vm984, %v1138, 0
        %1144 = vmatprep.subr.mxu0 0.0
        %1145 = vmatpush1.xpose.msra.mxu0 %v1142
        %1146 = vmatprep.subr.mxu0 0.0
        %1147 = vmatpush1.xpose.msra.mxu0 0.0
        %1148 = vmatprep.subr.mxu0 0.0
        %1149 = vmatpush1.xpose.msra.mxu0 0.0
        %1150 = vmatprep.subr.mxu0 0.0
        %1151 = vmatpush1.xpose.msra.mxu0 0.0
        %1152 = vmatprep.subr.mxu0 0.0
        %1153 = vmatpush1.xpose.msra.mxu0 0.0
        %1154 = vmatprep.subr.mxu0 0.0
        %1155 = vmatpush1.xpose.msra.mxu0 0.0
        %1156 = vmatprep.subr.mxu0 0.0
        %1157 = vmatpush1.xpose.msra.mxu0 0.0
        %1158 = vmatprep.subr.mxu0 0.0
        %1159 = vmatpush1.xpose.msra.mxu0 0.0
        %1160 = vmatprep.subr.mxu0 0.0
        %1161 = vmatpush1.xpose.msra.mxu0 0.0
        %1162 = vmatprep.subr.mxu0 0.0
        %1163 = vmatpush1.xpose.msra.mxu0 0.0
        %1164 = vmatprep.subr.mxu0 0.0
        %1165 = vmatpush1.xpose.msra.mxu0 0.0
        %1166 = vmatprep.subr.mxu0 0.0
        %1167 = vmatpush1.xpose.msra.mxu0 0.0
        %1168 = vmatprep.subr.mxu0 0.0
        %1169 = vmatpush1.xpose.msra.mxu0 0.0
        %1170 = vmatprep.subr.mxu0 0.0
        %1171 = vmatpush1.xpose.msra.mxu0 0.0
        %1172 = vmatprep.subr.mxu0 0.0
        %1173 = vmatpush1.xpose.msra.mxu0 0.0
        %1174 = vmatprep.subr.mxu0 0.0
        %1175 = vmatpush1.xpose.msra.mxu0 0.0
        %1176 = vmatprep.subr.mxu0 0.0
        %1177 = vmatpush1.xpose.msra.mxu0 0.0
        %1178 = vmatprep.subr.mxu0 0.0
        %1179 = vmatpush1.xpose.msra.mxu0 0.0
        %1180 = vmatprep.subr.mxu0 0.0
        %1181 = vmatpush1.xpose.msra.mxu0 0.0
        %1182 = vmatprep.subr.mxu0 0.0
        %1183 = vmatpush1.xpose.msra.mxu0 0.0
        %1184 = vmatprep.subr.mxu0 0.0
        %1185 = vmatpush1.xpose.msra.mxu0 0.0
        %1186 = vmatprep.subr.mxu0 0.0
        %1187 = vmatpush1.xpose.msra.mxu0 0.0
        %1188 = vmatprep.subr.mxu0 0.0
        %1189 = vmatpush1.xpose.msra.mxu0 0.0
        %1190 = vmatprep.subr.mxu0 0.0
        %1191 = vmatpush1.xpose.msra.mxu0 0.0
        %1192 = vmatprep.subr.mxu0 0.0
        %1193 = vmatpush1.xpose.msra.mxu0 0.0
        %1194 = vmatprep.subr.mxu0 0.0
        %1195 = vmatpush1.xpose.msra.mxu0 0.0
        %1196 = vmatprep.subr.mxu0 0.0
        %1197 = vmatpush1.xpose.msra.mxu0 0.0
        %1198 = vmatprep.subr.mxu0 0.0
        %1199 = vmatpush1.xpose.msra.mxu0 0.0
        %1200 = vmatprep.subr.mxu0 0.0
        %1201 = vmatpush1.xpose.msra.mxu0 0.0
        %1202 = vmatprep.subr.mxu0 0.0
        %1203 = vmatpush1.xpose.msra.mxu0 0.0
        %1204 = vmatprep.subr.mxu0 0.0
        %1205 = vmatpush1.xpose.msra.mxu0 0.0
        %1206 = vmatprep.subr.mxu0 0.0
        %1207 = vmatpush1.xpose.msra.mxu0 0.0
        %1208 = vmatprep.mubr.f32.mxu0 0.0
        %1209 = vmatmul.mubr.f32.gmra.mrb[0].mxu0 %v1140
        %v1210 = vpop.f32.mrb[0].mxu0
        %v1211 = vadd.f32 0.0, %v1210
        %v1212 = vpop.f32.mrb[0].mxu0
        %1213 = vdwg.mxu0
        %1214 = vrot.lane.b32.xlu0 %v959, 96
        %v1215 = vpop.permute.xlu0 %1214
        %v1217 = vsel %vm984, %v977, 0
        %v1219 = vsel %vm984, %v1215, 0
        %1221 = vmatprep.subr.mxu0 0.0
        %1222 = vmatpush1.xpose.msra.mxu0 %v1219
        %1223 = vmatprep.subr.mxu0 0.0
        %1224 = vmatpush1.xpose.msra.mxu0 0.0
        %1225 = vmatprep.subr.mxu0 0.0
        %1226 = vmatpush1.xpose.msra.mxu0 0.0
        %1227 = vmatprep.subr.mxu0 0.0
        %1228 = vmatpush1.xpose.msra.mxu0 0.0
        %1229 = vmatprep.subr.mxu0 0.0
        %1230 = vmatpush1.xpose.msra.mxu0 0.0
        %1231 = vmatprep.subr.mxu0 0.0
        %1232 = vmatpush1.xpose.msra.mxu0 0.0
        %1233 = vmatprep.subr.mxu0 0.0
        %1234 = vmatpush1.xpose.msra.mxu0 0.0
        %1235 = vmatprep.subr.mxu0 0.0
        %1236 = vmatpush1.xpose.msra.mxu0 0.0
        %1237 = vmatprep.subr.mxu0 0.0
        %1238 = vmatpush1.xpose.msra.mxu0 0.0
        %1239 = vmatprep.subr.mxu0 0.0
        %1240 = vmatpush1.xpose.msra.mxu0 0.0
        %1241 = vmatprep.subr.mxu0 0.0
        %1242 = vmatpush1.xpose.msra.mxu0 0.0
        %1243 = vmatprep.subr.mxu0 0.0
        %1244 = vmatpush1.xpose.msra.mxu0 0.0
        %1245 = vmatprep.subr.mxu0 0.0
        %1246 = vmatpush1.xpose.msra.mxu0 0.0
        %1247 = vmatprep.subr.mxu0 0.0
        %1248 = vmatpush1.xpose.msra.mxu0 0.0
        %1249 = vmatprep.subr.mxu0 0.0
        %1250 = vmatpush1.xpose.msra.mxu0 0.0
        %1251 = vmatprep.subr.mxu0 0.0
        %1252 = vmatpush1.xpose.msra.mxu0 0.0
        %1253 = vmatprep.subr.mxu0 0.0
        %1254 = vmatpush1.xpose.msra.mxu0 0.0
        %1255 = vmatprep.subr.mxu0 0.0
        %1256 = vmatpush1.xpose.msra.mxu0 0.0
        %1257 = vmatprep.subr.mxu0 0.0
        %1258 = vmatpush1.xpose.msra.mxu0 0.0
        %1259 = vmatprep.subr.mxu0 0.0
        %1260 = vmatpush1.xpose.msra.mxu0 0.0
        %1261 = vmatprep.subr.mxu0 0.0
        %1262 = vmatpush1.xpose.msra.mxu0 0.0
        %1263 = vmatprep.subr.mxu0 0.0
        %1264 = vmatpush1.xpose.msra.mxu0 0.0
        %1265 = vmatprep.subr.mxu0 0.0
        %1266 = vmatpush1.xpose.msra.mxu0 0.0
        %1267 = vmatprep.subr.mxu0 0.0
        %1268 = vmatpush1.xpose.msra.mxu0 0.0
        %1269 = vmatprep.subr.mxu0 0.0
        %1270 = vmatpush1.xpose.msra.mxu0 0.0
        %1271 = vmatprep.subr.mxu0 0.0
        %1272 = vmatpush1.xpose.msra.mxu0 0.0
        %1273 = vmatprep.subr.mxu0 0.0
        %1274 = vmatpush1.xpose.msra.mxu0 0.0
        %1275 = vmatprep.subr.mxu0 0.0
        %1276 = vmatpush1.xpose.msra.mxu0 0.0
        %1277 = vmatprep.subr.mxu0 0.0
        %1278 = vmatpush1.xpose.msra.mxu0 0.0
        %1279 = vmatprep.subr.mxu0 0.0
        %1280 = vmatpush1.xpose.msra.mxu0 0.0
        %1281 = vmatprep.subr.mxu0 0.0
        %1282 = vmatpush1.xpose.msra.mxu0 0.0
        %1283 = vmatprep.subr.mxu0 0.0
        %1284 = vmatpush1.xpose.msra.mxu0 0.0
        %1285 = vmatprep.mubr.f32.mxu0 0.0
        %1286 = vmatmul.mubr.f32.gmra.mrb[0].mxu0 %v1217
        %v1287 = vpop.f32.mrb[0].mxu0
        %v1288 = vadd.f32 0.0, %v1287
        %v1289 = vpop.f32.mrb[0].mxu0
        %1290 = vdwg.mxu0
        %1291 = vrot.lane.b32.xlu0 %v963, 96
        %v1292 = vpop.permute.xlu0 %1291
        %v1294 = vsel %vm984, %v978, 0
        %v1296 = vsel %vm984, %v1292, 0
        %1298 = vmatprep.subr.mxu0 0.0
        %1299 = vmatpush1.xpose.msra.mxu0 %v1296
        %1300 = vmatprep.subr.mxu0 0.0
        %1301 = vmatpush1.xpose.msra.mxu0 0.0
        %1302 = vmatprep.subr.mxu0 0.0
        %1303 = vmatpush1.xpose.msra.mxu0 0.0
        %1304 = vmatprep.subr.mxu0 0.0
        %1305 = vmatpush1.xpose.msra.mxu0 0.0
        %1306 = vmatprep.subr.mxu0 0.0
        %1307 = vmatpush1.xpose.msra.mxu0 0.0
        %1308 = vmatprep.subr.mxu0 0.0
        %1309 = vmatpush1.xpose.msra.mxu0 0.0
        %1310 = vmatprep.subr.mxu0 0.0
        %1311 = vmatpush1.xpose.msra.mxu0 0.0
        %1312 = vmatprep.subr.mxu0 0.0
        %1313 = vmatpush1.xpose.msra.mxu0 0.0
        %1314 = vmatprep.subr.mxu0 0.0
        %1315 = vmatpush1.xpose.msra.mxu0 0.0
        %1316 = vmatprep.subr.mxu0 0.0
        %1317 = vmatpush1.xpose.msra.mxu0 0.0
        %1318 = vmatprep.subr.mxu0 0.0
        %1319 = vmatpush1.xpose.msra.mxu0 0.0
        %1320 = vmatprep.subr.mxu0 0.0
        %1321 = vmatpush1.xpose.msra.mxu0 0.0
        %1322 = vmatprep.subr.mxu0 0.0
        %1323 = vmatpush1.xpose.msra.mxu0 0.0
        %1324 = vmatprep.subr.mxu0 0.0
        %1325 = vmatpush1.xpose.msra.mxu0 0.0
        %1326 = vmatprep.subr.mxu0 0.0
        %1327 = vmatpush1.xpose.msra.mxu0 0.0
        %1328 = vmatprep.subr.mxu0 0.0
        %1329 = vmatpush1.xpose.msra.mxu0 0.0
        %1330 = vmatprep.subr.mxu0 0.0
        %1331 = vmatpush1.xpose.msra.mxu0 0.0
        %1332 = vmatprep.subr.mxu0 0.0
        %1333 = vmatpush1.xpose.msra.mxu0 0.0
        %1334 = vmatprep.subr.mxu0 0.0
        %1335 = vmatpush1.xpose.msra.mxu0 0.0
        %1336 = vmatprep.subr.mxu0 0.0
        %1337 = vmatpush1.xpose.msra.mxu0 0.0
        %1338 = vmatprep.subr.mxu0 0.0
        %1339 = vmatpush1.xpose.msra.mxu0 0.0
        %1340 = vmatprep.subr.mxu0 0.0
        %1341 = vmatpush1.xpose.msra.mxu0 0.0
        %1342 = vmatprep.subr.mxu0 0.0
        %1343 = vmatpush1.xpose.msra.mxu0 0.0
        %1344 = vmatprep.subr.mxu0 0.0
        %1345 = vmatpush1.xpose.msra.mxu0 0.0
        %1346 = vmatprep.subr.mxu0 0.0
        %1347 = vmatpush1.xpose.msra.mxu0 0.0
        %1348 = vmatprep.subr.mxu0 0.0
        %1349 = vmatpush1.xpose.msra.mxu0 0.0
        %1350 = vmatprep.subr.mxu0 0.0
        %1351 = vmatpush1.xpose.msra.mxu0 0.0
        %1352 = vmatprep.subr.mxu0 0.0
        %1353 = vmatpush1.xpose.msra.mxu0 0.0
        %1354 = vmatprep.subr.mxu0 0.0
        %1355 = vmatpush1.xpose.msra.mxu0 0.0
        %1356 = vmatprep.subr.mxu0 0.0
        %1357 = vmatpush1.xpose.msra.mxu0 0.0
        %1358 = vmatprep.subr.mxu0 0.0
        %1359 = vmatpush1.xpose.msra.mxu0 0.0
        %1360 = vmatprep.subr.mxu0 0.0
        %1361 = vmatpush1.xpose.msra.mxu0 0.0
        %1362 = vmatprep.mubr.f32.mxu0 0.0
        %1363 = vmatmul.mubr.f32.gmra.mrb[0].mxu0 %v1294
        %v1364 = vpop.f32.mrb[0].mxu0
        %v1365 = vadd.f32 0.0, %v1364
        %v1366 = vpop.f32.mrb[0].mxu0
        %1367 = vdwg.mxu0
        %1368 = vrot.lane.b32.xlu0 %v965, 96
        %v1369 = vpop.permute.xlu0 %1368
        %v1371 = vsel %vm984, %v979, 0
        %v1373 = vsel %vm984, %v1369, 0
        %1375 = vmatprep.subr.mxu0 0.0
        %1376 = vmatpush1.xpose.msra.mxu0 %v1373
        %1377 = vmatprep.subr.mxu0 0.0
        %1378 = vmatpush1.xpose.msra.mxu0 0.0
        %1379 = vmatprep.subr.mxu0 0.0
        %1380 = vmatpush1.xpose.msra.mxu0 0.0
        %1381 = vmatprep.subr.mxu0 0.0
        %1382 = vmatpush1.xpose.msra.mxu0 0.0
        %1383 = vmatprep.subr.mxu0 0.0
        %1384 = vmatpush1.xpose.msra.mxu0 0.0
        %1385 = vmatprep.subr.mxu0 0.0
        %1386 = vmatpush1.xpose.msra.mxu0 0.0
        %1387 = vmatprep.subr.mxu0 0.0
        %1388 = vmatpush1.xpose.msra.mxu0 0.0
        %1389 = vmatprep.subr.mxu0 0.0
        %1390 = vmatpush1.xpose.msra.mxu0 0.0
        %1391 = vmatprep.subr.mxu0 0.0
        %1392 = vmatpush1.xpose.msra.mxu0 0.0
        %1393 = vmatprep.subr.mxu0 0.0
        %1394 = vmatpush1.xpose.msra.mxu0 0.0
        %1395 = vmatprep.subr.mxu0 0.0
        %1396 = vmatpush1.xpose.msra.mxu0 0.0
        %1397 = vmatprep.subr.mxu0 0.0
        %1398 = vmatpush1.xpose.msra.mxu0 0.0
        %1399 = vmatprep.subr.mxu0 0.0
        %1400 = vmatpush1.xpose.msra.mxu0 0.0
        %1401 = vmatprep.subr.mxu0 0.0
        %1402 = vmatpush1.xpose.msra.mxu0 0.0
        %1403 = vmatprep.subr.mxu0 0.0
        %1404 = vmatpush1.xpose.msra.mxu0 0.0
        %1405 = vmatprep.subr.mxu0 0.0
        %1406 = vmatpush1.xpose.msra.mxu0 0.0
        %1407 = vmatprep.subr.mxu0 0.0
        %1408 = vmatpush1.xpose.msra.mxu0 0.0
        %1409 = vmatprep.subr.mxu0 0.0
        %1410 = vmatpush1.xpose.msra.mxu0 0.0
        %1411 = vmatprep.subr.mxu0 0.0
        %1412 = vmatpush1.xpose.msra.mxu0 0.0
        %1413 = vmatprep.subr.mxu0 0.0
        %1414 = vmatpush1.xpose.msra.mxu0 0.0
        %1415 = vmatprep.subr.mxu0 0.0
        %1416 = vmatpush1.xpose.msra.mxu0 0.0
        %1417 = vmatprep.subr.mxu0 0.0
        %1418 = vmatpush1.xpose.msra.mxu0 0.0
        %1419 = vmatprep.subr.mxu0 0.0
        %1420 = vmatpush1.xpose.msra.mxu0 0.0
        %1421 = vmatprep.subr.mxu0 0.0
        %1422 = vmatpush1.xpose.msra.mxu0 0.0
        %1423 = vmatprep.subr.mxu0 0.0
        %1424 = vmatpush1.xpose.msra.mxu0 0.0
        %1425 = vmatprep.subr.mxu0 0.0
        %1426 = vmatpush1.xpose.msra.mxu0 0.0
        %1427 = vmatprep.subr.mxu0 0.0
        %1428 = vmatpush1.xpose.msra.mxu0 0.0
        %1429 = vmatprep.subr.mxu0 0.0
        %1430 = vmatpush1.xpose.msra.mxu0 0.0
        %1431 = vmatprep.subr.mxu0 0.0
        %1432 = vmatpush1.xpose.msra.mxu0 0.0
        %1433 = vmatprep.subr.mxu0 0.0
        %1434 = vmatpush1.xpose.msra.mxu0 0.0
        %1435 = vmatprep.subr.mxu0 0.0
        %1436 = vmatpush1.xpose.msra.mxu0 0.0
        %1437 = vmatprep.subr.mxu0 0.0
        %1438 = vmatpush1.xpose.msra.mxu0 0.0
        %1439 = vmatprep.mubr.f32.mxu0 0.0
        %1440 = vmatmul.mubr.f32.gmra.mrb[0].mxu0 %v1371
        %v1441 = vpop.f32.mrb[0].mxu0
        %v1442 = vadd.f32 0.0, %v1441
        %v1443 = vpop.f32.mrb[0].mxu0
        %1444 = vdwg.mxu0
        %1445 = vrot.lane.b32.xlu0 %v969, 96
        %v1446 = vpop.permute.xlu0 %1445
        %v1448 = vsel %vm984, %v980, 0
        %v1450 = vsel %vm984, %v1446, 0
        %1452 = vmatprep.subr.mxu0 0.0
        %1453 = vmatpush1.xpose.msra.mxu0 %v1450
        %1454 = vmatprep.subr.mxu0 0.0
        %1455 = vmatpush1.xpose.msra.mxu0 0.0
        %1456 = vmatprep.subr.mxu0 0.0
        %1457 = vmatpush1.xpose.msra.mxu0 0.0
        %1458 = vmatprep.subr.mxu0 0.0
        %1459 = vmatpush1.xpose.msra.mxu0 0.0
        %1460 = vmatprep.subr.mxu0 0.0
        %1461 = vmatpush1.xpose.msra.mxu0 0.0
        %1462 = vmatprep.subr.mxu0 0.0
        %1463 = vmatpush1.xpose.msra.mxu0 0.0
        %1464 = vmatprep.subr.mxu0 0.0
        %1465 = vmatpush1.xpose.msra.mxu0 0.0
        %1466 = vmatprep.subr.mxu0 0.0
        %1467 = vmatpush1.xpose.msra.mxu0 0.0
        %1468 = vmatprep.subr.mxu0 0.0
        %1469 = vmatpush1.xpose.msra.mxu0 0.0
        %1470 = vmatprep.subr.mxu0 0.0
        %1471 = vmatpush1.xpose.msra.mxu0 0.0
        %1472 = vmatprep.subr.mxu0 0.0
        %1473 = vmatpush1.xpose.msra.mxu0 0.0
        %1474 = vmatprep.subr.mxu0 0.0
        %1475 = vmatpush1.xpose.msra.mxu0 0.0
        %1476 = vmatprep.subr.mxu0 0.0
        %1477 = vmatpush1.xpose.msra.mxu0 0.0
        %1478 = vmatprep.subr.mxu0 0.0
        %1479 = vmatpush1.xpose.msra.mxu0 0.0
        %1480 = vmatprep.subr.mxu0 0.0
        %1481 = vmatpush1.xpose.msra.mxu0 0.0
        %1482 = vmatprep.subr.mxu0 0.0
        %1483 = vmatpush1.xpose.msra.mxu0 0.0
        %1484 = vmatprep.subr.mxu0 0.0
        %1485 = vmatpush1.xpose.msra.mxu0 0.0
        %1486 = vmatprep.subr.mxu0 0.0
        %1487 = vmatpush1.xpose.msra.mxu0 0.0
        %1488 = vmatprep.subr.mxu0 0.0
        %1489 = vmatpush1.xpose.msra.mxu0 0.0
        %1490 = vmatprep.subr.mxu0 0.0
        %1491 = vmatpush1.xpose.msra.mxu0 0.0
        %1492 = vmatprep.subr.mxu0 0.0
        %1493 = vmatpush1.xpose.msra.mxu0 0.0
        %1494 = vmatprep.subr.mxu0 0.0
        %1495 = vmatpush1.xpose.msra.mxu0 0.0
        %1496 = vmatprep.subr.mxu0 0.0
        %1497 = vmatpush1.xpose.msra.mxu0 0.0
        %1498 = vmatprep.subr.mxu0 0.0
        %1499 = vmatpush1.xpose.msra.mxu0 0.0
        %1500 = vmatprep.subr.mxu0 0.0
        %1501 = vmatpush1.xpose.msra.mxu0 0.0
        %1502 = vmatprep.subr.mxu0 0.0
        %1503 = vmatpush1.xpose.msra.mxu0 0.0
        %1504 = vmatprep.subr.mxu0 0.0
        %1505 = vmatpush1.xpose.msra.mxu0 0.0
        %1506 = vmatprep.subr.mxu0 0.0
        %1507 = vmatpush1.xpose.msra.mxu0 0.0
        %1508 = vmatprep.subr.mxu0 0.0
        %1509 = vmatpush1.xpose.msra.mxu0 0.0
        %1510 = vmatprep.subr.mxu0 0.0
        %1511 = vmatpush1.xpose.msra.mxu0 0.0
        %1512 = vmatprep.subr.mxu0 0.0
        %1513 = vmatpush1.xpose.msra.mxu0 0.0
        %1514 = vmatprep.subr.mxu0 0.0
        %1515 = vmatpush1.xpose.msra.mxu0 0.0
        %1516 = vmatprep.mubr.f32.mxu0 0.0
        %1517 = vmatmul.mubr.f32.gmra.mrb[0].mxu0 %v1448
        %v1518 = vpop.f32.mrb[0].mxu0
        %v1519 = vadd.f32 0.0, %v1518
        %v1520 = vpop.f32.mrb[0].mxu0
        %1521 = vdwg.mxu0
        %1522 = vrot.lane.b32.xlu0 %v971, 96
        %v1523 = vpop.permute.xlu0 %1522
        %v1525 = vsel %vm984, %v981, 0
        %v1527 = vsel %vm984, %v1523, 0
        %1529 = vmatprep.subr.mxu0 0.0
        %1530 = vmatpush1.xpose.msra.mxu0 %v1527
        %1531 = vmatprep.subr.mxu0 0.0
        %1532 = vmatpush1.xpose.msra.mxu0 0.0
        %1533 = vmatprep.subr.mxu0 0.0
        %1534 = vmatpush1.xpose.msra.mxu0 0.0
        %1535 = vmatprep.subr.mxu0 0.0
        %1536 = vmatpush1.xpose.msra.mxu0 0.0
        %1537 = vmatprep.subr.mxu0 0.0
        %1538 = vmatpush1.xpose.msra.mxu0 0.0
        %1539 = vmatprep.subr.mxu0 0.0
        %1540 = vmatpush1.xpose.msra.mxu0 0.0
        %1541 = vmatprep.subr.mxu0 0.0
        %1542 = vmatpush1.xpose.msra.mxu0 0.0
        %1543 = vmatprep.subr.mxu0 0.0
        %1544 = vmatpush1.xpose.msra.mxu0 0.0
        %1545 = vmatprep.subr.mxu0 0.0
        %1546 = vmatpush1.xpose.msra.mxu0 0.0
        %1547 = vmatprep.subr.mxu0 0.0
        %1548 = vmatpush1.xpose.msra.mxu0 0.0
        %1549 = vmatprep.subr.mxu0 0.0
        %1550 = vmatpush1.xpose.msra.mxu0 0.0
        %1551 = vmatprep.subr.mxu0 0.0
        %1552 = vmatpush1.xpose.msra.mxu0 0.0
        %1553 = vmatprep.subr.mxu0 0.0
        %1554 = vmatpush1.xpose.msra.mxu0 0.0
        %1555 = vmatprep.subr.mxu0 0.0
        %1556 = vmatpush1.xpose.msra.mxu0 0.0
        %1557 = vmatprep.subr.mxu0 0.0
        %1558 = vmatpush1.xpose.msra.mxu0 0.0
        %1559 = vmatprep.subr.mxu0 0.0
        %1560 = vmatpush1.xpose.msra.mxu0 0.0
        %1561 = vmatprep.subr.mxu0 0.0
        %1562 = vmatpush1.xpose.msra.mxu0 0.0
        %1563 = vmatprep.subr.mxu0 0.0
        %1564 = vmatpush1.xpose.msra.mxu0 0.0
        %1565 = vmatprep.subr.mxu0 0.0
        %1566 = vmatpush1.xpose.msra.mxu0 0.0
        %1567 = vmatprep.subr.mxu0 0.0
        %1568 = vmatpush1.xpose.msra.mxu0 0.0
        %1569 = vmatprep.subr.mxu0 0.0
        %1570 = vmatpush1.xpose.msra.mxu0 0.0
        %1571 = vmatprep.subr.mxu0 0.0
        %1572 = vmatpush1.xpose.msra.mxu0 0.0
        %1573 = vmatprep.subr.mxu0 0.0
        %1574 = vmatpush1.xpose.msra.mxu0 0.0
        %1575 = vmatprep.subr.mxu0 0.0
        %1576 = vmatpush1.xpose.msra.mxu0 0.0
        %1577 = vmatprep.subr.mxu0 0.0
        %1578 = vmatpush1.xpose.msra.mxu0 0.0
        %1579 = vmatprep.subr.mxu0 0.0
        %1580 = vmatpush1.xpose.msra.mxu0 0.0
        %1581 = vmatprep.subr.mxu0 0.0
        %1582 = vmatpush1.xpose.msra.mxu0 0.0
        %1583 = vmatprep.subr.mxu0 0.0
        %1584 = vmatpush1.xpose.msra.mxu0 0.0
        %1585 = vmatprep.subr.mxu0 0.0
        %1586 = vmatpush1.xpose.msra.mxu0 0.0
        %1587 = vmatprep.subr.mxu0 0.0
        %1588 = vmatpush1.xpose.msra.mxu0 0.0
        %1589 = vmatprep.subr.mxu0 0.0
        %1590 = vmatpush1.xpose.msra.mxu0 0.0
        %1591 = vmatprep.subr.mxu0 0.0
        %1592 = vmatpush1.xpose.msra.mxu0 0.0
        %1593 = vmatprep.mubr.f32.mxu0 0.0
        %1594 = vmatmul.mubr.f32.gmra.mrb[0].mxu0 %v1525
        %v1595 = vpop.f32.mrb[0].mxu0
        %v1596 = vadd.f32 0.0, %v1595
        %v1597 = vpop.f32.mrb[0].mxu0
        %1598 = vdwg.mxu0
        %v1599 = vsel %vm984, %v1057, -inf
        %1600 = vmax.xlane.f32.xlu0 %v1599
        %v1601 = vpop.xlane.xlu0 %1600
        %v1602 = vsel %vm984, %v1134, -inf
        %1603 = vmax.xlane.f32.xlu0 %v1602
        %v1604 = vpop.xlane.xlu0 %1603
        %v1605 = vsel %vm984, %v1211, -inf
        %1606 = vmax.xlane.f32.xlu0 %v1605
        %v1607 = vpop.xlane.xlu0 %1606
        %v1608 = vsel %vm984, %v1288, -inf
        %1609 = vmax.xlane.f32.xlu0 %v1608
        %v1610 = vpop.xlane.xlu0 %1609
        %v1611 = vsel %vm984, %v1365, -inf
        %1612 = vmax.xlane.f32.xlu0 %v1611
        %v1613 = vpop.xlane.xlu0 %1612
        %v1614 = vsel %vm984, %v1442, -inf
        %1615 = vmax.xlane.f32.xlu0 %v1614
        %v1616 = vpop.xlane.xlu0 %1615
        %v1617 = vsel %vm984, %v1519, -inf
        %1618 = vmax.xlane.f32.xlu0 %v1617
        %v1619 = vpop.xlane.xlu0 %1618
        %v1620 = vsel %vm984, %v1596, -inf
        %1621 = vmax.xlane.f32.xlu0 %v1620
        %v1622 = vpop.xlane.xlu0 %1621
        %v1623 = vsub.f32 %v1057, %v1601
        %v1624 = vsub.f32 %v1134, %v1604
        %v1625 = vsub.f32 %v1211, %v1607
        %v1626 = vsub.f32 %v1288, %v1610
        %v1627 = vsub.f32 %v1365, %v1613
        %v1628 = vsub.f32 %v1442, %v1616
        %v1629 = vsub.f32 %v1519, %v1619
        %v1630 = vsub.f32 %v1596, %v1622
        %v1631 = vmul.f32 %v1623, 1.442695
        %v1632 = vpow.pop %v1631
        %v1633 = vmul.f32 %v1624, 1.442695
        %v1634 = vpow.pop %v1633
        %v1635 = vmul.f32 %v1625, 1.442695
        %v1636 = vpow.pop %v1635
        %v1637 = vmul.f32 %v1626, 1.442695
        %v1638 = vpow.pop %v1637
        %v1639 = vmul.f32 %v1627, 1.442695
        %v1640 = vpow.pop %v1639
        %v1641 = vmul.f32 %v1628, 1.442695
        %v1642 = vpow.pop %v1641
        %v1643 = vmul.f32 %v1629, 1.442695
        %v1644 = vpow.pop %v1643
        %v1645 = vmul.f32 %v1630, 1.442695
        %v1646 = vpow.pop %v1645
        %v1647 = vsel %vm984, %v1632, 0.0
        %1648 = vadd.xlane.f32.xlu0 %v1647
        %v1649 = vpop.xlane.xlu0 %1648
        %v1650 = vsel %vm984, %v1634, 0.0
        %1651 = vadd.xlane.f32.xlu0 %v1650
        %v1652 = vpop.xlane.xlu0 %1651
        %v1653 = vsel %vm984, %v1636, 0.0
        %1654 = vadd.xlane.f32.xlu0 %v1653
        %v1655 = vpop.xlane.xlu0 %1654
        %v1656 = vsel %vm984, %v1638, 0.0
        %1657 = vadd.xlane.f32.xlu0 %v1656
        %v1658 = vpop.xlane.xlu0 %1657
        %v1659 = vsel %vm984, %v1640, 0.0
        %1660 = vadd.xlane.f32.xlu0 %v1659
        %v1661 = vpop.xlane.xlu0 %1660
        %v1662 = vsel %vm984, %v1642, 0.0
        %1663 = vadd.xlane.f32.xlu0 %v1662
        %v1664 = vpop.xlane.xlu0 %1663
        %v1665 = vsel %vm984, %v1644, 0.0
        %1666 = vadd.xlane.f32.xlu0 %v1665
        %v1667 = vpop.xlane.xlu0 %1666
        %v1668 = vsel %vm984, %v1646, 0.0
        %1669 = vadd.xlane.f32.xlu0 %v1668
        %v1670 = vpop.xlane.xlu0 %1669
        %v1671 = vrcp.pop %v1649
        %v1672 = vrcp.pop %v1652
        %v1673 = vrcp.pop %v1655
        %v1674 = vrcp.pop %v1658
        %v1675 = vrcp.pop %v1661
        %v1676 = vrcp.pop %v1664
        %v1677 = vrcp.pop %v1667
        %v1678 = vrcp.pop %v1670
        %v1679 = vmul.f32 %v1632, %v1671
        %v1680 = vmul.f32 %v1634, %v1672
        %v1681 = vmul.f32 %v1636, %v1673
        %v1682 = vmul.f32 %v1638, %v1674
        %v1683 = vmul.f32 %v1640, %v1675
        %v1684 = vmul.f32 %v1642, %v1676
        %v1685 = vmul.f32 %v1644, %v1677
        %v1686 = vmul.f32 %v1646, %v1678
        %1687 = vrot.lane.b32.xlu0 %v941, 64
        %v1688 = vpop.permute.xlu0 %1687
        %v1691 = vsel %vm984, %v1679, 0
        %1693 = vmatprep.subr.mxu0 0.0
        %1694 = vmatpush1.msra.mxu0 %v1688
        %1695 = vmatprep.subr.mxu0 0.0
        %1696 = vmatpush1.msra.mxu0 0.0
        %1697 = vmatprep.subr.mxu0 0.0
        %1698 = vmatpush1.msra.mxu0 0.0
        %1699 = vmatprep.subr.mxu0 0.0
        %1700 = vmatpush1.msra.mxu0 0.0
        %1701 = vmatprep.subr.mxu0 0.0
        %1702 = vmatpush1.msra.mxu0 0.0
        %1703 = vmatprep.subr.mxu0 0.0
        %1704 = vmatpush1.msra.mxu0 0.0
        %1705 = vmatprep.subr.mxu0 0.0
        %1706 = vmatpush1.msra.mxu0 0.0
        %1707 = vmatprep.subr.mxu0 0.0
        %1708 = vmatpush1.msra.mxu0 0.0
        %1709 = vmatprep.subr.mxu0 0.0
        %1710 = vmatpush1.msra.mxu0 0.0
        %1711 = vmatprep.subr.mxu0 0.0
        %1712 = vmatpush1.msra.mxu0 0.0
        %1713 = vmatprep.subr.mxu0 0.0
        %1714 = vmatpush1.msra.mxu0 0.0
        %1715 = vmatprep.subr.mxu0 0.0
        %1716 = vmatpush1.msra.mxu0 0.0
        %1717 = vmatprep.subr.mxu0 0.0
        %1718 = vmatpush1.msra.mxu0 0.0
        %1719 = vmatprep.subr.mxu0 0.0
        %1720 = vmatpush1.msra.mxu0 0.0
        %1721 = vmatprep.subr.mxu0 0.0
        %1722 = vmatpush1.msra.mxu0 0.0
        %1723 = vmatprep.subr.mxu0 0.0
        %1724 = vmatpush1.msra.mxu0 0.0
        %1725 = vmatprep.subr.mxu0 0.0
        %1726 = vmatpush1.msra.mxu0 0.0
        %1727 = vmatprep.subr.mxu0 0.0
        %1728 = vmatpush1.msra.mxu0 0.0
        %1729 = vmatprep.subr.mxu0 0.0
        %1730 = vmatpush1.msra.mxu0 0.0
        %1731 = vmatprep.subr.mxu0 0.0
        %1732 = vmatpush1.msra.mxu0 0.0
        %1733 = vmatprep.subr.mxu0 0.0
        %1734 = vmatpush1.msra.mxu0 0.0
        %1735 = vmatprep.subr.mxu0 0.0
        %1736 = vmatpush1.msra.mxu0 0.0
        %1737 = vmatprep.subr.mxu0 0.0
        %1738 = vmatpush1.msra.mxu0 0.0
        %1739 = vmatprep.subr.mxu0 0.0
        %1740 = vmatpush1.msra.mxu0 0.0
        %1741 = vmatprep.subr.mxu0 0.0
        %1742 = vmatpush1.msra.mxu0 0.0
        %1743 = vmatprep.subr.mxu0 0.0
        %1744 = vmatpush1.msra.mxu0 0.0
        %1745 = vmatprep.subr.mxu0 0.0
        %1746 = vmatpush1.msra.mxu0 0.0
        %1747 = vmatprep.subr.mxu0 0.0
        %1748 = vmatpush1.msra.mxu0 0.0
        %1749 = vmatprep.subr.mxu0 0.0
        %1750 = vmatpush1.msra.mxu0 0.0
        %1751 = vmatprep.subr.mxu0 0.0
        %1752 = vmatpush1.msra.mxu0 0.0
        %1753 = vmatprep.subr.mxu0 0.0
        %1754 = vmatpush1.msra.mxu0 0.0
        %1755 = vmatprep.subr.mxu0 0.0
        %1756 = vmatpush1.msra.mxu0 0.0
        %1757 = vmatprep.mubr.f32.mxu0 0.0
        %1758 = vmatmul.mubr.f32.gmra.mrb[0].mxu0 %v1691
        %v1759 = vpop.f32.mrb[0].mxu0
        %v1760 = vadd.f32 0.0, %v1759
        %v1761 = vpop.f32.mrb[0].mxu0
        %1762 = vdwg.mxu0
        %1763 = vrot.lane.b32.xlu0 %v946, 64
        %v1764 = vpop.permute.xlu0 %1763
        %v1767 = vsel %vm984, %v1680, 0
        %1769 = vmatprep.subr.mxu0 0.0
        %1770 = vmatpush1.msra.mxu0 %v1764
        %1771 = vmatprep.subr.mxu0 0.0
        %1772 = vmatpush1.msra.mxu0 0.0
        %1773 = vmatprep.subr.mxu0 0.0
        %1774 = vmatpush1.msra.mxu0 0.0
        %1775 = vmatprep.subr.mxu0 0.0
        %1776 = vmatpush1.msra.mxu0 0.0
        %1777 = vmatprep.subr.mxu0 0.0
        %1778 = vmatpush1.msra.mxu0 0.0
        %1779 = vmatprep.subr.mxu0 0.0
        %1780 = vmatpush1.msra.mxu0 0.0
        %1781 = vmatprep.subr.mxu0 0.0
        %1782 = vmatpush1.msra.mxu0 0.0
        %1783 = vmatprep.subr.mxu0 0.0
        %1784 = vmatpush1.msra.mxu0 0.0
        %1785 = vmatprep.subr.mxu0 0.0
        %1786 = vmatpush1.msra.mxu0 0.0
        %1787 = vmatprep.subr.mxu0 0.0
        %1788 = vmatpush1.msra.mxu0 0.0
        %1789 = vmatprep.subr.mxu0 0.0
        %1790 = vmatpush1.msra.mxu0 0.0
        %1791 = vmatprep.subr.mxu0 0.0
        %1792 = vmatpush1.msra.mxu0 0.0
        %1793 = vmatprep.subr.mxu0 0.0
        %1794 = vmatpush1.msra.mxu0 0.0
        %1795 = vmatprep.subr.mxu0 0.0
        %1796 = vmatpush1.msra.mxu0 0.0
        %1797 = vmatprep.subr.mxu0 0.0
        %1798 = vmatpush1.msra.mxu0 0.0
        %1799 = vmatprep.subr.mxu0 0.0
        %1800 = vmatpush1.msra.mxu0 0.0
        %1801 = vmatprep.subr.mxu0 0.0
        %1802 = vmatpush1.msra.mxu0 0.0
        %1803 = vmatprep.subr.mxu0 0.0
        %1804 = vmatpush1.msra.mxu0 0.0
        %1805 = vmatprep.subr.mxu0 0.0
        %1806 = vmatpush1.msra.mxu0 0.0
        %1807 = vmatprep.subr.mxu0 0.0
        %1808 = vmatpush1.msra.mxu0 0.0
        %1809 = vmatprep.subr.mxu0 0.0
        %1810 = vmatpush1.msra.mxu0 0.0
        %1811 = vmatprep.subr.mxu0 0.0
        %1812 = vmatpush1.msra.mxu0 0.0
        %1813 = vmatprep.subr.mxu0 0.0
        %1814 = vmatpush1.msra.mxu0 0.0
        %1815 = vmatprep.subr.mxu0 0.0
        %1816 = vmatpush1.msra.mxu0 0.0
        %1817 = vmatprep.subr.mxu0 0.0
        %1818 = vmatpush1.msra.mxu0 0.0
        %1819 = vmatprep.subr.mxu0 0.0
        %1820 = vmatpush1.msra.mxu0 0.0
        %1821 = vmatprep.subr.mxu0 0.0
        %1822 = vmatpush1.msra.mxu0 0.0
        %1823 = vmatprep.subr.mxu0 0.0
        %1824 = vmatpush1.msra.mxu0 0.0
        %1825 = vmatprep.subr.mxu0 0.0
        %1826 = vmatpush1.msra.mxu0 0.0
        %1827 = vmatprep.subr.mxu0 0.0
        %1828 = vmatpush1.msra.mxu0 0.0
        %1829 = vmatprep.subr.mxu0 0.0
        %1830 = vmatpush1.msra.mxu0 0.0
        %1831 = vmatprep.subr.mxu0 0.0
        %1832 = vmatpush1.msra.mxu0 0.0
        %1833 = vmatprep.mubr.f32.mxu0 0.0
        %1834 = vmatmul.mubr.f32.gmra.mrb[0].mxu0 %v1767
        %v1835 = vpop.f32.mrb[0].mxu0
        %v1836 = vadd.f32 0.0, %v1835
        %v1837 = vpop.f32.mrb[0].mxu0
        %1838 = vdwg.mxu0
        %1839 = vrot.lane.b32.xlu0 %v957, 64
        %v1840 = vpop.permute.xlu0 %1839
        %v1843 = vsel %vm984, %v1681, 0
        %1845 = vmatprep.subr.mxu0 0.0
        %1846 = vmatpush1.msra.mxu0 %v1840
        %1847 = vmatprep.subr.mxu0 0.0
        %1848 = vmatpush1.msra.mxu0 0.0
        %1849 = vmatprep.subr.mxu0 0.0
        %1850 = vmatpush1.msra.mxu0 0.0
        %1851 = vmatprep.subr.mxu0 0.0
        %1852 = vmatpush1.msra.mxu0 0.0
        %1853 = vmatprep.subr.mxu0 0.0
        %1854 = vmatpush1.msra.mxu0 0.0
        %1855 = vmatprep.subr.mxu0 0.0
        %1856 = vmatpush1.msra.mxu0 0.0
        %1857 = vmatprep.subr.mxu0 0.0
        %1858 = vmatpush1.msra.mxu0 0.0
        %1859 = vmatprep.subr.mxu0 0.0
        %1860 = vmatpush1.msra.mxu0 0.0
        %1861 = vmatprep.subr.mxu0 0.0
        %1862 = vmatpush1.msra.mxu0 0.0
        %1863 = vmatprep.subr.mxu0 0.0
        %1864 = vmatpush1.msra.mxu0 0.0
        %1865 = vmatprep.subr.mxu0 0.0
        %1866 = vmatpush1.msra.mxu0 0.0
        %1867 = vmatprep.subr.mxu0 0.0
        %1868 = vmatpush1.msra.mxu0 0.0
        %1869 = vmatprep.subr.mxu0 0.0
        %1870 = vmatpush1.msra.mxu0 0.0
        %1871 = vmatprep.subr.mxu0 0.0
        %1872 = vmatpush1.msra.mxu0 0.0
        %1873 = vmatprep.subr.mxu0 0.0
        %1874 = vmatpush1.msra.mxu0 0.0
        %1875 = vmatprep.subr.mxu0 0.0
        %1876 = vmatpush1.msra.mxu0 0.0
        %1877 = vmatprep.subr.mxu0 0.0
        %1878 = vmatpush1.msra.mxu0 0.0
        %1879 = vmatprep.subr.mxu0 0.0
        %1880 = vmatpush1.msra.mxu0 0.0
        %1881 = vmatprep.subr.mxu0 0.0
        %1882 = vmatpush1.msra.mxu0 0.0
        %1883 = vmatprep.subr.mxu0 0.0
        %1884 = vmatpush1.msra.mxu0 0.0
        %1885 = vmatprep.subr.mxu0 0.0
        %1886 = vmatpush1.msra.mxu0 0.0
        %1887 = vmatprep.subr.mxu0 0.0
        %1888 = vmatpush1.msra.mxu0 0.0
        %1889 = vmatprep.subr.mxu0 0.0
        %1890 = vmatpush1.msra.mxu0 0.0
        %1891 = vmatprep.subr.mxu0 0.0
        %1892 = vmatpush1.msra.mxu0 0.0
        %1893 = vmatprep.subr.mxu0 0.0
        %1894 = vmatpush1.msra.mxu0 0.0
        %1895 = vmatprep.subr.mxu0 0.0
        %1896 = vmatpush1.msra.mxu0 0.0
        %1897 = vmatprep.subr.mxu0 0.0
        %1898 = vmatpush1.msra.mxu0 0.0
        %1899 = vmatprep.subr.mxu0 0.0
        %1900 = vmatpush1.msra.mxu0 0.0
        %1901 = vmatprep.subr.mxu0 0.0
        %1902 = vmatpush1.msra.mxu0 0.0
        %1903 = vmatprep.subr.mxu0 0.0
        %1904 = vmatpush1.msra.mxu0 0.0
        %1905 = vmatprep.subr.mxu0 0.0
        %1906 = vmatpush1.msra.mxu0 0.0
        %1907 = vmatprep.subr.mxu0 0.0
        %1908 = vmatpush1.msra.mxu0 0.0
        %1909 = vmatprep.mubr.f32.mxu0 0.0
        %1910 = vmatmul.mubr.f32.gmra.mrb[0].mxu0 %v1843
        %v1911 = vpop.f32.mrb[0].mxu0
        %v1912 = vadd.f32 0.0, %v1911
        %v1913 = vpop.f32.mrb[0].mxu0
        %1914 = vdwg.mxu0
        %1915 = vrot.lane.b32.xlu0 %v959, 64
        %v1916 = vpop.permute.xlu0 %1915
        %v1919 = vsel %vm984, %v1682, 0
        %1921 = vmatprep.subr.mxu0 0.0
        %1922 = vmatpush1.msra.mxu0 %v1916
        %1923 = vmatprep.subr.mxu0 0.0
        %1924 = vmatpush1.msra.mxu0 0.0
        %1925 = vmatprep.subr.mxu0 0.0
        %1926 = vmatpush1.msra.mxu0 0.0
        %1927 = vmatprep.subr.mxu0 0.0
        %1928 = vmatpush1.msra.mxu0 0.0
        %1929 = vmatprep.subr.mxu0 0.0
        %1930 = vmatpush1.msra.mxu0 0.0
        %1931 = vmatprep.subr.mxu0 0.0
        %1932 = vmatpush1.msra.mxu0 0.0
        %1933 = vmatprep.subr.mxu0 0.0
        %1934 = vmatpush1.msra.mxu0 0.0
        %1935 = vmatprep.subr.mxu0 0.0
        %1936 = vmatpush1.msra.mxu0 0.0
        %1937 = vmatprep.subr.mxu0 0.0
        %1938 = vmatpush1.msra.mxu0 0.0
        %1939 = vmatprep.subr.mxu0 0.0
        %1940 = vmatpush1.msra.mxu0 0.0
        %1941 = vmatprep.subr.mxu0 0.0
        %1942 = vmatpush1.msra.mxu0 0.0
        %1943 = vmatprep.subr.mxu0 0.0
        %1944 = vmatpush1.msra.mxu0 0.0
        %1945 = vmatprep.subr.mxu0 0.0
        %1946 = vmatpush1.msra.mxu0 0.0
        %1947 = vmatprep.subr.mxu0 0.0
        %1948 = vmatpush1.msra.mxu0 0.0
        %1949 = vmatprep.subr.mxu0 0.0
        %1950 = vmatpush1.msra.mxu0 0.0
        %1951 = vmatprep.subr.mxu0 0.0
        %1952 = vmatpush1.msra.mxu0 0.0
        %1953 = vmatprep.subr.mxu0 0.0
        %1954 = vmatpush1.msra.mxu0 0.0
        %1955 = vmatprep.subr.mxu0 0.0
        %1956 = vmatpush1.msra.mxu0 0.0
        %1957 = vmatprep.subr.mxu0 0.0
        %1958 = vmatpush1.msra.mxu0 0.0
        %1959 = vmatprep.subr.mxu0 0.0
        %1960 = vmatpush1.msra.mxu0 0.0
        %1961 = vmatprep.subr.mxu0 0.0
        %1962 = vmatpush1.msra.mxu0 0.0
        %1963 = vmatprep.subr.mxu0 0.0
        %1964 = vmatpush1.msra.mxu0 0.0
        %1965 = vmatprep.subr.mxu0 0.0
        %1966 = vmatpush1.msra.mxu0 0.0
        %1967 = vmatprep.subr.mxu0 0.0
        %1968 = vmatpush1.msra.mxu0 0.0
        %1969 = vmatprep.subr.mxu0 0.0
        %1970 = vmatpush1.msra.mxu0 0.0
        %1971 = vmatprep.subr.mxu0 0.0
        %1972 = vmatpush1.msra.mxu0 0.0
        %1973 = vmatprep.subr.mxu0 0.0
        %1974 = vmatpush1.msra.mxu0 0.0
        %1975 = vmatprep.subr.mxu0 0.0
        %1976 = vmatpush1.msra.mxu0 0.0
        %1977 = vmatprep.subr.mxu0 0.0
        %1978 = vmatpush1.msra.mxu0 0.0
        %1979 = vmatprep.subr.mxu0 0.0
        %1980 = vmatpush1.msra.mxu0 0.0
        %1981 = vmatprep.subr.mxu0 0.0
        %1982 = vmatpush1.msra.mxu0 0.0
        %1983 = vmatprep.subr.mxu0 0.0
        %1984 = vmatpush1.msra.mxu0 0.0
        %1985 = vmatprep.mubr.f32.mxu0 0.0
        %1986 = vmatmul.mubr.f32.gmra.mrb[0].mxu0 %v1919
        %v1987 = vpop.f32.mrb[0].mxu0
        %v1988 = vadd.f32 0.0, %v1987
        %v1989 = vpop.f32.mrb[0].mxu0
        %1990 = vdwg.mxu0
        %1991 = vrot.lane.b32.xlu0 %v963, 64
        %v1992 = vpop.permute.xlu0 %1991
        %v1995 = vsel %vm984, %v1683, 0
        %1997 = vmatprep.subr.mxu0 0.0
        %1998 = vmatpush1.msra.mxu0 %v1992
        %1999 = vmatprep.subr.mxu0 0.0
        %2000 = vmatpush1.msra.mxu0 0.0
        %2001 = vmatprep.subr.mxu0 0.0
        %2002 = vmatpush1.msra.mxu0 0.0
        %2003 = vmatprep.subr.mxu0 0.0
        %2004 = vmatpush1.msra.mxu0 0.0
        %2005 = vmatprep.subr.mxu0 0.0
        %2006 = vmatpush1.msra.mxu0 0.0
        %2007 = vmatprep.subr.mxu0 0.0
        %2008 = vmatpush1.msra.mxu0 0.0
        %2009 = vmatprep.subr.mxu0 0.0
        %2010 = vmatpush1.msra.mxu0 0.0
        %2011 = vmatprep.subr.mxu0 0.0
        %2012 = vmatpush1.msra.mxu0 0.0
        %2013 = vmatprep.subr.mxu0 0.0
        %2014 = vmatpush1.msra.mxu0 0.0
        %2015 = vmatprep.subr.mxu0 0.0
        %2016 = vmatpush1.msra.mxu0 0.0
        %2017 = vmatprep.subr.mxu0 0.0
        %2018 = vmatpush1.msra.mxu0 0.0
        %2019 = vmatprep.subr.mxu0 0.0
        %2020 = vmatpush1.msra.mxu0 0.0
        %2021 = vmatprep.subr.mxu0 0.0
        %2022 = vmatpush1.msra.mxu0 0.0
        %2023 = vmatprep.subr.mxu0 0.0
        %2024 = vmatpush1.msra.mxu0 0.0
        %2025 = vmatprep.subr.mxu0 0.0
        %2026 = vmatpush1.msra.mxu0 0.0
        %2027 = vmatprep.subr.mxu0 0.0
        %2028 = vmatpush1.msra.mxu0 0.0
        %2029 = vmatprep.subr.mxu0 0.0
        %2030 = vmatpush1.msra.mxu0 0.0
        %2031 = vmatprep.subr.mxu0 0.0
        %2032 = vmatpush1.msra.mxu0 0.0
        %2033 = vmatprep.subr.mxu0 0.0
        %2034 = vmatpush1.msra.mxu0 0.0
        %2035 = vmatprep.subr.mxu0 0.0
        %2036 = vmatpush1.msra.mxu0 0.0
        %2037 = vmatprep.subr.mxu0 0.0
        %2038 = vmatpush1.msra.mxu0 0.0
        %2039 = vmatprep.subr.mxu0 0.0
        %2040 = vmatpush1.msra.mxu0 0.0
        %2041 = vmatprep.subr.mxu0 0.0
        %2042 = vmatpush1.msra.mxu0 0.0
        %2043 = vmatprep.subr.mxu0 0.0
        %2044 = vmatpush1.msra.mxu0 0.0
        %2045 = vmatprep.subr.mxu0 0.0
        %2046 = vmatpush1.msra.mxu0 0.0
        %2047 = vmatprep.subr.mxu0 0.0
        %2048 = vmatpush1.msra.mxu0 0.0
        %2049 = vmatprep.subr.mxu0 0.0
        %2050 = vmatpush1.msra.mxu0 0.0
        %2051 = vmatprep.subr.mxu0 0.0
        %2052 = vmatpush1.msra.mxu0 0.0
        %2053 = vmatprep.subr.mxu0 0.0
        %2054 = vmatpush1.msra.mxu0 0.0
        %2055 = vmatprep.subr.mxu0 0.0
        %2056 = vmatpush1.msra.mxu0 0.0
        %2057 = vmatprep.subr.mxu0 0.0
        %2058 = vmatpush1.msra.mxu0 0.0
        %2059 = vmatprep.subr.mxu0 0.0
        %2060 = vmatpush1.msra.mxu0 0.0
        %2061 = vmatprep.mubr.f32.mxu0 0.0
        %2062 = vmatmul.mubr.f32.gmra.mrb[0].mxu0 %v1995
        %v2063 = vpop.f32.mrb[0].mxu0
        %v2064 = vadd.f32 0.0, %v2063
        %v2065 = vpop.f32.mrb[0].mxu0
        %2066 = vdwg.mxu0
        %2067 = vrot.lane.b32.xlu0 %v965, 64
        %v2068 = vpop.permute.xlu0 %2067
        %v2071 = vsel %vm984, %v1684, 0
        %2073 = vmatprep.subr.mxu0 0.0
        %2074 = vmatpush1.msra.mxu0 %v2068
        %2075 = vmatprep.subr.mxu0 0.0
        %2076 = vmatpush1.msra.mxu0 0.0
        %2077 = vmatprep.subr.mxu0 0.0
        %2078 = vmatpush1.msra.mxu0 0.0
        %2079 = vmatprep.subr.mxu0 0.0
        %2080 = vmatpush1.msra.mxu0 0.0
        %2081 = vmatprep.subr.mxu0 0.0
        %2082 = vmatpush1.msra.mxu0 0.0
        %2083 = vmatprep.subr.mxu0 0.0
        %2084 = vmatpush1.msra.mxu0 0.0
        %2085 = vmatprep.subr.mxu0 0.0
        %2086 = vmatpush1.msra.mxu0 0.0
        %2087 = vmatprep.subr.mxu0 0.0
        %2088 = vmatpush1.msra.mxu0 0.0
        %2089 = vmatprep.subr.mxu0 0.0
        %2090 = vmatpush1.msra.mxu0 0.0
        %2091 = vmatprep.subr.mxu0 0.0
        %2092 = vmatpush1.msra.mxu0 0.0
        %2093 = vmatprep.subr.mxu0 0.0
        %2094 = vmatpush1.msra.mxu0 0.0
        %2095 = vmatprep.subr.mxu0 0.0
        %2096 = vmatpush1.msra.mxu0 0.0
        %2097 = vmatprep.subr.mxu0 0.0
        %2098 = vmatpush1.msra.mxu0 0.0
        %2099 = vmatprep.subr.mxu0 0.0
        %2100 = vmatpush1.msra.mxu0 0.0
        %2101 = vmatprep.subr.mxu0 0.0
        %2102 = vmatpush1.msra.mxu0 0.0
        %2103 = vmatprep.subr.mxu0 0.0
        %2104 = vmatpush1.msra.mxu0 0.0
        %2105 = vmatprep.subr.mxu0 0.0
        %2106 = vmatpush1.msra.mxu0 0.0
        %2107 = vmatprep.subr.mxu0 0.0
        %2108 = vmatpush1.msra.mxu0 0.0
        %2109 = vmatprep.subr.mxu0 0.0
        %2110 = vmatpush1.msra.mxu0 0.0
        %2111 = vmatprep.subr.mxu0 0.0
        %2112 = vmatpush1.msra.mxu0 0.0
        %2113 = vmatprep.subr.mxu0 0.0
        %2114 = vmatpush1.msra.mxu0 0.0
        %2115 = vmatprep.subr.mxu0 0.0
        %2116 = vmatpush1.msra.mxu0 0.0
        %2117 = vmatprep.subr.mxu0 0.0
        %2118 = vmatpush1.msra.mxu0 0.0
        %2119 = vmatprep.subr.mxu0 0.0
        %2120 = vmatpush1.msra.mxu0 0.0
        %2121 = vmatprep.subr.mxu0 0.0
        %2122 = vmatpush1.msra.mxu0 0.0
        %2123 = vmatprep.subr.mxu0 0.0
        %2124 = vmatpush1.msra.mxu0 0.0
        %2125 = vmatprep.subr.mxu0 0.0
        %2126 = vmatpush1.msra.mxu0 0.0
        %2127 = vmatprep.subr.mxu0 0.0
        %2128 = vmatpush1.msra.mxu0 0.0
        %2129 = vmatprep.subr.mxu0 0.0
        %2130 = vmatpush1.msra.mxu0 0.0
        %2131 = vmatprep.subr.mxu0 0.0
        %2132 = vmatpush1.msra.mxu0 0.0
        %2133 = vmatprep.subr.mxu0 0.0
        %2134 = vmatpush1.msra.mxu0 0.0
        %2135 = vmatprep.subr.mxu0 0.0
        %2136 = vmatpush1.msra.mxu0 0.0
        %2137 = vmatprep.mubr.f32.mxu0 0.0
        %2138 = vmatmul.mubr.f32.gmra.mrb[0].mxu0 %v2071
        %v2139 = vpop.f32.mrb[0].mxu0
        %v2140 = vadd.f32 0.0, %v2139
        %v2141 = vpop.f32.mrb[0].mxu0
        %2142 = vdwg.mxu0
        %2143 = vrot.lane.b32.xlu0 %v969, 64
        %v2144 = vpop.permute.xlu0 %2143
        %v2147 = vsel %vm984, %v1685, 0
        %2149 = vmatprep.subr.mxu0 0.0
        %2150 = vmatpush1.msra.mxu0 %v2144
        %2151 = vmatprep.subr.mxu0 0.0
        %2152 = vmatpush1.msra.mxu0 0.0
        %2153 = vmatprep.subr.mxu0 0.0
        %2154 = vmatpush1.msra.mxu0 0.0
        %2155 = vmatprep.subr.mxu0 0.0
        %2156 = vmatpush1.msra.mxu0 0.0
        %2157 = vmatprep.subr.mxu0 0.0
        %2158 = vmatpush1.msra.mxu0 0.0
        %2159 = vmatprep.subr.mxu0 0.0
        %2160 = vmatpush1.msra.mxu0 0.0
        %2161 = vmatprep.subr.mxu0 0.0
        %2162 = vmatpush1.msra.mxu0 0.0
        %2163 = vmatprep.subr.mxu0 0.0
        %2164 = vmatpush1.msra.mxu0 0.0
        %2165 = vmatprep.subr.mxu0 0.0
        %2166 = vmatpush1.msra.mxu0 0.0
        %2167 = vmatprep.subr.mxu0 0.0
        %2168 = vmatpush1.msra.mxu0 0.0
        %2169 = vmatprep.subr.mxu0 0.0
        %2170 = vmatpush1.msra.mxu0 0.0
        %2171 = vmatprep.subr.mxu0 0.0
        %2172 = vmatpush1.msra.mxu0 0.0
        %2173 = vmatprep.subr.mxu0 0.0
        %2174 = vmatpush1.msra.mxu0 0.0
        %2175 = vmatprep.subr.mxu0 0.0
        %2176 = vmatpush1.msra.mxu0 0.0
        %2177 = vmatprep.subr.mxu0 0.0
        %2178 = vmatpush1.msra.mxu0 0.0
        %2179 = vmatprep.subr.mxu0 0.0
        %2180 = vmatpush1.msra.mxu0 0.0
        %2181 = vmatprep.subr.mxu0 0.0
        %2182 = vmatpush1.msra.mxu0 0.0
        %2183 = vmatprep.subr.mxu0 0.0
        %2184 = vmatpush1.msra.mxu0 0.0
        %2185 = vmatprep.subr.mxu0 0.0
        %2186 = vmatpush1.msra.mxu0 0.0
        %2187 = vmatprep.subr.mxu0 0.0
        %2188 = vmatpush1.msra.mxu0 0.0
        %2189 = vmatprep.subr.mxu0 0.0
        %2190 = vmatpush1.msra.mxu0 0.0
        %2191 = vmatprep.subr.mxu0 0.0
        %2192 = vmatpush1.msra.mxu0 0.0
        %2193 = vmatprep.subr.mxu0 0.0
        %2194 = vmatpush1.msra.mxu0 0.0
        %2195 = vmatprep.subr.mxu0 0.0
        %2196 = vmatpush1.msra.mxu0 0.0
        %2197 = vmatprep.subr.mxu0 0.0
        %2198 = vmatpush1.msra.mxu0 0.0
        %2199 = vmatprep.subr.mxu0 0.0
        %2200 = vmatpush1.msra.mxu0 0.0
        %2201 = vmatprep.subr.mxu0 0.0
        %2202 = vmatpush1.msra.mxu0 0.0
        %2203 = vmatprep.subr.mxu0 0.0
        %2204 = vmatpush1.msra.mxu0 0.0
        %2205 = vmatprep.subr.mxu0 0.0
        %2206 = vmatpush1.msra.mxu0 0.0
        %2207 = vmatprep.subr.mxu0 0.0
        %2208 = vmatpush1.msra.mxu0 0.0
        %2209 = vmatprep.subr.mxu0 0.0
        %2210 = vmatpush1.msra.mxu0 0.0
        %2211 = vmatprep.subr.mxu0 0.0
        %2212 = vmatpush1.msra.mxu0 0.0
        %2213 = vmatprep.mubr.f32.mxu0 0.0
        %2214 = vmatmul.mubr.f32.gmra.mrb[0].mxu0 %v2147
        %v2215 = vpop.f32.mrb[0].mxu0
        %v2216 = vadd.f32 0.0, %v2215
        %v2217 = vpop.f32.mrb[0].mxu0
        %2218 = vdwg.mxu0
        %2219 = vrot.lane.b32.xlu0 %v971, 64
        %v2220 = vpop.permute.xlu0 %2219
        %v2223 = vsel %vm984, %v1686, 0
        %2225 = vmatprep.subr.mxu0 0.0
        %2226 = vmatpush1.msra.mxu0 %v2220
        %2227 = vmatprep.subr.mxu0 0.0
        %2228 = vmatpush1.msra.mxu0 0.0
        %2229 = vmatprep.subr.mxu0 0.0
        %2230 = vmatpush1.msra.mxu0 0.0
        %2231 = vmatprep.subr.mxu0 0.0
        %2232 = vmatpush1.msra.mxu0 0.0
        %2233 = vmatprep.subr.mxu0 0.0
        %2234 = vmatpush1.msra.mxu0 0.0
        %2235 = vmatprep.subr.mxu0 0.0
        %2236 = vmatpush1.msra.mxu0 0.0
        %2237 = vmatprep.subr.mxu0 0.0
        %2238 = vmatpush1.msra.mxu0 0.0
        %2239 = vmatprep.subr.mxu0 0.0
        %2240 = vmatpush1.msra.mxu0 0.0
        %2241 = vmatprep.subr.mxu0 0.0
        %2242 = vmatpush1.msra.mxu0 0.0
        %2243 = vmatprep.subr.mxu0 0.0
        %2244 = vmatpush1.msra.mxu0 0.0
        %2245 = vmatprep.subr.mxu0 0.0
        %2246 = vmatpush1.msra.mxu0 0.0
        %2247 = vmatprep.subr.mxu0 0.0
        %2248 = vmatpush1.msra.mxu0 0.0
        %2249 = vmatprep.subr.mxu0 0.0
        %2250 = vmatpush1.msra.mxu0 0.0
        %2251 = vmatprep.subr.mxu0 0.0
        %2252 = vmatpush1.msra.mxu0 0.0
        %2253 = vmatprep.subr.mxu0 0.0
        %2254 = vmatpush1.msra.mxu0 0.0
        %2255 = vmatprep.subr.mxu0 0.0
        %2256 = vmatpush1.msra.mxu0 0.0
        %2257 = vmatprep.subr.mxu0 0.0
        %2258 = vmatpush1.msra.mxu0 0.0
        %2259 = vmatprep.subr.mxu0 0.0
        %2260 = vmatpush1.msra.mxu0 0.0
        %2261 = vmatprep.subr.mxu0 0.0
        %2262 = vmatpush1.msra.mxu0 0.0
        %2263 = vmatprep.subr.mxu0 0.0
        %2264 = vmatpush1.msra.mxu0 0.0
        %2265 = vmatprep.subr.mxu0 0.0
        %2266 = vmatpush1.msra.mxu0 0.0
        %2267 = vmatprep.subr.mxu0 0.0
        %2268 = vmatpush1.msra.mxu0 0.0
        %2269 = vmatprep.subr.mxu0 0.0
        %2270 = vmatpush1.msra.mxu0 0.0
        %2271 = vmatprep.subr.mxu0 0.0
        %2272 = vmatpush1.msra.mxu0 0.0
        %2273 = vmatprep.subr.mxu0 0.0
        %2274 = vmatpush1.msra.mxu0 0.0
        %2275 = vmatprep.subr.mxu0 0.0
        %2276 = vmatpush1.msra.mxu0 0.0
        %2277 = vmatprep.subr.mxu0 0.0
        %2278 = vmatpush1.msra.mxu0 0.0
        %2279 = vmatprep.subr.mxu0 0.0
        %2280 = vmatpush1.msra.mxu0 0.0
        %2281 = vmatprep.subr.mxu0 0.0
        %2282 = vmatpush1.msra.mxu0 0.0
        %2283 = vmatprep.subr.mxu0 0.0
        %2284 = vmatpush1.msra.mxu0 0.0
        %2285 = vmatprep.subr.mxu0 0.0
        %2286 = vmatpush1.msra.mxu0 0.0
        %2287 = vmatprep.subr.mxu0 0.0
        %2288 = vmatpush1.msra.mxu0 0.0
        %2289 = vmatprep.mubr.f32.mxu0 0.0
        %2290 = vmatmul.mubr.f32.gmra.mrb[0].mxu0 %v2223
        %v2291 = vpop.f32.mrb[0].mxu0
        %v2292 = vadd.f32 0.0, %v2291
        %v2293 = vpop.f32.mrb[0].mxu0
        %2294 = vdwg.mxu0
        %2297 = vrot.lane.b32.xlu0 %v1912, 8
        %v2298 = vpop.permute.xlu0 %2297
        %2299 = vrot.lane.b32.xlu0 %v1988, 8
        %v2300 = vpop.permute.xlu0 %2299
        %2305 = vrot.lane.b32.xlu0 %v2064, 16
        %v2306 = vpop.permute.xlu0 %2305
        %2307 = vrot.lane.b32.xlu0 %v2140, 16
        %v2308 = vpop.permute.xlu0 %2307
        %2313 = vrot.lane.b32.xlu0 %v2216, 24
        %v2314 = vpop.permute.xlu0 %2313
        %2315 = vrot.lane.b32.xlu0 %v2292, 24
        %v2316 = vpop.permute.xlu0 %2315
        %v2319 = vsel %vm984, %v1760, %v2298
        %v2320 = vsel %vm984, %v1836, %v2300
        %vm2321 = vcmask 130048
        %v2322 = vsel %vm2321, %v2319, %v2306
        %v2323 = vsel %vm2321, %v2320, %v2308
        %vm2324 = vcmask 195584
        %v2325 = vsel %vm2324, %v2322, %v2314
        %v2326 = vsel %vm2324, %v2323, %v2316
        %v2328 = vlaneseq
        %v2329 = vshrl.u32 %v2328, 7
        %v2330 = vsub.s32 0, %v2329
        %v2331 = vrot.slane %v953, %v2330
        %v2334 = vsel %vm749, %v2325, 0
        %v2337 = vsel %vm749, %v2326, 0
        %2339 = vmatprep.subr.mxu0 0.0
        %2340 = vmatpush1.msra.mxu0 %v949
        %2341 = vmatprep.subr.mxu0 0.0
        %2342 = vmatpush1.msra.mxu0 %v950
        %2343 = vmatprep.subr.mxu0 0.0
        %2344 = vmatpush1.msra.mxu0 %v951
        %2345 = vmatprep.subr.mxu0 0.0
        %2346 = vmatpush1.msra.mxu0 %v952
        %2347 = vmatprep.subr.mxu0 0.0
        %2348 = vmatpush1.msra.mxu0 0.0
        %2349 = vmatprep.subr.mxu0 0.0
        %2350 = vmatpush1.msra.mxu0 0.0
        %2351 = vmatprep.subr.mxu0 0.0
        %2352 = vmatpush1.msra.mxu0 0.0
        %2353 = vmatprep.subr.mxu0 0.0
        %2354 = vmatpush1.msra.mxu0 0.0
        %2355 = vmatprep.subr.mxu0 0.0
        %2356 = vmatpush1.msra.mxu0 0.0
        %2357 = vmatprep.subr.mxu0 0.0
        %2358 = vmatpush1.msra.mxu0 0.0
        %2359 = vmatprep.subr.mxu0 0.0
        %2360 = vmatpush1.msra.mxu0 0.0
        %2361 = vmatprep.subr.mxu0 0.0
        %2362 = vmatpush1.msra.mxu0 0.0
        %2363 = vmatprep.subr.mxu0 0.0
        %2364 = vmatpush1.msra.mxu0 0.0
        %2365 = vmatprep.subr.mxu0 0.0
        %2366 = vmatpush1.msra.mxu0 0.0
        %2367 = vmatprep.subr.mxu0 0.0
        %2368 = vmatpush1.msra.mxu0 0.0
        %2369 = vmatprep.subr.mxu0 0.0
        %2370 = vmatpush1.msra.mxu0 0.0
        %2371 = vmatprep.subr.mxu0 0.0
        %2372 = vmatpush1.msra.mxu0 0.0
        %2373 = vmatprep.subr.mxu0 0.0
        %2374 = vmatpush1.msra.mxu0 0.0
        %2375 = vmatprep.subr.mxu0 0.0
        %2376 = vmatpush1.msra.mxu0 0.0
        %2377 = vmatprep.subr.mxu0 0.0
        %2378 = vmatpush1.msra.mxu0 0.0
        %2379 = vmatprep.subr.mxu0 0.0
        %2380 = vmatpush1.msra.mxu0 0.0
        %2381 = vmatprep.subr.mxu0 0.0
        %2382 = vmatpush1.msra.mxu0 0.0
        %2383 = vmatprep.subr.mxu0 0.0
        %2384 = vmatpush1.msra.mxu0 0.0
        %2385 = vmatprep.subr.mxu0 0.0
        %2386 = vmatpush1.msra.mxu0 0.0
        %2387 = vmatprep.subr.mxu0 0.0
        %2388 = vmatpush1.msra.mxu0 0.0
        %2389 = vmatprep.subr.mxu0 0.0
        %2390 = vmatpush1.msra.mxu0 0.0
        %2391 = vmatprep.subr.mxu0 0.0
        %2392 = vmatpush1.msra.mxu0 0.0
        %2393 = vmatprep.subr.mxu0 0.0
        %2394 = vmatpush1.msra.mxu0 0.0
        %2395 = vmatprep.subr.mxu0 0.0
        %2396 = vmatpush1.msra.mxu0 0.0
        %2397 = vmatprep.subr.mxu0 0.0
        %2398 = vmatpush1.msra.mxu0 0.0
        %2399 = vmatprep.subr.mxu0 0.0
        %2400 = vmatpush1.msra.mxu0 0.0
        %2401 = vmatprep.subr.mxu0 0.0
        %2402 = vmatpush1.msra.mxu0 0.0
        %2403 = vmatprep.mubr.f32.mxu0 0.0
        %2404 = vmatmul.mubr.f32.gmra.mrb[0].mxu0 %v2334
        %v2405 = vpop.f32.mrb[0].mxu0
        %v2406 = vadd.f32 %v2331, %v2405
        %v2407 = vpop.f32.mrb[0].mxu0
        %2408 = vmatprep.mubr.f32.mxu0 0.0
        %2409 = vmatmul.mubr.f32.gmra.mrb[0].mxu0 %v2337
        %v2410 = vpop.f32.mrb[0].mxu0
        %v2411 = vadd.f32 %v2331, %v2410
        %v2412 = vpop.f32.mrb[0].mxu0
        %2413 = vdwg.mxu0
        %v2414 = vsel %vm749, %v2406, 0.0
        %2415 = vadd.xlane.f32.xlu0 %v2414
        %v2416 = vpop.xlane.xlu0 %2415
        %v2417 = vsel %vm749, %v2411, 0.0
        %2418 = vadd.xlane.f32.xlu0 %v2417
        %v2419 = vpop.xlane.xlu0 %2418
        %v2420 = vmul.f32 %v2416, %v756
        %v2421 = vmul.f32 %v2419, %v756
        %v2422 = vsub.f32 %v2406, %v2420
        %v2423 = vsub.f32 %v2411, %v2421
        %v2424 = vmul.f32 %v2422, %v2422
        %v2425 = vmul.f32 %v2423, %v2423
        %v2426 = vsel %vm749, %v2424, 0.0
        %2427 = vadd.xlane.f32.xlu0 %v2426
        %v2428 = vpop.xlane.xlu0 %2427
        %v2429 = vsel %vm749, %v2425, 0.0
        %2430 = vadd.xlane.f32.xlu0 %v2429
        %v2431 = vpop.xlane.xlu0 %2430
        %v2432 = vmul.f32 %v2428, %v756
        %v2433 = vmul.f32 %v2431, %v756
        %v2434 = vadd.f32 %v2432, 1e-05
        %v2435 = vadd.f32 %v2433, 1e-05
        %v2436 = vrsqrt.pop %v2434
        %v2437 = vrsqrt.pop %v2435
        %v2438 = vmul.f32 %v2422, %v2436
        %v2439 = vmul.f32 %v2423, %v2437
        %v2440 = vlaneseq
        %v2441 = vshrl.u32 %v2440, 7
        %v2442 = vsub.s32 2, %v2441
        %v2443 = vrot.slane %v741, %v2442
        %v2444 = vmul.f32 %v2438, %v2443
        %v2445 = vmul.f32 %v2439, %v2443
        %v2446 = vlaneseq
        %v2447 = vshrl.u32 %v2446, 7
        %v2448 = vsub.s32 2, %v2447
        %v2449 = vrot.slane %v742, %v2448
        %v2450 = vadd.f32 %v2444, %v2449
        %v2451 = vadd.f32 %v2445, %v2449
        %v2452 = vld [vmem:[#allocation8] sm:$0xff]
        %v2453 = vld [vmem:[#allocation8 + $0x8] sm:$0xff]
        %v2454 = vld [vmem:[#allocation8 + $0x10] sm:$0xff]
        %v2455 = vld [vmem:[#allocation8 + $0x18] sm:$0xff]
        %v2456 = vld [vmem:[%s9] sm:$0x1]
        %v2458 = vlaneseq
        %v2459 = vshrl.u32 %v2458, 7
        %v2460 = vsub.s32 0, %v2459
        %v2461 = vrot.slane %v2456, %v2460
        %v2464 = vsel %vm749, %v2450, 0
        %v2467 = vsel %vm749, %v2451, 0
        %2469 = vmatprep.subr.mxu0 0.0
        %2470 = vmatpush1.msra.mxu0 %v2452
        %2471 = vmatprep.subr.mxu0 0.0
        %2472 = vmatpush1.msra.mxu0 %v2453
        %2473 = vmatprep.subr.mxu0 0.0
        %2474 = vmatpush1.msra.mxu0 %v2454
        %2475 = vmatprep.subr.mxu0 0.0
        %2476 = vmatpush1.msra.mxu0 %v2455
        %2477 = vmatprep.subr.mxu0 0.0
        %2478 = vmatpush1.msra.mxu0 0.0
        %2479 = vmatprep.subr.mxu0 0.0
        %2480 = vmatpush1.msra.mxu0 0.0
        %2481 = vmatprep.subr.mxu0 0.0
        %2482 = vmatpush1.msra.mxu0 0.0
        %2483 = vmatprep.subr.mxu0 0.0
        %2484 = vmatpush1.msra.mxu0 0.0
        %2485 = vmatprep.subr.mxu0 0.0
        %2486 = vmatpush1.msra.mxu0 0.0
        %2487 = vmatprep.subr.mxu0 0.0
        %2488 = vmatpush1.msra.mxu0 0.0
        %2489 = vmatprep.subr.mxu0 0.0
        %2490 = vmatpush1.msra.mxu0 0.0
        %2491 = vmatprep.subr.mxu0 0.0
        %2492 = vmatpush1.msra.mxu0 0.0
        %2493 = vmatprep.subr.mxu0 0.0
        %2494 = vmatpush1.msra.mxu0 0.0
        %2495 = vmatprep.subr.mxu0 0.0
        %2496 = vmatpush1.msra.mxu0 0.0
        %2497 = vmatprep.subr.mxu0 0.0
        %2498 = vmatpush1.msra.mxu0 0.0
        %2499 = vmatprep.subr.mxu0 0.0
        %2500 = vmatpush1.msra.mxu0 0.0
        %2501 = vmatprep.subr.mxu0 0.0
        %2502 = vmatpush1.msra.mxu0 0.0
        %2503 = vmatprep.subr.mxu0 0.0
        %2504 = vmatpush1.msra.mxu0 0.0
        %2505 = vmatprep.subr.mxu0 0.0
        %2506 = vmatpush1.msra.mxu0 0.0
        %2507 = vmatprep.subr.mxu0 0.0
        %2508 = vmatpush1.msra.mxu0 0.0
        %2509 = vmatprep.subr.mxu0 0.0
        %2510 = vmatpush1.msra.mxu0 0.0
        %2511 = vmatprep.subr.mxu0 0.0
        %2512 = vmatpush1.msra.mxu0 0.0
        %2513 = vmatprep.subr.mxu0 0.0
        %2514 = vmatpush1.msra.mxu0 0.0
        %2515 = vmatprep.subr.mxu0 0.0
        %2516 = vmatpush1.msra.mxu0 0.0
        %2517 = vmatprep.subr.mxu0 0.0
        %2518 = vmatpush1.msra.mxu0 0.0
        %2519 = vmatprep.subr.mxu0 0.0
        %2520 = vmatpush1.msra.mxu0 0.0
        %2521 = vmatprep.subr.mxu0 0.0
        %2522 = vmatpush1.msra.mxu0 0.0
        %2523 = vmatprep.subr.mxu0 0.0
        %2524 = vmatpush1.msra.mxu0 0.0
        %2525 = vmatprep.subr.mxu0 0.0
        %2526 = vmatpush1.msra.mxu0 0.0
        %2527 = vmatprep.subr.mxu0 0.0
        %2528 = vmatpush1.msra.mxu0 0.0
        %2529 = vmatprep.subr.mxu0 0.0
        %2530 = vmatpush1.msra.mxu0 0.0
        %2531 = vmatprep.subr.mxu0 0.0
        %2532 = vmatpush1.msra.mxu0 0.0
        %2533 = vmatprep.mubr.f32.mxu0 0.0
        %2534 = vmatmul.mubr.f32.gmra.mrb[0].mxu0 %v2464
        %v2535 = vpop.f32.mrb[0].mxu0
        %v2536 = vadd.f32 %v2461, %v2535
        %v2537 = vpop.f32.mrb[0].mxu0
        %2538 = vmatprep.mubr.f32.mxu0 0.0
        %2539 = vmatmul.mubr.f32.gmra.mrb[0].mxu0 %v2467
        %v2540 = vpop.f32.mrb[0].mxu0
        %v2541 = vadd.f32 %v2461, %v2540
        %v2542 = vpop.f32.mrb[0].mxu0
        %2543 = vdwg.mxu0
        %v2544 = vld [vmem:[#allocation10] sm:$0xff]
        %v2545 = vld [vmem:[#allocation10 + $0x8] sm:$0xff]
        %v2546 = vld [vmem:[#allocation10 + $0x10] sm:$0xff]
        %v2547 = vld [vmem:[#allocation10 + $0x18] sm:$0xff]
        %v2548 = vld [vmem:[%s11] sm:$0x1]
        %v2550 = vlaneseq
        %v2551 = vshrl.u32 %v2550, 7
        %v2552 = vsub.s32 0, %v2551
        %v2553 = vrot.slane %v2548, %v2552
        %v2556 = vsel %vm749, %v853, 0
        %v2559 = vsel %vm749, %v854, 0
        %v2562 = vsel %vm749, %v855, 0
        %v2565 = vsel %vm749, %v856, 0
        %2567 = vmatprep.subr.mxu0 0.0
        %2568 = vmatpush1.msra.mxu0 %v2544
        %2569 = vmatprep.subr.mxu0 0.0
        %2570 = vmatpush1.msra.mxu0 %v2545
        %2571 = vmatprep.subr.mxu0 0.0
        %2572 = vmatpush1.msra.mxu0 %v2546
        %2573 = vmatprep.subr.mxu0 0.0
        %2574 = vmatpush1.msra.mxu0 %v2547
        %2575 = vmatprep.subr.mxu0 0.0
        %2576 = vmatpush1.msra.mxu0 0.0
        %2577 = vmatprep.subr.mxu0 0.0
        %2578 = vmatpush1.msra.mxu0 0.0
        %2579 = vmatprep.subr.mxu0 0.0
        %2580 = vmatpush1.msra.mxu0 0.0
        %2581 = vmatprep.subr.mxu0 0.0
        %2582 = vmatpush1.msra.mxu0 0.0
        %2583 = vmatprep.subr.mxu0 0.0
        %2584 = vmatpush1.msra.mxu0 0.0
        %2585 = vmatprep.subr.mxu0 0.0
        %2586 = vmatpush1.msra.mxu0 0.0
        %2587 = vmatprep.subr.mxu0 0.0
        %2588 = vmatpush1.msra.mxu0 0.0
        %2589 = vmatprep.subr.mxu0 0.0
        %2590 = vmatpush1.msra.mxu0 0.0
        %2591 = vmatprep.subr.mxu0 0.0
        %2592 = vmatpush1.msra.mxu0 0.0
        %2593 = vmatprep.subr.mxu0 0.0
        %2594 = vmatpush1.msra.mxu0 0.0
        %2595 = vmatprep.subr.mxu0 0.0
        %2596 = vmatpush1.msra.mxu0 0.0
        %2597 = vmatprep.subr.mxu0 0.0
        %2598 = vmatpush1.msra.mxu0 0.0
        %2599 = vmatprep.subr.mxu0 0.0
        %2600 = vmatpush1.msra.mxu0 0.0
        %2601 = vmatprep.subr.mxu0 0.0
        %2602 = vmatpush1.msra.mxu0 0.0
        %2603 = vmatprep.subr.mxu0 0.0
        %2604 = vmatpush1.msra.mxu0 0.0
        %2605 = vmatprep.subr.mxu0 0.0
        %2606 = vmatpush1.msra.mxu0 0.0
        %2607 = vmatprep.subr.mxu0 0.0
        %2608 = vmatpush1.msra.mxu0 0.0
        %2609 = vmatprep.subr.mxu0 0.0
        %2610 = vmatpush1.msra.mxu0 0.0
        %2611 = vmatprep.subr.mxu0 0.0
        %2612 = vmatpush1.msra.mxu0 0.0
        %2613 = vmatprep.subr.mxu0 0.0
        %2614 = vmatpush1.msra.mxu0 0.0
        %2615 = vmatprep.subr.mxu0 0.0
        %2616 = vmatpush1.msra.mxu0 0.0
        %2617 = vmatprep.subr.mxu0 0.0
        %2618 = vmatpush1.msra.mxu0 0.0
        %2619 = vmatprep.subr.mxu0 0.0
        %2620 = vmatpush1.msra.mxu0 0.0
        %2621 = vmatprep.subr.mxu0 0.0
        %2622 = vmatpush1.msra.mxu0 0.0
        %2623 = vmatprep.subr.mxu0 0.0
        %2624 = vmatpush1.msra.mxu0 0.0
        %2625 = vmatprep.subr.mxu0 0.0
        %2626 = vmatpush1.msra.mxu0 0.0
        %2627 = vmatprep.subr.mxu0 0.0
        %2628 = vmatpush1.msra.mxu0 0.0
        %2629 = vmatprep.subr.mxu0 0.0
        %2630 = vmatpush1.msra.mxu0 0.0
        %2631 = vmatprep.mubr.f32.mxu0 0.0
        %2632 = vmatmul.mubr.f32.gmra.mrb[0].mxu0 %v2556
        %v2633 = vpop.f32.mrb[0].mxu0
        %v2634 = vadd.f32 %v2553, %v2633
        %v2635 = vpop.f32.mrb[0].mxu0
        %2636 = vmatprep.mubr.f32.mxu0 0.0
        %2637 = vmatmul.mubr.f32.gmra.mrb[0].mxu0 %v2559
        %v2638 = vpop.f32.mrb[0].mxu0
        %v2639 = vadd.f32 %v2553, %v2638
        %v2640 = vpop.f32.mrb[0].mxu0
        %2641 = vmatprep.mubr.f32.mxu0 0.0
        %2642 = vmatmul.mubr.f32.gmra.mrb[0].mxu0 %v2562
        %v2643 = vpop.f32.mrb[0].mxu0
        %v2644 = vadd.f32 %v2553, %v2643
        %v2645 = vpop.f32.mrb[0].mxu0
        %2646 = vmatprep.mubr.f32.mxu0 0.0
        %2647 = vmatmul.mubr.f32.gmra.mrb[0].mxu0 %v2565
        %v2648 = vpop.f32.mrb[0].mxu0
        %v2649 = vadd.f32 %v2553, %v2648
        %v2650 = vpop.f32.mrb[0].mxu0
        %2651 = vdwg.mxu0
        %v2652 = vld [vmem:[#allocation11] sm:$0xff]
        %v2653 = vld [vmem:[#allocation11 + $0x8] sm:$0xff]
        %v2654 = vld [vmem:[#allocation11 + $0x10] sm:$0xff]
        %v2655 = vld [vmem:[#allocation11 + $0x18] sm:$0xff]
        %v2656 = vld [vmem:[%s13] sm:$0x1]
        %2659 = vrot.lane.b32.xlu0 %v2536, 120
        %v2660 = vpop.permute.xlu0 %2659
        %2661 = vrot.lane.b32.xlu0 %v2541, 120
        %v2662 = vpop.permute.xlu0 %2661
        %2665 = vrot.lane.b32.xlu0 %v2536, 112
        %v2666 = vpop.permute.xlu0 %2665
        %2667 = vrot.lane.b32.xlu0 %v2541, 112
        %v2668 = vpop.permute.xlu0 %2667
        %2671 = vrot.lane.b32.xlu0 %v2536, 104
        %v2672 = vpop.permute.xlu0 %2671
        %2673 = vrot.lane.b32.xlu0 %v2541, 104
        %v2674 = vpop.permute.xlu0 %2673
        %v2677 = vmul.f32 %v2536, 0.35355338
        %v2678 = vmul.f32 %v2541, 0.35355338
        %v2679 = vmul.f32 %v2660, 0.35355338
        %v2680 = vmul.f32 %v2662, 0.35355338
        %v2681 = vmul.f32 %v2666, 0.35355338
        %v2682 = vmul.f32 %v2668, 0.35355338
        %v2683 = vmul.f32 %v2672, 0.35355338
        %v2684 = vmul.f32 %v2674, 0.35355338
        %2689 = vrot.lane.b32.xlu0 %v2634, 120
        %v2690 = vpop.permute.xlu0 %2689
        %2691 = vrot.lane.b32.xlu0 %v2639, 120
        %v2692 = vpop.permute.xlu0 %2691
        %2693 = vrot.lane.b32.xlu0 %v2644, 120
        %v2694 = vpop.permute.xlu0 %2693
        %2695 = vrot.lane.b32.xlu0 %v2649, 120
        %v2696 = vpop.permute.xlu0 %2695
        %2697 = vrot.lane.b32.xlu0 %v2634, 112
        %v2698 = vpop.permute.xlu0 %2697
        %2699 = vrot.lane.b32.xlu0 %v2639, 112
        %v2700 = vpop.permute.xlu0 %2699
        %2701 = vrot.lane.b32.xlu0 %v2644, 112
        %v2702 = vpop.permute.xlu0 %2701
        %2703 = vrot.lane.b32.xlu0 %v2649, 112
        %v2704 = vpop.permute.xlu0 %2703
        %2705 = vrot.lane.b32.xlu0 %v2634, 104
        %v2706 = vpop.permute.xlu0 %2705
        %2707 = vrot.lane.b32.xlu0 %v2639, 104
        %v2708 = vpop.permute.xlu0 %2707
        %2709 = vrot.lane.b32.xlu0 %v2644, 104
        %v2710 = vpop.permute.xlu0 %2709
        %2711 = vrot.lane.b32.xlu0 %v2649, 104
        %v2712 = vpop.permute.xlu0 %2711
        %v2714 = vsel %vm984, %v2677, 0
        %v2716 = vsel %vm984, %v2634, 0
        %v2718 = vsel %vm984, %v2639, 0
        %2720 = vmatprep.subr.mxu0 0.0
        %2721 = vmatpush1.xpose.msra.mxu0 %v2716
        %2722 = vmatprep.subr.mxu0 0.0
        %2723 = vmatpush1.xpose.msra.mxu0 %v2718
        %2724 = vmatprep.subr.mxu0 0.0
        %2725 = vmatpush1.xpose.msra.mxu0 0.0
        %2726 = vmatprep.subr.mxu0 0.0
        %2727 = vmatpush1.xpose.msra.mxu0 0.0
        %2728 = vmatprep.subr.mxu0 0.0
        %2729 = vmatpush1.xpose.msra.mxu0 0.0
        %2730 = vmatprep.subr.mxu0 0.0
        %2731 = vmatpush1.xpose.msra.mxu0 0.0
        %2732 = vmatprep.subr.mxu0 0.0
        %2733 = vmatpush1.xpose.msra.mxu0 0.0
        %2734 = vmatprep.subr.mxu0 0.0
        %2735 = vmatpush1.xpose.msra.mxu0 0.0
        %2736 = vmatprep.subr.mxu0 0.0
        %2737 = vmatpush1.xpose.msra.mxu0 0.0
        %2738 = vmatprep.subr.mxu0 0.0
        %2739 = vmatpush1.xpose.msra.mxu0 0.0
        %2740 = vmatprep.subr.mxu0 0.0
        %2741 = vmatpush1.xpose.msra.mxu0 0.0
        %2742 = vmatprep.subr.mxu0 0.0
        %2743 = vmatpush1.xpose.msra.mxu0 0.0
        %2744 = vmatprep.subr.mxu0 0.0
        %2745 = vmatpush1.xpose.msra.mxu0 0.0
        %2746 = vmatprep.subr.mxu0 0.0
        %2747 = vmatpush1.xpose.msra.mxu0 0.0
        %2748 = vmatprep.subr.mxu0 0.0
        %2749 = vmatpush1.xpose.msra.mxu0 0.0
        %2750 = vmatprep.subr.mxu0 0.0
        %2751 = vmatpush1.xpose.msra.mxu0 0.0
        %2752 = vmatprep.subr.mxu0 0.0
        %2753 = vmatpush1.xpose.msra.mxu0 0.0
        %2754 = vmatprep.subr.mxu0 0.0
        %2755 = vmatpush1.xpose.msra.mxu0 0.0
        %2756 = vmatprep.subr.mxu0 0.0
        %2757 = vmatpush1.xpose.msra.mxu0 0.0
        %2758 = vmatprep.subr.mxu0 0.0
        %2759 = vmatpush1.xpose.msra.mxu0 0.0
        %2760 = vmatprep.subr.mxu0 0.0
        %2761 = vmatpush1.xpose.msra.mxu0 0.0
        %2762 = vmatprep.subr.mxu0 0.0
        %2763 = vmatpush1.xpose.msra.mxu0 0.0
        %2764 = vmatprep.subr.mxu0 0.0
        %2765 = vmatpush1.xpose.msra.mxu0 0.0
        %2766 = vmatprep.subr.mxu0 0.0
        %2767 = vmatpush1.xpose.msra.mxu0 0.0
        %2768 = vmatprep.subr.mxu0 0.0
        %2769 = vmatpush1.xpose.msra.mxu0 0.0
        %2770 = vmatprep.subr.mxu0 0.0
        %2771 = vmatpush1.xpose.msra.mxu0 0.0
        %2772 = vmatprep.subr.mxu0 0.0
        %2773 = vmatpush1.xpose.msra.mxu0 0.0
        %2774 = vmatprep.subr.mxu0 0.0
        %2775 = vmatpush1.xpose.msra.mxu0 0.0
        %2776 = vmatprep.subr.mxu0 0.0
        %2777 = vmatpush1.xpose.msra.mxu0 0.0
        %2778 = vmatprep.subr.mxu0 0.0
        %2779 = vmatpush1.xpose.msra.mxu0 0.0
        %2780 = vmatprep.subr.mxu0 0.0
        %2781 = vmatpush1.xpose.msra.mxu0 0.0
        %2782 = vmatprep.subr.mxu0 0.0
        %2783 = vmatpush1.xpose.msra.mxu0 0.0
        %2784 = vmatprep.mubr.f32.mxu0 0.0
        %2785 = vmatmul.mubr.f32.gmra.mrb[0].mxu0 %v2714
        %v2786 = vpop.f32.mrb[0].mxu0
        %v2787 = vadd.f32 0.0, %v2786
        %v2788 = vpop.f32.mrb[0].mxu0
        %2789 = vdwg.mxu0
        %v2791 = vsel %vm984, %v2678, 0
        %v2793 = vsel %vm984, %v2644, 0
        %v2795 = vsel %vm984, %v2649, 0
        %2797 = vmatprep.subr.mxu0 0.0
        %2798 = vmatpush1.xpose.msra.mxu0 %v2793
        %2799 = vmatprep.subr.mxu0 0.0
        %2800 = vmatpush1.xpose.msra.mxu0 %v2795
        %2801 = vmatprep.subr.mxu0 0.0
        %2802 = vmatpush1.xpose.msra.mxu0 0.0
        %2803 = vmatprep.subr.mxu0 0.0
        %2804 = vmatpush1.xpose.msra.mxu0 0.0
        %2805 = vmatprep.subr.mxu0 0.0
        %2806 = vmatpush1.xpose.msra.mxu0 0.0
        %2807 = vmatprep.subr.mxu0 0.0
        %2808 = vmatpush1.xpose.msra.mxu0 0.0
        %2809 = vmatprep.subr.mxu0 0.0
        %2810 = vmatpush1.xpose.msra.mxu0 0.0
        %2811 = vmatprep.subr.mxu0 0.0
        %2812 = vmatpush1.xpose.msra.mxu0 0.0
        %2813 = vmatprep.subr.mxu0 0.0
        %2814 = vmatpush1.xpose.msra.mxu0 0.0
        %2815 = vmatprep.subr.mxu0 0.0
        %2816 = vmatpush1.xpose.msra.mxu0 0.0
        %2817 = vmatprep.subr.mxu0 0.0
        %2818 = vmatpush1.xpose.msra.mxu0 0.0
        %2819 = vmatprep.subr.mxu0 0.0
        %2820 = vmatpush1.xpose.msra.mxu0 0.0
        %2821 = vmatprep.subr.mxu0 0.0
        %2822 = vmatpush1.xpose.msra.mxu0 0.0
        %2823 = vmatprep.subr.mxu0 0.0
        %2824 = vmatpush1.xpose.msra.mxu0 0.0
        %2825 = vmatprep.subr.mxu0 0.0
        %2826 = vmatpush1.xpose.msra.mxu0 0.0
        %2827 = vmatprep.subr.mxu0 0.0
        %2828 = vmatpush1.xpose.msra.mxu0 0.0
        %2829 = vmatprep.subr.mxu0 0.0
        %2830 = vmatpush1.xpose.msra.mxu0 0.0
        %2831 = vmatprep.subr.mxu0 0.0
        %2832 = vmatpush1.xpose.msra.mxu0 0.0
        %2833 = vmatprep.subr.mxu0 0.0
        %2834 = vmatpush1.xpose.msra.mxu0 0.0
        %2835 = vmatprep.subr.mxu0 0.0
        %2836 = vmatpush1.xpose.msra.mxu0 0.0
        %2837 = vmatprep.subr.mxu0 0.0
        %2838 = vmatpush1.xpose.msra.mxu0 0.0
        %2839 = vmatprep.subr.mxu0 0.0
        %2840 = vmatpush1.xpose.msra.mxu0 0.0
        %2841 = vmatprep.subr.mxu0 0.0
        %2842 = vmatpush1.xpose.msra.mxu0 0.0
        %2843 = vmatprep.subr.mxu0 0.0
        %2844 = vmatpush1.xpose.msra.mxu0 0.0
        %2845 = vmatprep.subr.mxu0 0.0
        %2846 = vmatpush1.xpose.msra.mxu0 0.0
        %2847 = vmatprep.subr.mxu0 0.0
        %2848 = vmatpush1.xpose.msra.mxu0 0.0
        %2849 = vmatprep.subr.mxu0 0.0
        %2850 = vmatpush1.xpose.msra.mxu0 0.0
        %2851 = vmatprep.subr.mxu0 0.0
        %2852 = vmatpush1.xpose.msra.mxu0 0.0
        %2853 = vmatprep.subr.mxu0 0.0
        %2854 = vmatpush1.xpose.msra.mxu0 0.0
        %2855 = vmatprep.subr.mxu0 0.0
        %2856 = vmatpush1.xpose.msra.mxu0 0.0
        %2857 = vmatprep.subr.mxu0 0.0
        %2858 = vmatpush1.xpose.msra.mxu0 0.0
        %2859 = vmatprep.subr.mxu0 0.0
        %2860 = vmatpush1.xpose.msra.mxu0 0.0
        %2861 = vmatprep.mubr.f32.mxu0 0.0
        %2862 = vmatmul.mubr.f32.gmra.mrb[0].mxu0 %v2791
        %v2863 = vpop.f32.mrb[0].mxu0
        %v2864 = vadd.f32 0.0, %v2863
        %v2865 = vpop.f32.mrb[0].mxu0
        %2866 = vdwg.mxu0
        %v2868 = vsel %vm984, %v2679, 0
        %v2870 = vsel %vm984, %v2690, 0
        %v2872 = vsel %vm984, %v2692, 0
        %2874 = vmatprep.subr.mxu0 0.0
        %2875 = vmatpush1.xpose.msra.mxu0 %v2870
        %2876 = vmatprep.subr.mxu0 0.0
        %2877 = vmatpush1.xpose.msra.mxu0 %v2872
        %2878 = vmatprep.subr.mxu0 0.0
        %2879 = vmatpush1.xpose.msra.mxu0 0.0
        %2880 = vmatprep.subr.mxu0 0.0
        %2881 = vmatpush1.xpose.msra.mxu0 0.0
        %2882 = vmatprep.subr.mxu0 0.0
        %2883 = vmatpush1.xpose.msra.mxu0 0.0
        %2884 = vmatprep.subr.mxu0 0.0
        %2885 = vmatpush1.xpose.msra.mxu0 0.0
        %2886 = vmatprep.subr.mxu0 0.0
        %2887 = vmatpush1.xpose.msra.mxu0 0.0
        %2888 = vmatprep.subr.mxu0 0.0
        %2889 = vmatpush1.xpose.msra.mxu0 0.0
        %2890 = vmatprep.subr.mxu0 0.0
        %2891 = vmatpush1.xpose.msra.mxu0 0.0
        %2892 = vmatprep.subr.mxu0 0.0
        %2893 = vmatpush1.xpose.msra.mxu0 0.0
        %2894 = vmatprep.subr.mxu0 0.0
        %2895 = vmatpush1.xpose.msra.mxu0 0.0
        %2896 = vmatprep.subr.mxu0 0.0
        %2897 = vmatpush1.xpose.msra.mxu0 0.0
        %2898 = vmatprep.subr.mxu0 0.0
        %2899 = vmatpush1.xpose.msra.mxu0 0.0
        %2900 = vmatprep.subr.mxu0 0.0
        %2901 = vmatpush1.xpose.msra.mxu0 0.0
        %2902 = vmatprep.subr.mxu0 0.0
        %2903 = vmatpush1.xpose.msra.mxu0 0.0
        %2904 = vmatprep.subr.mxu0 0.0
        %2905 = vmatpush1.xpose.msra.mxu0 0.0
        %2906 = vmatprep.subr.mxu0 0.0
        %2907 = vmatpush1.xpose.msra.mxu0 0.0
        %2908 = vmatprep.subr.mxu0 0.0
        %2909 = vmatpush1.xpose.msra.mxu0 0.0
        %2910 = vmatprep.subr.mxu0 0.0
        %2911 = vmatpush1.xpose.msra.mxu0 0.0
        %2912 = vmatprep.subr.mxu0 0.0
        %2913 = vmatpush1.xpose.msra.mxu0 0.0
        %2914 = vmatprep.subr.mxu0 0.0
        %2915 = vmatpush1.xpose.msra.mxu0 0.0
        %2916 = vmatprep.subr.mxu0 0.0
        %2917 = vmatpush1.xpose.msra.mxu0 0.0
        %2918 = vmatprep.subr.mxu0 0.0
        %2919 = vmatpush1.xpose.msra.mxu0 0.0
        %2920 = vmatprep.subr.mxu0 0.0
        %2921 = vmatpush1.xpose.msra.mxu0 0.0
        %2922 = vmatprep.subr.mxu0 0.0
        %2923 = vmatpush1.xpose.msra.mxu0 0.0
        %2924 = vmatprep.subr.mxu0 0.0
        %2925 = vmatpush1.xpose.msra.mxu0 0.0
        %2926 = vmatprep.subr.mxu0 0.0
        %2927 = vmatpush1.xpose.msra.mxu0 0.0
        %2928 = vmatprep.subr.mxu0 0.0
        %2929 = vmatpush1.xpose.msra.mxu0 0.0
        %2930 = vmatprep.subr.mxu0 0.0
        %2931 = vmatpush1.xpose.msra.mxu0 0.0
        %2932 = vmatprep.subr.mxu0 0.0
        %2933 = vmatpush1.xpose.msra.mxu0 0.0
        %2934 = vmatprep.subr.mxu0 0.0
        %2935 = vmatpush1.xpose.msra.mxu0 0.0
        %2936 = vmatprep.subr.mxu0 0.0
        %2937 = vmatpush1.xpose.msra.mxu0 0.0
        %2938 = vmatprep.mubr.f32.mxu0 0.0
        %2939 = vmatmul.mubr.f32.gmra.mrb[0].mxu0 %v2868
        %v2940 = vpop.f32.mrb[0].mxu0
        %v2941 = vadd.f32 0.0, %v2940
        %v2942 = vpop.f32.mrb[0].mxu0
        %2943 = vdwg.mxu0
        %v2945 = vsel %vm984, %v2680, 0
        %v2947 = vsel %vm984, %v2694, 0
        %v2949 = vsel %vm984, %v2696, 0
        %2951 = vmatprep.subr.mxu0 0.0
        %2952 = vmatpush1.xpose.msra.mxu0 %v2947
        %2953 = vmatprep.subr.mxu0 0.0
        %2954 = vmatpush1.xpose.msra.mxu0 %v2949
        %2955 = vmatprep.subr.mxu0 0.0
        %2956 = vmatpush1.xpose.msra.mxu0 0.0
        %2957 = vmatprep.subr.mxu0 0.0
        %2958 = vmatpush1.xpose.msra.mxu0 0.0
        %2959 = vmatprep.subr.mxu0 0.0
        %2960 = vmatpush1.xpose.msra.mxu0 0.0
        %2961 = vmatprep.subr.mxu0 0.0
        %2962 = vmatpush1.xpose.msra.mxu0 0.0
        %2963 = vmatprep.subr.mxu0 0.0
        %2964 = vmatpush1.xpose.msra.mxu0 0.0
        %2965 = vmatprep.subr.mxu0 0.0
        %2966 = vmatpush1.xpose.msra.mxu0 0.0
        %2967 = vmatprep.subr.mxu0 0.0
        %2968 = vmatpush1.xpose.msra.mxu0 0.0
        %2969 = vmatprep.subr.mxu0 0.0
        %2970 = vmatpush1.xpose.msra.mxu0 0.0
        %2971 = vmatprep.subr.mxu0 0.0
        %2972 = vmatpush1.xpose.msra.mxu0 0.0
        %2973 = vmatprep.subr.mxu0 0.0
        %2974 = vmatpush1.xpose.msra.mxu0 0.0
        %2975 = vmatprep.subr.mxu0 0.0
        %2976 = vmatpush1.xpose.msra.mxu0 0.0
        %2977 = vmatprep.subr.mxu0 0.0
        %2978 = vmatpush1.xpose.msra.mxu0 0.0
        %2979 = vmatprep.subr.mxu0 0.0
        %2980 = vmatpush1.xpose.msra.mxu0 0.0
        %2981 = vmatprep.subr.mxu0 0.0
        %2982 = vmatpush1.xpose.msra.mxu0 0.0
        %2983 = vmatprep.subr.mxu0 0.0
        %2984 = vmatpush1.xpose.msra.mxu0 0.0
        %2985 = vmatprep.subr.mxu0 0.0
        %2986 = vmatpush1.xpose.msra.mxu0 0.0
        %2987 = vmatprep.subr.mxu0 0.0
        %2988 = vmatpush1.xpose.msra.mxu0 0.0
        %2989 = vmatprep.subr.mxu0 0.0
        %2990 = vmatpush1.xpose.msra.mxu0 0.0
        %2991 = vmatprep.subr.mxu0 0.0
        %2992 = vmatpush1.xpose.msra.mxu0 0.0
        %2993 = vmatprep.subr.mxu0 0.0
        %2994 = vmatpush1.xpose.msra.mxu0 0.0
        %2995 = vmatprep.subr.mxu0 0.0
        %2996 = vmatpush1.xpose.msra.mxu0 0.0
        %2997 = vmatprep.subr.mxu0 0.0
        %2998 = vmatpush1.xpose.msra.mxu0 0.0
        %2999 = vmatprep.subr.mxu0 0.0
        %3000 = vmatpush1.xpose.msra.mxu0 0.0
        %3001 = vmatprep.subr.mxu0 0.0
        %3002 = vmatpush1.xpose.msra.mxu0 0.0
        %3003 = vmatprep.subr.mxu0 0.0
        %3004 = vmatpush1.xpose.msra.mxu0 0.0
        %3005 = vmatprep.subr.mxu0 0.0
        %3006 = vmatpush1.xpose.msra.mxu0 0.0
        %3007 = vmatprep.subr.mxu0 0.0
        %3008 = vmatpush1.xpose.msra.mxu0 0.0
        %3009 = vmatprep.subr.mxu0 0.0
        %3010 = vmatpush1.xpose.msra.mxu0 0.0
        %3011 = vmatprep.subr.mxu0 0.0
        %3012 = vmatpush1.xpose.msra.mxu0 0.0
        %3013 = vmatprep.subr.mxu0 0.0
        %3014 = vmatpush1.xpose.msra.mxu0 0.0
        %3015 = vmatprep.mubr.f32.mxu0 0.0
        %3016 = vmatmul.mubr.f32.gmra.mrb[0].mxu0 %v2945
        %v3017 = vpop.f32.mrb[0].mxu0
        %v3018 = vadd.f32 0.0, %v3017
        %v3019 = vpop.f32.mrb[0].mxu0
        %3020 = vdwg.mxu0
        %v3022 = vsel %vm984, %v2681, 0
        %v3024 = vsel %vm984, %v2698, 0
        %v3026 = vsel %vm984, %v2700, 0
        %3028 = vmatprep.subr.mxu0 0.0
        %3029 = vmatpush1.xpose.msra.mxu0 %v3024
        %3030 = vmatprep.subr.mxu0 0.0
        %3031 = vmatpush1.xpose.msra.mxu0 %v3026
        %3032 = vmatprep.subr.mxu0 0.0
        %3033 = vmatpush1.xpose.msra.mxu0 0.0
        %3034 = vmatprep.subr.mxu0 0.0
        %3035 = vmatpush1.xpose.msra.mxu0 0.0
        %3036 = vmatprep.subr.mxu0 0.0
        %3037 = vmatpush1.xpose.msra.mxu0 0.0
        %3038 = vmatprep.subr.mxu0 0.0
        %3039 = vmatpush1.xpose.msra.mxu0 0.0
        %3040 = vmatprep.subr.mxu0 0.0
        %3041 = vmatpush1.xpose.msra.mxu0 0.0
        %3042 = vmatprep.subr.mxu0 0.0
        %3043 = vmatpush1.xpose.msra.mxu0 0.0
        %3044 = vmatprep.subr.mxu0 0.0
        %3045 = vmatpush1.xpose.msra.mxu0 0.0
        %3046 = vmatprep.subr.mxu0 0.0
        %3047 = vmatpush1.xpose.msra.mxu0 0.0
        %3048 = vmatprep.subr.mxu0 0.0
        %3049 = vmatpush1.xpose.msra.mxu0 0.0
        %3050 = vmatprep.subr.mxu0 0.0
        %3051 = vmatpush1.xpose.msra.mxu0 0.0
        %3052 = vmatprep.subr.mxu0 0.0
        %3053 = vmatpush1.xpose.msra.mxu0 0.0
        %3054 = vmatprep.subr.mxu0 0.0
        %3055 = vmatpush1.xpose.msra.mxu0 0.0
        %3056 = vmatprep.subr.mxu0 0.0
        %3057 = vmatpush1.xpose.msra.mxu0 0.0
        %3058 = vmatprep.subr.mxu0 0.0
        %3059 = vmatpush1.xpose.msra.mxu0 0.0
        %3060 = vmatprep.subr.mxu0 0.0
        %3061 = vmatpush1.xpose.msra.mxu0 0.0
        %3062 = vmatprep.subr.mxu0 0.0
        %3063 = vmatpush1.xpose.msra.mxu0 0.0
        %3064 = vmatprep.subr.mxu0 0.0
        %3065 = vmatpush1.xpose.msra.mxu0 0.0
        %3066 = vmatprep.subr.mxu0 0.0
        %3067 = vmatpush1.xpose.msra.mxu0 0.0
        %3068 = vmatprep.subr.mxu0 0.0
        %3069 = vmatpush1.xpose.msra.mxu0 0.0
        %3070 = vmatprep.subr.mxu0 0.0
        %3071 = vmatpush1.xpose.msra.mxu0 0.0
        %3072 = vmatprep.subr.mxu0 0.0
        %3073 = vmatpush1.xpose.msra.mxu0 0.0
        %3074 = vmatprep.subr.mxu0 0.0
        %3075 = vmatpush1.xpose.msra.mxu0 0.0
        %3076 = vmatprep.subr.mxu0 0.0
        %3077 = vmatpush1.xpose.msra.mxu0 0.0
        %3078 = vmatprep.subr.mxu0 0.0
        %3079 = vmatpush1.xpose.msra.mxu0 0.0
        %3080 = vmatprep.subr.mxu0 0.0
        %3081 = vmatpush1.xpose.msra.mxu0 0.0
        %3082 = vmatprep.subr.mxu0 0.0
        %3083 = vmatpush1.xpose.msra.mxu0 0.0
        %3084 = vmatprep.subr.mxu0 0.0
        %3085 = vmatpush1.xpose.msra.mxu0 0.0
        %3086 = vmatprep.subr.mxu0 0.0
        %3087 = vmatpush1.xpose.msra.mxu0 0.0
        %3088 = vmatprep.subr.mxu0 0.0
        %3089 = vmatpush1.xpose.msra.mxu0 0.0
        %3090 = vmatprep.subr.mxu0 0.0
        %3091 = vmatpush1.xpose.msra.mxu0 0.0
        %3092 = vmatprep.mubr.f32.mxu0 0.0
        %3093 = vmatmul.mubr.f32.gmra.mrb[0].mxu0 %v3022
        %v3094 = vpop.f32.mrb[0].mxu0
        %v3095 = vadd.f32 0.0, %v3094
        %v3096 = vpop.f32.mrb[0].mxu0
        %3097 = vdwg.mxu0
        %v3099 = vsel %vm984, %v2682, 0
        %v3101 = vsel %vm984, %v2702, 0
        %v3103 = vsel %vm984, %v2704, 0
        %3105 = vmatprep.subr.mxu0 0.0
        %3106 = vmatpush1.xpose.msra.mxu0 %v3101
        %3107 = vmatprep.subr.mxu0 0.0
        %3108 = vmatpush1.xpose.msra.mxu0 %v3103
        %3109 = vmatprep.subr.mxu0 0.0
        %3110 = vmatpush1.xpose.msra.mxu0 0.0
        %3111 = vmatprep.subr.mxu0 0.0
        %3112 = vmatpush1.xpose.msra.mxu0 0.0
        %3113 = vmatprep.subr.mxu0 0.0
        %3114 = vmatpush1.xpose.msra.mxu0 0.0
        %3115 = vmatprep.subr.mxu0 0.0
        %3116 = vmatpush1.xpose.msra.mxu0 0.0
        %3117 = vmatprep.subr.mxu0 0.0
        %3118 = vmatpush1.xpose.msra.mxu0 0.0
        %3119 = vmatprep.subr.mxu0 0.0
        %3120 = vmatpush1.xpose.msra.mxu0 0.0
        %3121 = vmatprep.subr.mxu0 0.0
        %3122 = vmatpush1.xpose.msra.mxu0 0.0
        %3123 = vmatprep.subr.mxu0 0.0
        %3124 = vmatpush1.xpose.msra.mxu0 0.0
        %3125 = vmatprep.subr.mxu0 0.0
        %3126 = vmatpush1.xpose.msra.mxu0 0.0
        %3127 = vmatprep.subr.mxu0 0.0
        %3128 = vmatpush1.xpose.msra.mxu0 0.0
        %3129 = vmatprep.subr.mxu0 0.0
        %3130 = vmatpush1.xpose.msra.mxu0 0.0
        %3131 = vmatprep.subr.mxu0 0.0
        %3132 = vmatpush1.xpose.msra.mxu0 0.0
        %3133 = vmatprep.subr.mxu0 0.0
        %3134 = vmatpush1.xpose.msra.mxu0 0.0
        %3135 = vmatprep.subr.mxu0 0.0
        %3136 = vmatpush1.xpose.msra.mxu0 0.0
        %3137 = vmatprep.subr.mxu0 0.0
        %3138 = vmatpush1.xpose.msra.mxu0 0.0
        %3139 = vmatprep.subr.mxu0 0.0
        %3140 = vmatpush1.xpose.msra.mxu0 0.0
        %3141 = vmatprep.subr.mxu0 0.0
        %3142 = vmatpush1.xpose.msra.mxu0 0.0
        %3143 = vmatprep.subr.mxu0 0.0
        %3144 = vmatpush1.xpose.msra.mxu0 0.0
        %3145 = vmatprep.subr.mxu0 0.0
        %3146 = vmatpush1.xpose.msra.mxu0 0.0
        %3147 = vmatprep.subr.mxu0 0.0
        %3148 = vmatpush1.xpose.msra.mxu0 0.0
        %3149 = vmatprep.subr.mxu0 0.0
        %3150 = vmatpush1.xpose.msra.mxu0 0.0
        %3151 = vmatprep.subr.mxu0 0.0
        %3152 = vmatpush1.xpose.msra.mxu0 0.0
        %3153 = vmatprep.subr.mxu0 0.0
        %3154 = vmatpush1.xpose.msra.mxu0 0.0
        %3155 = vmatprep.subr.mxu0 0.0
        %3156 = vmatpush1.xpose.msra.mxu0 0.0
        %3157 = vmatprep.subr.mxu0 0.0
        %3158 = vmatpush1.xpose.msra.mxu0 0.0
        %3159 = vmatprep.subr.mxu0 0.0
        %3160 = vmatpush1.xpose.msra.mxu0 0.0
        %3161 = vmatprep.subr.mxu0 0.0
        %3162 = vmatpush1.xpose.msra.mxu0 0.0
        %3163 = vmatprep.subr.mxu0 0.0
        %3164 = vmatpush1.xpose.msra.mxu0 0.0
        %3165 = vmatprep.subr.mxu0 0.0
        %3166 = vmatpush1.xpose.msra.mxu0 0.0
        %3167 = vmatprep.subr.mxu0 0.0
        %3168 = vmatpush1.xpose.msra.mxu0 0.0
        %3169 = vmatprep.mubr.f32.mxu0 0.0
        %3170 = vmatmul.mubr.f32.gmra.mrb[0].mxu0 %v3099
        %v3171 = vpop.f32.mrb[0].mxu0
        %v3172 = vadd.f32 0.0, %v3171
        %v3173 = vpop.f32.mrb[0].mxu0
        %3174 = vdwg.mxu0
        %v3176 = vsel %vm984, %v2683, 0
        %v3178 = vsel %vm984, %v2706, 0
        %v3180 = vsel %vm984, %v2708, 0
        %3182 = vmatprep.subr.mxu0 0.0
        %3183 = vmatpush1.xpose.msra.mxu0 %v3178
        %3184 = vmatprep.subr.mxu0 0.0
        %3185 = vmatpush1.xpose.msra.mxu0 %v3180
        %3186 = vmatprep.subr.mxu0 0.0
        %3187 = vmatpush1.xpose.msra.mxu0 0.0
        %3188 = vmatprep.subr.mxu0 0.0
        %3189 = vmatpush1.xpose.msra.mxu0 0.0
        %3190 = vmatprep.subr.mxu0 0.0
        %3191 = vmatpush1.xpose.msra.mxu0 0.0
        %3192 = vmatprep.subr.mxu0 0.0
        %3193 = vmatpush1.xpose.msra.mxu0 0.0
        %3194 = vmatprep.subr.mxu0 0.0
        %3195 = vmatpush1.xpose.msra.mxu0 0.0
        %3196 = vmatprep.subr.mxu0 0.0
        %3197 = vmatpush1.xpose.msra.mxu0 0.0
        %3198 = vmatprep.subr.mxu0 0.0
        %3199 = vmatpush1.xpose.msra.mxu0 0.0
        %3200 = vmatprep.subr.mxu0 0.0
        %3201 = vmatpush1.xpose.msra.mxu0 0.0
        %3202 = vmatprep.subr.mxu0 0.0
        %3203 = vmatpush1.xpose.msra.mxu0 0.0
        %3204 = vmatprep.subr.mxu0 0.0
        %3205 = vmatpush1.xpose.msra.mxu0 0.0
        %3206 = vmatprep.subr.mxu0 0.0
        %3207 = vmatpush1.xpose.msra.mxu0 0.0
        %3208 = vmatprep.subr.mxu0 0.0
        %3209 = vmatpush1.xpose.msra.mxu0 0.0
        %3210 = vmatprep.subr.mxu0 0.0
        %3211 = vmatpush1.xpose.msra.mxu0 0.0
        %3212 = vmatprep.subr.mxu0 0.0
        %3213 = vmatpush1.xpose.msra.mxu0 0.0
        %3214 = vmatprep.subr.mxu0 0.0
        %3215 = vmatpush1.xpose.msra.mxu0 0.0
        %3216 = vmatprep.subr.mxu0 0.0
        %3217 = vmatpush1.xpose.msra.mxu0 0.0
        %3218 = vmatprep.subr.mxu0 0.0
        %3219 = vmatpush1.xpose.msra.mxu0 0.0
        %3220 = vmatprep.subr.mxu0 0.0
        %3221 = vmatpush1.xpose.msra.mxu0 0.0
        %3222 = vmatprep.subr.mxu0 0.0
        %3223 = vmatpush1.xpose.msra.mxu0 0.0
        %3224 = vmatprep.subr.mxu0 0.0
        %3225 = vmatpush1.xpose.msra.mxu0 0.0
        %3226 = vmatprep.subr.mxu0 0.0
        %3227 = vmatpush1.xpose.msra.mxu0 0.0
        %3228 = vmatprep.subr.mxu0 0.0
        %3229 = vmatpush1.xpose.msra.mxu0 0.0
        %3230 = vmatprep.subr.mxu0 0.0
        %3231 = vmatpush1.xpose.msra.mxu0 0.0
        %3232 = vmatprep.subr.mxu0 0.0
        %3233 = vmatpush1.xpose.msra.mxu0 0.0
        %3234 = vmatprep.subr.mxu0 0.0
        %3235 = vmatpush1.xpose.msra.mxu0 0.0
        %3236 = vmatprep.subr.mxu0 0.0
        %3237 = vmatpush1.xpose.msra.mxu0 0.0
        %3238 = vmatprep.subr.mxu0 0.0
        %3239 = vmatpush1.xpose.msra.mxu0 0.0
        %3240 = vmatprep.subr.mxu0 0.0
        %3241 = vmatpush1.xpose.msra.mxu0 0.0
        %3242 = vmatprep.subr.mxu0 0.0
        %3243 = vmatpush1.xpose.msra.mxu0 0.0
        %3244 = vmatprep.subr.mxu0 0.0
        %3245 = vmatpush1.xpose.msra.mxu0 0.0
        %3246 = vmatprep.mubr.f32.mxu0 0.0
        %3247 = vmatmul.mubr.f32.gmra.mrb[0].mxu0 %v3176
        %v3248 = vpop.f32.mrb[0].mxu0
        %v3249 = vadd.f32 0.0, %v3248
        %v3250 = vpop.f32.mrb[0].mxu0
        %3251 = vdwg.mxu0
        %v3253 = vsel %vm984, %v2684, 0
        %v3255 = vsel %vm984, %v2710, 0
        %v3257 = vsel %vm984, %v2712, 0
        %3259 = vmatprep.subr.mxu0 0.0
        %3260 = vmatpush1.xpose.msra.mxu0 %v3255
        %3261 = vmatprep.subr.mxu0 0.0
        %3262 = vmatpush1.xpose.msra.mxu0 %v3257
        %3263 = vmatprep.subr.mxu0 0.0
        %3264 = vmatpush1.xpose.msra.mxu0 0.0
        %3265 = vmatprep.subr.mxu0 0.0
        %3266 = vmatpush1.xpose.msra.mxu0 0.0
        %3267 = vmatprep.subr.mxu0 0.0
        %3268 = vmatpush1.xpose.msra.mxu0 0.0
        %3269 = vmatprep.subr.mxu0 0.0
        %3270 = vmatpush1.xpose.msra.mxu0 0.0
        %3271 = vmatprep.subr.mxu0 0.0
        %3272 = vmatpush1.xpose.msra.mxu0 0.0
        %3273 = vmatprep.subr.mxu0 0.0
        %3274 = vmatpush1.xpose.msra.mxu0 0.0
        %3275 = vmatprep.subr.mxu0 0.0
        %3276 = vmatpush1.xpose.msra.mxu0 0.0
        %3277 = vmatprep.subr.mxu0 0.0
        %3278 = vmatpush1.xpose.msra.mxu0 0.0
        %3279 = vmatprep.subr.mxu0 0.0
        %3280 = vmatpush1.xpose.msra.mxu0 0.0
        %3281 = vmatprep.subr.mxu0 0.0
        %3282 = vmatpush1.xpose.msra.mxu0 0.0
        %3283 = vmatprep.subr.mxu0 0.0
        %3284 = vmatpush1.xpose.msra.mxu0 0.0
        %3285 = vmatprep.subr.mxu0 0.0
        %3286 = vmatpush1.xpose.msra.mxu0 0.0
        %3287 = vmatprep.subr.mxu0 0.0
        %3288 = vmatpush1.xpose.msra.mxu0 0.0
        %3289 = vmatprep.subr.mxu0 0.0
        %3290 = vmatpush1.xpose.msra.mxu0 0.0
        %3291 = vmatprep.subr.mxu0 0.0
        %3292 = vmatpush1.xpose.msra.mxu0 0.0
        %3293 = vmatprep.subr.mxu0 0.0
        %3294 = vmatpush1.xpose.msra.mxu0 0.0
        %3295 = vmatprep.subr.mxu0 0.0
        %3296 = vmatpush1.xpose.msra.mxu0 0.0
        %3297 = vmatprep.subr.mxu0 0.0
        %3298 = vmatpush1.xpose.msra.mxu0 0.0
        %3299 = vmatprep.subr.mxu0 0.0
        %3300 = vmatpush1.xpose.msra.mxu0 0.0
        %3301 = vmatprep.subr.mxu0 0.0
        %3302 = vmatpush1.xpose.msra.mxu0 0.0
        %3303 = vmatprep.subr.mxu0 0.0
        %3304 = vmatpush1.xpose.msra.mxu0 0.0
        %3305 = vmatprep.subr.mxu0 0.0
        %3306 = vmatpush1.xpose.msra.mxu0 0.0
        %3307 = vmatprep.subr.mxu0 0.0
        %3308 = vmatpush1.xpose.msra.mxu0 0.0
        %3309 = vmatprep.subr.mxu0 0.0
        %3310 = vmatpush1.xpose.msra.mxu0 0.0
        %3311 = vmatprep.subr.mxu0 0.0
        %3312 = vmatpush1.xpose.msra.mxu0 0.0
        %3313 = vmatprep.subr.mxu0 0.0
        %3314 = vmatpush1.xpose.msra.mxu0 0.0
        %3315 = vmatprep.subr.mxu0 0.0
        %3316 = vmatpush1.xpose.msra.mxu0 0.0
        %3317 = vmatprep.subr.mxu0 0.0
        %3318 = vmatpush1.xpose.msra.mxu0 0.0
        %3319 = vmatprep.subr.mxu0 0.0
        %3320 = vmatpush1.xpose.msra.mxu0 0.0
        %3321 = vmatprep.subr.mxu0 0.0
        %3322 = vmatpush1.xpose.msra.mxu0 0.0
        %3323 = vmatprep.mubr.f32.mxu0 0.0
        %3324 = vmatmul.mubr.f32.gmra.mrb[0].mxu0 %v3253
        %v3325 = vpop.f32.mrb[0].mxu0
        %v3326 = vadd.f32 0.0, %v3325
        %v3327 = vpop.f32.mrb[0].mxu0
        %3328 = vdwg.mxu0
        %v3329 = vsel %vm2321, %v2787, -inf
        %3330 = vmax.xlane.f32.xlu0 %v3329
        %v3331 = vpop.xlane.xlu0 %3330
        %v3332 = vsel %vm2321, %v2864, -inf
        %3333 = vmax.xlane.f32.xlu0 %v3332
        %v3334 = vpop.xlane.xlu0 %3333
        %v3335 = vsel %vm2321, %v2941, -inf
        %3336 = vmax.xlane.f32.xlu0 %v3335
        %v3337 = vpop.xlane.xlu0 %3336
        %v3338 = vsel %vm2321, %v3018, -inf
        %3339 = vmax.xlane.f32.xlu0 %v3338
        %v3340 = vpop.xlane.xlu0 %3339
        %v3341 = vsel %vm2321, %v3095, -inf
        %3342 = vmax.xlane.f32.xlu0 %v3341
        %v3343 = vpop.xlane.xlu0 %3342
        %v3344 = vsel %vm2321, %v3172, -inf
        %3345 = vmax.xlane.f32.xlu0 %v3344
        %v3346 = vpop.xlane.xlu0 %3345
        %v3347 = vsel %vm2321, %v3249, -inf
        %3348 = vmax.xlane.f32.xlu0 %v3347
        %v3349 = vpop.xlane.xlu0 %3348
        %v3350 = vsel %vm2321, %v3326, -inf
        %3351 = vmax.xlane.f32.xlu0 %v3350
        %v3352 = vpop.xlane.xlu0 %3351
        %v3353 = vsub.f32 %v2787, %v3331
        %v3354 = vsub.f32 %v2864, %v3334
        %v3355 = vsub.f32 %v2941, %v3337
        %v3356 = vsub.f32 %v3018, %v3340
        %v3357 = vsub.f32 %v3095, %v3343
        %v3358 = vsub.f32 %v3172, %v3346
        %v3359 = vsub.f32 %v3249, %v3349
        %v3360 = vsub.f32 %v3326, %v3352
        %v3361 = vmul.f32 %v3353, 1.442695
        %v3362 = vpow.pop %v3361
        %v3363 = vmul.f32 %v3354, 1.442695
        %v3364 = vpow.pop %v3363
        %v3365 = vmul.f32 %v3355, 1.442695
        %v3366 = vpow.pop %v3365
        %v3367 = vmul.f32 %v3356, 1.442695
        %v3368 = vpow.pop %v3367
        %v3369 = vmul.f32 %v3357, 1.442695
        %v3370 = vpow.pop %v3369
        %v3371 = vmul.f32 %v3358, 1.442695
        %v3372 = vpow.pop %v3371
        %v3373 = vmul.f32 %v3359, 1.442695
        %v3374 = vpow.pop %v3373
        %v3375 = vmul.f32 %v3360, 1.442695
        %v3376 = vpow.pop %v3375
        %v3377 = vsel %vm2321, %v3362, 0.0
        %3378 = vadd.xlane.f32.xlu0 %v3377
        %v3379 = vpop.xlane.xlu0 %3378
        %v3380 = vsel %vm2321, %v3364, 0.0
        %3381 = vadd.xlane.f32.xlu0 %v3380
        %v3382 = vpop.xlane.xlu0 %3381
        %v3383 = vsel %vm2321, %v3366, 0.0
        %3384 = vadd.xlane.f32.xlu0 %v3383
        %v3385 = vpop.xlane.xlu0 %3384
        %v3386 = vsel %vm2321, %v3368, 0.0
        %3387 = vadd.xlane.f32.xlu0 %v3386
        %v3388 = vpop.xlane.xlu0 %3387
        %v3389 = vsel %vm2321, %v3370, 0.0
        %3390 = vadd.xlane.f32.xlu0 %v3389
        %v3391 = vpop.xlane.xlu0 %3390
        %v3392 = vsel %vm2321, %v3372, 0.0
        %3393 = vadd.xlane.f32.xlu0 %v3392
        %v3394 = vpop.xlane.xlu0 %3393
        %v3395 = vsel %vm2321, %v3374, 0.0
        %3396 = vadd.xlane.f32.xlu0 %v3395
        %v3397 = vpop.xlane.xlu0 %3396
        %v3398 = vsel %vm2321, %v3376, 0.0
        %3399 = vadd.xlane.f32.xlu0 %v3398
        %v3400 = vpop.xlane.xlu0 %3399
        %v3401 = vrcp.pop %v3379
        %v3402 = vrcp.pop %v3382
        %v3403 = vrcp.pop %v3385
        %v3404 = vrcp.pop %v3388
        %v3405 = vrcp.pop %v3391
        %v3406 = vrcp.pop %v3394
        %v3407 = vrcp.pop %v3397
        %v3408 = vrcp.pop %v3400
        %v3409 = vmul.f32 %v3362, %v3401
        %v3410 = vmul.f32 %v3364, %v3402
        %v3411 = vmul.f32 %v3366, %v3403
        %v3412 = vmul.f32 %v3368, %v3404
        %v3413 = vmul.f32 %v3370, %v3405
        %v3414 = vmul.f32 %v3372, %v3406
        %v3415 = vmul.f32 %v3374, %v3407
        %v3416 = vmul.f32 %v3376, %v3408
        %3417 = vrot.lane.b32.xlu0 %v2634, 96
        %v3418 = vpop.permute.xlu0 %3417
        %3419 = vrot.lane.b32.xlu0 %v2639, 96
        %v3420 = vpop.permute.xlu0 %3419
        %v3424 = vsel %vm2321, %v3409, 0
        %3426 = vmatprep.subr.mxu0 0.0
        %3427 = vmatpush1.msra.mxu0 %v3418
        %3428 = vmatprep.subr.mxu0 0.0
        %3429 = vmatpush1.msra.mxu0 %v3420
        %3430 = vmatprep.subr.mxu0 0.0
        %3431 = vmatpush1.msra.mxu0 0.0
        %3432 = vmatprep.subr.mxu0 0.0
        %3433 = vmatpush1.msra.mxu0 0.0
        %3434 = vmatprep.subr.mxu0 0.0
        %3435 = vmatpush1.msra.mxu0 0.0
        %3436 = vmatprep.subr.mxu0 0.0
        %3437 = vmatpush1.msra.mxu0 0.0
        %3438 = vmatprep.subr.mxu0 0.0
        %3439 = vmatpush1.msra.mxu0 0.0
        %3440 = vmatprep.subr.mxu0 0.0
        %3441 = vmatpush1.msra.mxu0 0.0
        %3442 = vmatprep.subr.mxu0 0.0
        %3443 = vmatpush1.msra.mxu0 0.0
        %3444 = vmatprep.subr.mxu0 0.0
        %3445 = vmatpush1.msra.mxu0 0.0
        %3446 = vmatprep.subr.mxu0 0.0
        %3447 = vmatpush1.msra.mxu0 0.0
        %3448 = vmatprep.subr.mxu0 0.0
        %3449 = vmatpush1.msra.mxu0 0.0
        %3450 = vmatprep.subr.mxu0 0.0
        %3451 = vmatpush1.msra.mxu0 0.0
        %3452 = vmatprep.subr.mxu0 0.0
        %3453 = vmatpush1.msra.mxu0 0.0
        %3454 = vmatprep.subr.mxu0 0.0
        %3455 = vmatpush1.msra.mxu0 0.0
        %3456 = vmatprep.subr.mxu0 0.0
        %3457 = vmatpush1.msra.mxu0 0.0
        %3458 = vmatprep.subr.mxu0 0.0
        %3459 = vmatpush1.msra.mxu0 0.0
        %3460 = vmatprep.subr.mxu0 0.0
        %3461 = vmatpush1.msra.mxu0 0.0
        %3462 = vmatprep.subr.mxu0 0.0
        %3463 = vmatpush1.msra.mxu0 0.0
        %3464 = vmatprep.subr.mxu0 0.0
        %3465 = vmatpush1.msra.mxu0 0.0
        %3466 = vmatprep.subr.mxu0 0.0
        %3467 = vmatpush1.msra.mxu0 0.0
        %3468 = vmatprep.subr.mxu0 0.0
        %3469 = vmatpush1.msra.mxu0 0.0
        %3470 = vmatprep.subr.mxu0 0.0
        %3471 = vmatpush1.msra.mxu0 0.0
        %3472 = vmatprep.subr.mxu0 0.0
        %3473 = vmatpush1.msra.mxu0 0.0
        %3474 = vmatprep.subr.mxu0 0.0
        %3475 = vmatpush1.msra.mxu0 0.0
        %3476 = vmatprep.subr.mxu0 0.0
        %3477 = vmatpush1.msra.mxu0 0.0
        %3478 = vmatprep.subr.mxu0 0.0
        %3479 = vmatpush1.msra.mxu0 0.0
        %3480 = vmatprep.subr.mxu0 0.0
        %3481 = vmatpush1.msra.mxu0 0.0
        %3482 = vmatprep.subr.mxu0 0.0
        %3483 = vmatpush1.msra.mxu0 0.0
        %3484 = vmatprep.subr.mxu0 0.0
        %3485 = vmatpush1.msra.mxu0 0.0
        %3486 = vmatprep.subr.mxu0 0.0
        %3487 = vmatpush1.msra.mxu0 0.0
        %3488 = vmatprep.subr.mxu0 0.0
        %3489 = vmatpush1.msra.mxu0 0.0
        %3490 = vmatprep.mubr.f32.mxu0 0.0
        %3491 = vmatmul.mubr.f32.gmra.mrb[0].mxu0 %v3424
        %v3492 = vpop.f32.mrb[0].mxu0
        %v3493 = vadd.f32 0.0, %v3492
        %v3494 = vpop.f32.mrb[0].mxu0
        %3495 = vdwg.mxu0
        %3496 = vrot.lane.b32.xlu0 %v2644, 96
        %v3497 = vpop.permute.xlu0 %3496
        %3498 = vrot.lane.b32.xlu0 %v2649, 96
        %v3499 = vpop.permute.xlu0 %3498
        %v3503 = vsel %vm2321, %v3410, 0
        %3505 = vmatprep.subr.mxu0 0.0
        %3506 = vmatpush1.msra.mxu0 %v3497
        %3507 = vmatprep.subr.mxu0 0.0
        %3508 = vmatpush1.msra.mxu0 %v3499
        %3509 = vmatprep.subr.mxu0 0.0
        %3510 = vmatpush1.msra.mxu0 0.0
        %3511 = vmatprep.subr.mxu0 0.0
        %3512 = vmatpush1.msra.mxu0 0.0
        %3513 = vmatprep.subr.mxu0 0.0
        %3514 = vmatpush1.msra.mxu0 0.0
        %3515 = vmatprep.subr.mxu0 0.0
        %3516 = vmatpush1.msra.mxu0 0.0
        %3517 = vmatprep.subr.mxu0 0.0
        %3518 = vmatpush1.msra.mxu0 0.0
        %3519 = vmatprep.subr.mxu0 0.0
        %3520 = vmatpush1.msra.mxu0 0.0
        %3521 = vmatprep.subr.mxu0 0.0
        %3522 = vmatpush1.msra.mxu0 0.0
        %3523 = vmatprep.subr.mxu0 0.0
        %3524 = vmatpush1.msra.mxu0 0.0
        %3525 = vmatprep.subr.mxu0 0.0
        %3526 = vmatpush1.msra.mxu0 0.0
        %3527 = vmatprep.subr.mxu0 0.0
        %3528 = vmatpush1.msra.mxu0 0.0
        %3529 = vmatprep.subr.mxu0 0.0
        %3530 = vmatpush1.msra.mxu0 0.0
        %3531 = vmatprep.subr.mxu0 0.0
        %3532 = vmatpush1.msra.mxu0 0.0
        %3533 = vmatprep.subr.mxu0 0.0
        %3534 = vmatpush1.msra.mxu0 0.0
        %3535 = vmatprep.subr.mxu0 0.0
        %3536 = vmatpush1.msra.mxu0 0.0
        %3537 = vmatprep.subr.mxu0 0.0
        %3538 = vmatpush1.msra.mxu0 0.0
        %3539 = vmatprep.subr.mxu0 0.0
        %3540 = vmatpush1.msra.mxu0 0.0
        %3541 = vmatprep.subr.mxu0 0.0
        %3542 = vmatpush1.msra.mxu0 0.0
        %3543 = vmatprep.subr.mxu0 0.0
        %3544 = vmatpush1.msra.mxu0 0.0
        %3545 = vmatprep.subr.mxu0 0.0
        %3546 = vmatpush1.msra.mxu0 0.0
        %3547 = vmatprep.subr.mxu0 0.0
        %3548 = vmatpush1.msra.mxu0 0.0
        %3549 = vmatprep.subr.mxu0 0.0
        %3550 = vmatpush1.msra.mxu0 0.0
        %3551 = vmatprep.subr.mxu0 0.0
        %3552 = vmatpush1.msra.mxu0 0.0
        %3553 = vmatprep.subr.mxu0 0.0
        %3554 = vmatpush1.msra.mxu0 0.0
        %3555 = vmatprep.subr.mxu0 0.0
        %3556 = vmatpush1.msra.mxu0 0.0
        %3557 = vmatprep.subr.mxu0 0.0
        %3558 = vmatpush1.msra.mxu0 0.0
        %3559 = vmatprep.subr.mxu0 0.0
        %3560 = vmatpush1.msra.mxu0 0.0
        %3561 = vmatprep.subr.mxu0 0.0
        %3562 = vmatpush1.msra.mxu0 0.0
        %3563 = vmatprep.subr.mxu0 0.0
        %3564 = vmatpush1.msra.mxu0 0.0
        %3565 = vmatprep.subr.mxu0 0.0
        %3566 = vmatpush1.msra.mxu0 0.0
        %3567 = vmatprep.subr.mxu0 0.0
        %3568 = vmatpush1.msra.mxu0 0.0
        %3569 = vmatprep.mubr.f32.mxu0 0.0
        %3570 = vmatmul.mubr.f32.gmra.mrb[0].mxu0 %v3503
        %v3571 = vpop.f32.mrb[0].mxu0
        %v3572 = vadd.f32 0.0, %v3571
        %v3573 = vpop.f32.mrb[0].mxu0
        %3574 = vdwg.mxu0
        %3575 = vrot.lane.b32.xlu0 %v2690, 96
        %v3576 = vpop.permute.xlu0 %3575
        %3577 = vrot.lane.b32.xlu0 %v2692, 96
        %v3578 = vpop.permute.xlu0 %3577
        %v3582 = vsel %vm2321, %v3411, 0
        %3584 = vmatprep.subr.mxu0 0.0
        %3585 = vmatpush1.msra.mxu0 %v3576
        %3586 = vmatprep.subr.mxu0 0.0
        %3587 = vmatpush1.msra.mxu0 %v3578
        %3588 = vmatprep.subr.mxu0 0.0
        %3589 = vmatpush1.msra.mxu0 0.0
        %3590 = vmatprep.subr.mxu0 0.0
        %3591 = vmatpush1.msra.mxu0 0.0
        %3592 = vmatprep.subr.mxu0 0.0
        %3593 = vmatpush1.msra.mxu0 0.0
        %3594 = vmatprep.subr.mxu0 0.0
        %3595 = vmatpush1.msra.mxu0 0.0
        %3596 = vmatprep.subr.mxu0 0.0
        %3597 = vmatpush1.msra.mxu0 0.0
        %3598 = vmatprep.subr.mxu0 0.0
        %3599 = vmatpush1.msra.mxu0 0.0
        %3600 = vmatprep.subr.mxu0 0.0
        %3601 = vmatpush1.msra.mxu0 0.0
        %3602 = vmatprep.subr.mxu0 0.0
        %3603 = vmatpush1.msra.mxu0 0.0
        %3604 = vmatprep.subr.mxu0 0.0
        %3605 = vmatpush1.msra.mxu0 0.0
        %3606 = vmatprep.subr.mxu0 0.0
        %3607 = vmatpush1.msra.mxu0 0.0
        %3608 = vmatprep.subr.mxu0 0.0
        %3609 = vmatpush1.msra.mxu0 0.0
        %3610 = vmatprep.subr.mxu0 0.0
        %3611 = vmatpush1.msra.mxu0 0.0
        %3612 = vmatprep.subr.mxu0 0.0
        %3613 = vmatpush1.msra.mxu0 0.0
        %3614 = vmatprep.subr.mxu0 0.0
        %3615 = vmatpush1.msra.mxu0 0.0
        %3616 = vmatprep.subr.mxu0 0.0
        %3617 = vmatpush1.msra.mxu0 0.0
        %3618 = vmatprep.subr.mxu0 0.0
        %3619 = vmatpush1.msra.mxu0 0.0
        %3620 = vmatprep.subr.mxu0 0.0
        %3621 = vmatpush1.msra.mxu0 0.0
        %3622 = vmatprep.subr.mxu0 0.0
        %3623 = vmatpush1.msra.mxu0 0.0
        %3624 = vmatprep.subr.mxu0 0.0
        %3625 = vmatpush1.msra.mxu0 0.0
        %3626 = vmatprep.subr.mxu0 0.0
        %3627 = vmatpush1.msra.mxu0 0.0
        %3628 = vmatprep.subr.mxu0 0.0
        %3629 = vmatpush1.msra.mxu0 0.0
        %3630 = vmatprep.subr.mxu0 0.0
        %3631 = vmatpush1.msra.mxu0 0.0
        %3632 = vmatprep.subr.mxu0 0.0
        %3633 = vmatpush1.msra.mxu0 0.0
        %3634 = vmatprep.subr.mxu0 0.0
        %3635 = vmatpush1.msra.mxu0 0.0
        %3636 = vmatprep.subr.mxu0 0.0
        %3637 = vmatpush1.msra.mxu0 0.0
        %3638 = vmatprep.subr.mxu0 0.0
        %3639 = vmatpush1.msra.mxu0 0.0
        %3640 = vmatprep.subr.mxu0 0.0
        %3641 = vmatpush1.msra.mxu0 0.0
        %3642 = vmatprep.subr.mxu0 0.0
        %3643 = vmatpush1.msra.mxu0 0.0
        %3644 = vmatprep.subr.mxu0 0.0
        %3645 = vmatpush1.msra.mxu0 0.0
        %3646 = vmatprep.subr.mxu0 0.0
        %3647 = vmatpush1.msra.mxu0 0.0
        %3648 = vmatprep.mubr.f32.mxu0 0.0
        %3649 = vmatmul.mubr.f32.gmra.mrb[0].mxu0 %v3582
        %v3650 = vpop.f32.mrb[0].mxu0
        %v3651 = vadd.f32 0.0, %v3650
        %v3652 = vpop.f32.mrb[0].mxu0
        %3653 = vdwg.mxu0
        %3654 = vrot.lane.b32.xlu0 %v2694, 96
        %v3655 = vpop.permute.xlu0 %3654
        %3656 = vrot.lane.b32.xlu0 %v2696, 96
        %v3657 = vpop.permute.xlu0 %3656
        %v3661 = vsel %vm2321, %v3412, 0
        %3663 = vmatprep.subr.mxu0 0.0
        %3664 = vmatpush1.msra.mxu0 %v3655
        %3665 = vmatprep.subr.mxu0 0.0
        %3666 = vmatpush1.msra.mxu0 %v3657
        %3667 = vmatprep.subr.mxu0 0.0
        %3668 = vmatpush1.msra.mxu0 0.0
        %3669 = vmatprep.subr.mxu0 0.0
        %3670 = vmatpush1.msra.mxu0 0.0
        %3671 = vmatprep.subr.mxu0 0.0
        %3672 = vmatpush1.msra.mxu0 0.0
        %3673 = vmatprep.subr.mxu0 0.0
        %3674 = vmatpush1.msra.mxu0 0.0
        %3675 = vmatprep.subr.mxu0 0.0
        %3676 = vmatpush1.msra.mxu0 0.0
        %3677 = vmatprep.subr.mxu0 0.0
        %3678 = vmatpush1.msra.mxu0 0.0
        %3679 = vmatprep.subr.mxu0 0.0
        %3680 = vmatpush1.msra.mxu0 0.0
        %3681 = vmatprep.subr.mxu0 0.0
        %3682 = vmatpush1.msra.mxu0 0.0
        %3683 = vmatprep.subr.mxu0 0.0
        %3684 = vmatpush1.msra.mxu0 0.0
        %3685 = vmatprep.subr.mxu0 0.0
        %3686 = vmatpush1.msra.mxu0 0.0
        %3687 = vmatprep.subr.mxu0 0.0
        %3688 = vmatpush1.msra.mxu0 0.0
        %3689 = vmatprep.subr.mxu0 0.0
        %3690 = vmatpush1.msra.mxu0 0.0
        %3691 = vmatprep.subr.mxu0 0.0
        %3692 = vmatpush1.msra.mxu0 0.0
        %3693 = vmatprep.subr.mxu0 0.0
        %3694 = vmatpush1.msra.mxu0 0.0
        %3695 = vmatprep.subr.mxu0 0.0
        %3696 = vmatpush1.msra.mxu0 0.0
        %3697 = vmatprep.subr.mxu0 0.0
        %3698 = vmatpush1.msra.mxu0 0.0
        %3699 = vmatprep.subr.mxu0 0.0
        %3700 = vmatpush1.msra.mxu0 0.0
        %3701 = vmatprep.subr.mxu0 0.0
        %3702 = vmatpush1.msra.mxu0 0.0
        %3703 = vmatprep.subr.mxu0 0.0
        %3704 = vmatpush1.msra.mxu0 0.0
        %3705 = vmatprep.subr.mxu0 0.0
        %3706 = vmatpush1.msra.mxu0 0.0
        %3707 = vmatprep.subr.mxu0 0.0
        %3708 = vmatpush1.msra.mxu0 0.0
        %3709 = vmatprep.subr.mxu0 0.0
        %3710 = vmatpush1.msra.mxu0 0.0
        %3711 = vmatprep.subr.mxu0 0.0
        %3712 = vmatpush1.msra.mxu0 0.0
        %3713 = vmatprep.subr.mxu0 0.0
        %3714 = vmatpush1.msra.mxu0 0.0
        %3715 = vmatprep.subr.mxu0 0.0
        %3716 = vmatpush1.msra.mxu0 0.0
        %3717 = vmatprep.subr.mxu0 0.0
        %3718 = vmatpush1.msra.mxu0 0.0
        %3719 = vmatprep.subr.mxu0 0.0
        %3720 = vmatpush1.msra.mxu0 0.0
        %3721 = vmatprep.subr.mxu0 0.0
        %3722 = vmatpush1.msra.mxu0 0.0
        %3723 = vmatprep.subr.mxu0 0.0
        %3724 = vmatpush1.msra.mxu0 0.0
        %3725 = vmatprep.subr.mxu0 0.0
        %3726 = vmatpush1.msra.mxu0 0.0
        %3727 = vmatprep.mubr.f32.mxu0 0.0
        %3728 = vmatmul.mubr.f32.gmra.mrb[0].mxu0 %v3661
        %v3729 = vpop.f32.mrb[0].mxu0
        %v3730 = vadd.f32 0.0, %v3729
        %v3731 = vpop.f32.mrb[0].mxu0
        %3732 = vdwg.mxu0
        %3733 = vrot.lane.b32.xlu0 %v2698, 96
        %v3734 = vpop.permute.xlu0 %3733
        %3735 = vrot.lane.b32.xlu0 %v2700, 96
        %v3736 = vpop.permute.xlu0 %3735
        %v3740 = vsel %vm2321, %v3413, 0
        %3742 = vmatprep.subr.mxu0 0.0
        %3743 = vmatpush1.msra.mxu0 %v3734
        %3744 = vmatprep.subr.mxu0 0.0
        %3745 = vmatpush1.msra.mxu0 %v3736
        %3746 = vmatprep.subr.mxu0 0.0
        %3747 = vmatpush1.msra.mxu0 0.0
        %3748 = vmatprep.subr.mxu0 0.0
        %3749 = vmatpush1.msra.mxu0 0.0
        %3750 = vmatprep.subr.mxu0 0.0
        %3751 = vmatpush1.msra.mxu0 0.0
        %3752 = vmatprep.subr.mxu0 0.0
        %3753 = vmatpush1.msra.mxu0 0.0
        %3754 = vmatprep.subr.mxu0 0.0
        %3755 = vmatpush1.msra.mxu0 0.0
        %3756 = vmatprep.subr.mxu0 0.0
        %3757 = vmatpush1.msra.mxu0 0.0
        %3758 = vmatprep.subr.mxu0 0.0
        %3759 = vmatpush1.msra.mxu0 0.0
        %3760 = vmatprep.subr.mxu0 0.0
        %3761 = vmatpush1.msra.mxu0 0.0
        %3762 = vmatprep.subr.mxu0 0.0
        %3763 = vmatpush1.msra.mxu0 0.0
        %3764 = vmatprep.subr.mxu0 0.0
        %3765 = vmatpush1.msra.mxu0 0.0
        %3766 = vmatprep.subr.mxu0 0.0
        %3767 = vmatpush1.msra.mxu0 0.0
        %3768 = vmatprep.subr.mxu0 0.0
        %3769 = vmatpush1.msra.mxu0 0.0
        %3770 = vmatprep.subr.mxu0 0.0
        %3771 = vmatpush1.msra.mxu0 0.0
        %3772 = vmatprep.subr.mxu0 0.0
        %3773 = vmatpush1.msra.mxu0 0.0
        %3774 = vmatprep.subr.mxu0 0.0
        %3775 = vmatpush1.msra.mxu0 0.0
        %3776 = vmatprep.subr.mxu0 0.0
        %3777 = vmatpush1.msra.mxu0 0.0
        %3778 = vmatprep.subr.mxu0 0.0
        %3779 = vmatpush1.msra.mxu0 0.0
        %3780 = vmatprep.subr.mxu0 0.0
        %3781 = vmatpush1.msra.mxu0 0.0
        %3782 = vmatprep.subr.mxu0 0.0
        %3783 = vmatpush1.msra.mxu0 0.0
        %3784 = vmatprep.subr.mxu0 0.0
        %3785 = vmatpush1.msra.mxu0 0.0
        %3786 = vmatprep.subr.mxu0 0.0
        %3787 = vmatpush1.msra.mxu0 0.0
        %3788 = vmatprep.subr.mxu0 0.0
        %3789 = vmatpush1.msra.mxu0 0.0
        %3790 = vmatprep.subr.mxu0 0.0
        %3791 = vmatpush1.msra.mxu0 0.0
        %3792 = vmatprep.subr.mxu0 0.0
        %3793 = vmatpush1.msra.mxu0 0.0
        %3794 = vmatprep.subr.mxu0 0.0
        %3795 = vmatpush1.msra.mxu0 0.0
        %3796 = vmatprep.subr.mxu0 0.0
        %3797 = vmatpush1.msra.mxu0 0.0
        %3798 = vmatprep.subr.mxu0 0.0
        %3799 = vmatpush1.msra.mxu0 0.0
        %3800 = vmatprep.subr.mxu0 0.0
        %3801 = vmatpush1.msra.mxu0 0.0
        %3802 = vmatprep.subr.mxu0 0.0
        %3803 = vmatpush1.msra.mxu0 0.0
        %3804 = vmatprep.subr.mxu0 0.0
        %3805 = vmatpush1.msra.mxu0 0.0
        %3806 = vmatprep.mubr.f32.mxu0 0.0
        %3807 = vmatmul.mubr.f32.gmra.mrb[0].mxu0 %v3740
        %v3808 = vpop.f32.mrb[0].mxu0
        %v3809 = vadd.f32 0.0, %v3808
        %v3810 = vpop.f32.mrb[0].mxu0
        %3811 = vdwg.mxu0
        %3812 = vrot.lane.b32.xlu0 %v2702, 96
        %v3813 = vpop.permute.xlu0 %3812
        %3814 = vrot.lane.b32.xlu0 %v2704, 96
        %v3815 = vpop.permute.xlu0 %3814
        %v3819 = vsel %vm2321, %v3414, 0
        %3821 = vmatprep.subr.mxu0 0.0
        %3822 = vmatpush1.msra.mxu0 %v3813
        %3823 = vmatprep.subr.mxu0 0.0
        %3824 = vmatpush1.msra.mxu0 %v3815
        %3825 = vmatprep.subr.mxu0 0.0
        %3826 = vmatpush1.msra.mxu0 0.0
        %3827 = vmatprep.subr.mxu0 0.0
        %3828 = vmatpush1.msra.mxu0 0.0
        %3829 = vmatprep.subr.mxu0 0.0
        %3830 = vmatpush1.msra.mxu0 0.0
        %3831 = vmatprep.subr.mxu0 0.0
        %3832 = vmatpush1.msra.mxu0 0.0
        %3833 = vmatprep.subr.mxu0 0.0
        %3834 = vmatpush1.msra.mxu0 0.0
        %3835 = vmatprep.subr.mxu0 0.0
        %3836 = vmatpush1.msra.mxu0 0.0
        %3837 = vmatprep.subr.mxu0 0.0
        %3838 = vmatpush1.msra.mxu0 0.0
        %3839 = vmatprep.subr.mxu0 0.0
        %3840 = vmatpush1.msra.mxu0 0.0
        %3841 = vmatprep.subr.mxu0 0.0
        %3842 = vmatpush1.msra.mxu0 0.0
        %3843 = vmatprep.subr.mxu0 0.0
        %3844 = vmatpush1.msra.mxu0 0.0
        %3845 = vmatprep.subr.mxu0 0.0
        %3846 = vmatpush1.msra.mxu0 0.0
        %3847 = vmatprep.subr.mxu0 0.0
        %3848 = vmatpush1.msra.mxu0 0.0
        %3849 = vmatprep.subr.mxu0 0.0
        %3850 = vmatpush1.msra.mxu0 0.0
        %3851 = vmatprep.subr.mxu0 0.0
        %3852 = vmatpush1.msra.mxu0 0.0
        %3853 = vmatprep.subr.mxu0 0.0
        %3854 = vmatpush1.msra.mxu0 0.0
        %3855 = vmatprep.subr.mxu0 0.0
        %3856 = vmatpush1.msra.mxu0 0.0
        %3857 = vmatprep.subr.mxu0 0.0
        %3858 = vmatpush1.msra.mxu0 0.0
        %3859 = vmatprep.subr.mxu0 0.0
        %3860 = vmatpush1.msra.mxu0 0.0
        %3861 = vmatprep.subr.mxu0 0.0
        %3862 = vmatpush1.msra.mxu0 0.0
        %3863 = vmatprep.subr.mxu0 0.0
        %3864 = vmatpush1.msra.mxu0 0.0
        %3865 = vmatprep.subr.mxu0 0.0
        %3866 = vmatpush1.msra.mxu0 0.0
        %3867 = vmatprep.subr.mxu0 0.0
        %3868 = vmatpush1.msra.mxu0 0.0
        %3869 = vmatprep.subr.mxu0 0.0
        %3870 = vmatpush1.msra.mxu0 0.0
        %3871 = vmatprep.subr.mxu0 0.0
        %3872 = vmatpush1.msra.mxu0 0.0
        %3873 = vmatprep.subr.mxu0 0.0
        %3874 = vmatpush1.msra.mxu0 0.0
        %3875 = vmatprep.subr.mxu0 0.0
        %3876 = vmatpush1.msra.mxu0 0.0
        %3877 = vmatprep.subr.mxu0 0.0
        %3878 = vmatpush1.msra.mxu0 0.0
        %3879 = vmatprep.subr.mxu0 0.0
        %3880 = vmatpush1.msra.mxu0 0.0
        %3881 = vmatprep.subr.mxu0 0.0
        %3882 = vmatpush1.msra.mxu0 0.0
        %3883 = vmatprep.subr.mxu0 0.0
        %3884 = vmatpush1.msra.mxu0 0.0
        %3885 = vmatprep.mubr.f32.mxu0 0.0
        %3886 = vmatmul.mubr.f32.gmra.mrb[0].mxu0 %v3819
        %v3887 = vpop.f32.mrb[0].mxu0
        %v3888 = vadd.f32 0.0, %v3887
        %v3889 = vpop.f32.mrb[0].mxu0
        %3890 = vdwg.mxu0
        %3891 = vrot.lane.b32.xlu0 %v2706, 96
        %v3892 = vpop.permute.xlu0 %3891
        %3893 = vrot.lane.b32.xlu0 %v2708, 96
        %v3894 = vpop.permute.xlu0 %3893
        %v3898 = vsel %vm2321, %v3415, 0
        %3900 = vmatprep.subr.mxu0 0.0
        %3901 = vmatpush1.msra.mxu0 %v3892
        %3902 = vmatprep.subr.mxu0 0.0
        %3903 = vmatpush1.msra.mxu0 %v3894
        %3904 = vmatprep.subr.mxu0 0.0
        %3905 = vmatpush1.msra.mxu0 0.0
        %3906 = vmatprep.subr.mxu0 0.0
        %3907 = vmatpush1.msra.mxu0 0.0
        %3908 = vmatprep.subr.mxu0 0.0
        %3909 = vmatpush1.msra.mxu0 0.0
        %3910 = vmatprep.subr.mxu0 0.0
        %3911 = vmatpush1.msra.mxu0 0.0
        %3912 = vmatprep.subr.mxu0 0.0
        %3913 = vmatpush1.msra.mxu0 0.0
        %3914 = vmatprep.subr.mxu0 0.0
        %3915 = vmatpush1.msra.mxu0 0.0
        %3916 = vmatprep.subr.mxu0 0.0
        %3917 = vmatpush1.msra.mxu0 0.0
        %3918 = vmatprep.subr.mxu0 0.0
        %3919 = vmatpush1.msra.mxu0 0.0
        %3920 = vmatprep.subr.mxu0 0.0
        %3921 = vmatpush1.msra.mxu0 0.0
        %3922 = vmatprep.subr.mxu0 0.0
        %3923 = vmatpush1.msra.mxu0 0.0
        %3924 = vmatprep.subr.mxu0 0.0
        %3925 = vmatpush1.msra.mxu0 0.0
        %3926 = vmatprep.subr.mxu0 0.0
        %3927 = vmatpush1.msra.mxu0 0.0
        %3928 = vmatprep.subr.mxu0 0.0
        %3929 = vmatpush1.msra.mxu0 0.0
        %3930 = vmatprep.subr.mxu0 0.0
        %3931 = vmatpush1.msra.mxu0 0.0
        %3932 = vmatprep.subr.mxu0 0.0
        %3933 = vmatpush1.msra.mxu0 0.0
        %3934 = vmatprep.subr.mxu0 0.0
        %3935 = vmatpush1.msra.mxu0 0.0
        %3936 = vmatprep.subr.mxu0 0.0
        %3937 = vmatpush1.msra.mxu0 0.0
        %3938 = vmatprep.subr.mxu0 0.0
        %3939 = vmatpush1.msra.mxu0 0.0
        %3940 = vmatprep.subr.mxu0 0.0
        %3941 = vmatpush1.msra.mxu0 0.0
        %3942 = vmatprep.subr.mxu0 0.0
        %3943 = vmatpush1.msra.mxu0 0.0
        %3944 = vmatprep.subr.mxu0 0.0
        %3945 = vmatpush1.msra.mxu0 0.0
        %3946 = vmatprep.subr.mxu0 0.0
        %3947 = vmatpush1.msra.mxu0 0.0
        %3948 = vmatprep.subr.mxu0 0.0
        %3949 = vmatpush1.msra.mxu0 0.0
        %3950 = vmatprep.subr.mxu0 0.0
        %3951 = vmatpush1.msra.mxu0 0.0
        %3952 = vmatprep.subr.mxu0 0.0
        %3953 = vmatpush1.msra.mxu0 0.0
        %3954 = vmatprep.subr.mxu0 0.0
        %3955 = vmatpush1.msra.mxu0 0.0
        %3956 = vmatprep.subr.mxu0 0.0
        %3957 = vmatpush1.msra.mxu0 0.0
        %3958 = vmatprep.subr.mxu0 0.0
        %3959 = vmatpush1.msra.mxu0 0.0
        %3960 = vmatprep.subr.mxu0 0.0
        %3961 = vmatpush1.msra.mxu0 0.0
        %3962 = vmatprep.subr.mxu0 0.0
        %3963 = vmatpush1.msra.mxu0 0.0
        %3964 = vmatprep.mubr.f32.mxu0 0.0
        %3965 = vmatmul.mubr.f32.gmra.mrb[0].mxu0 %v3898
        %v3966 = vpop.f32.mrb[0].mxu0
        %v3967 = vadd.f32 0.0, %v3966
        %v3968 = vpop.f32.mrb[0].mxu0
        %3969 = vdwg.mxu0
        %3970 = vrot.lane.b32.xlu0 %v2710, 96
        %v3971 = vpop.permute.xlu0 %3970
        %3972 = vrot.lane.b32.xlu0 %v2712, 96
        %v3973 = vpop.permute.xlu0 %3972
        %v3977 = vsel %vm2321, %v3416, 0
        %3979 = vmatprep.subr.mxu0 0.0
        %3980 = vmatpush1.msra.mxu0 %v3971
        %3981 = vmatprep.subr.mxu0 0.0
        %3982 = vmatpush1.msra.mxu0 %v3973
        %3983 = vmatprep.subr.mxu0 0.0
        %3984 = vmatpush1.msra.mxu0 0.0
        %3985 = vmatprep.subr.mxu0 0.0
        %3986 = vmatpush1.msra.mxu0 0.0
        %3987 = vmatprep.subr.mxu0 0.0
        %3988 = vmatpush1.msra.mxu0 0.0
        %3989 = vmatprep.subr.mxu0 0.0
        %3990 = vmatpush1.msra.mxu0 0.0
        %3991 = vmatprep.subr.mxu0 0.0
        %3992 = vmatpush1.msra.mxu0 0.0
        %3993 = vmatprep.subr.mxu0 0.0
        %3994 = vmatpush1.msra.mxu0 0.0
        %3995 = vmatprep.subr.mxu0 0.0
        %3996 = vmatpush1.msra.mxu0 0.0
        %3997 = vmatprep.subr.mxu0 0.0
        %3998 = vmatpush1.msra.mxu0 0.0
        %3999 = vmatprep.subr.mxu0 0.0
        %4000 = vmatpush1.msra.mxu0 0.0
        %4001 = vmatprep.subr.mxu0 0.0
        %4002 = vmatpush1.msra.mxu0 0.0
        %4003 = vmatprep.subr.mxu0 0.0
        %4004 = vmatpush1.msra.mxu0 0.0
        %4005 = vmatprep.subr.mxu0 0.0
        %4006 = vmatpush1.msra.mxu0 0.0
        %4007 = vmatprep.subr.mxu0 0.0
        %4008 = vmatpush1.msra.mxu0 0.0
        %4009 = vmatprep.subr.mxu0 0.0
        %4010 = vmatpush1.msra.mxu0 0.0
        %4011 = vmatprep.subr.mxu0 0.0
        %4012 = vmatpush1.msra.mxu0 0.0
        %4013 = vmatprep.subr.mxu0 0.0
        %4014 = vmatpush1.msra.mxu0 0.0
        %4015 = vmatprep.subr.mxu0 0.0
        %4016 = vmatpush1.msra.mxu0 0.0
        %4017 = vmatprep.subr.mxu0 0.0
        %4018 = vmatpush1.msra.mxu0 0.0
        %4019 = vmatprep.subr.mxu0 0.0
        %4020 = vmatpush1.msra.mxu0 0.0
        %4021 = vmatprep.subr.mxu0 0.0
        %4022 = vmatpush1.msra.mxu0 0.0
        %4023 = vmatprep.subr.mxu0 0.0
        %4024 = vmatpush1.msra.mxu0 0.0
        %4025 = vmatprep.subr.mxu0 0.0
        %4026 = vmatpush1.msra.mxu0 0.0
        %4027 = vmatprep.subr.mxu0 0.0
        %4028 = vmatpush1.msra.mxu0 0.0
        %4029 = vmatprep.subr.mxu0 0.0
        %4030 = vmatpush1.msra.mxu0 0.0
        %4031 = vmatprep.subr.mxu0 0.0
        %4032 = vmatpush1.msra.mxu0 0.0
        %4033 = vmatprep.subr.mxu0 0.0
        %4034 = vmatpush1.msra.mxu0 0.0
        %4035 = vmatprep.subr.mxu0 0.0
        %4036 = vmatpush1.msra.mxu0 0.0
        %4037 = vmatprep.subr.mxu0 0.0
        %4038 = vmatpush1.msra.mxu0 0.0
        %4039 = vmatprep.subr.mxu0 0.0
        %4040 = vmatpush1.msra.mxu0 0.0
        %4041 = vmatprep.subr.mxu0 0.0
        %4042 = vmatpush1.msra.mxu0 0.0
        %4043 = vmatprep.mubr.f32.mxu0 0.0
        %4044 = vmatmul.mubr.f32.gmra.mrb[0].mxu0 %v3977
        %v4045 = vpop.f32.mrb[0].mxu0
        %v4046 = vadd.f32 0.0, %v4045
        %v4047 = vpop.f32.mrb[0].mxu0
        %4048 = vdwg.mxu0
        %4051 = vrot.lane.b32.xlu0 %v3651, 8
        %v4052 = vpop.permute.xlu0 %4051
        %4053 = vrot.lane.b32.xlu0 %v3730, 8
        %v4054 = vpop.permute.xlu0 %4053
        %4059 = vrot.lane.b32.xlu0 %v3809, 16
        %v4060 = vpop.permute.xlu0 %4059
        %4061 = vrot.lane.b32.xlu0 %v3888, 16
        %v4062 = vpop.permute.xlu0 %4061
        %4067 = vrot.lane.b32.xlu0 %v3967, 24
        %v4068 = vpop.permute.xlu0 %4067
        %4069 = vrot.lane.b32.xlu0 %v4046, 24
        %v4070 = vpop.permute.xlu0 %4069
        %v4073 = vsel %vm984, %v3493, %v4052
        %v4074 = vsel %vm984, %v3572, %v4054
        %v4075 = vsel %vm2321, %v4073, %v4060
        %v4076 = vsel %vm2321, %v4074, %v4062
        %v4077 = vsel %vm2324, %v4075, %v4068
        %v4078 = vsel %vm2324, %v4076, %v4070
        %v4080 = vlaneseq
        %v4081 = vshrl.u32 %v4080, 7
        %v4082 = vsub.s32 0, %v4081
        %v4083 = vrot.slane %v2656, %v4082
        %v4086 = vsel %vm749, %v4077, 0
        %v4089 = vsel %vm749, %v4078, 0
        %4091 = vmatprep.subr.mxu0 0.0
        %4092 = vmatpush1.msra.mxu0 %v2652
        %4093 = vmatprep.subr.mxu0 0.0
        %4094 = vmatpush1.msra.mxu0 %v2653
        %4095 = vmatprep.subr.mxu0 0.0
        %4096 = vmatpush1.msra.mxu0 %v2654
        %4097 = vmatprep.subr.mxu0 0.0
        %4098 = vmatpush1.msra.mxu0 %v2655
        %4099 = vmatprep.subr.mxu0 0.0
        %4100 = vmatpush1.msra.mxu0 0.0
        %4101 = vmatprep.subr.mxu0 0.0
        %4102 = vmatpush1.msra.mxu0 0.0
        %4103 = vmatprep.subr.mxu0 0.0
        %4104 = vmatpush1.msra.mxu0 0.0
        %4105 = vmatprep.subr.mxu0 0.0
        %4106 = vmatpush1.msra.mxu0 0.0
        %4107 = vmatprep.subr.mxu0 0.0
        %4108 = vmatpush1.msra.mxu0 0.0
        %4109 = vmatprep.subr.mxu0 0.0
        %4110 = vmatpush1.msra.mxu0 0.0
        %4111 = vmatprep.subr.mxu0 0.0
        %4112 = vmatpush1.msra.mxu0 0.0
        %4113 = vmatprep.subr.mxu0 0.0
        %4114 = vmatpush1.msra.mxu0 0.0
        %4115 = vmatprep.subr.mxu0 0.0
        %4116 = vmatpush1.msra.mxu0 0.0
        %4117 = vmatprep.subr.mxu0 0.0
        %4118 = vmatpush1.msra.mxu0 0.0
        %4119 = vmatprep.subr.mxu0 0.0
        %4120 = vmatpush1.msra.mxu0 0.0
        %4121 = vmatprep.subr.mxu0 0.0
        %4122 = vmatpush1.msra.mxu0 0.0
        %4123 = vmatprep.subr.mxu0 0.0
        %4124 = vmatpush1.msra.mxu0 0.0
        %4125 = vmatprep.subr.mxu0 0.0
        %4126 = vmatpush1.msra.mxu0 0.0
        %4127 = vmatprep.subr.mxu0 0.0
        %4128 = vmatpush1.msra.mxu0 0.0
        %4129 = vmatprep.subr.mxu0 0.0
        %4130 = vmatpush1.msra.mxu0 0.0
        %4131 = vmatprep.subr.mxu0 0.0
        %4132 = vmatpush1.msra.mxu0 0.0
        %4133 = vmatprep.subr.mxu0 0.0
        %4134 = vmatpush1.msra.mxu0 0.0
        %4135 = vmatprep.subr.mxu0 0.0
        %4136 = vmatpush1.msra.mxu0 0.0
        %4137 = vmatprep.subr.mxu0 0.0
        %4138 = vmatpush1.msra.mxu0 0.0
        %4139 = vmatprep.subr.mxu0 0.0
        %4140 = vmatpush1.msra.mxu0 0.0
        %4141 = vmatprep.subr.mxu0 0.0
        %4142 = vmatpush1.msra.mxu0 0.0
        %4143 = vmatprep.subr.mxu0 0.0
        %4144 = vmatpush1.msra.mxu0 0.0
        %4145 = vmatprep.subr.mxu0 0.0
        %4146 = vmatpush1.msra.mxu0 0.0
        %4147 = vmatprep.subr.mxu0 0.0
        %4148 = vmatpush1.msra.mxu0 0.0
        %4149 = vmatprep.subr.mxu0 0.0
        %4150 = vmatpush1.msra.mxu0 0.0
        %4151 = vmatprep.subr.mxu0 0.0
        %4152 = vmatpush1.msra.mxu0 0.0
        %4153 = vmatprep.subr.mxu0 0.0
        %4154 = vmatpush1.msra.mxu0 0.0
        %4155 = vmatprep.mubr.f32.mxu0 0.0
        %4156 = vmatmul.mubr.f32.gmra.mrb[0].mxu0 %v4086
        %v4157 = vpop.f32.mrb[0].mxu0
        %v4158 = vadd.f32 %v4083, %v4157
        %v4159 = vpop.f32.mrb[0].mxu0
        %4160 = vmatprep.mubr.f32.mxu0 0.0
        %4161 = vmatmul.mubr.f32.gmra.mrb[0].mxu0 %v4089
        %v4162 = vpop.f32.mrb[0].mxu0
        %v4163 = vadd.f32 %v4083, %v4162
        %v4164 = vpop.f32.mrb[0].mxu0
        %4165 = vdwg.mxu0
        %v4166 = vadd.f32 %v2450, %v4158
        %v4167 = vadd.f32 %v2451, %v4163
        %v4168 = vsel %vm749, %v4166, 0.0
        %4169 = vadd.xlane.f32.xlu0 %v4168
        %v4170 = vpop.xlane.xlu0 %4169
        %v4171 = vsel %vm749, %v4167, 0.0
        %4172 = vadd.xlane.f32.xlu0 %v4171
        %v4173 = vpop.xlane.xlu0 %4172
        %v4174 = vmul.f32 %v4170, %v756
        %v4175 = vmul.f32 %v4173, %v756
        %v4176 = vsub.f32 %v4166, %v4174
        %v4177 = vsub.f32 %v4167, %v4175
        %v4178 = vmul.f32 %v4176, %v4176
        %v4179 = vmul.f32 %v4177, %v4177
        %v4180 = vsel %vm749, %v4178, 0.0
        %4181 = vadd.xlane.f32.xlu0 %v4180
        %v4182 = vpop.xlane.xlu0 %4181
        %v4183 = vsel %vm749, %v4179, 0.0
        %4184 = vadd.xlane.f32.xlu0 %v4183
        %v4185 = vpop.xlane.xlu0 %4184
        %v4186 = vmul.f32 %v4182, %v756
        %v4187 = vmul.f32 %v4185, %v756
        %v4188 = vadd.f32 %v4186, 1e-05
        %v4189 = vadd.f32 %v4187, 1e-05
        %v4190 = vrsqrt.pop %v4188
        %v4191 = vrsqrt.pop %v4189
        %v4192 = vmul.f32 %v4176, %v4190
        %v4193 = vmul.f32 %v4177, %v4191
        %v4194 = vlaneseq
        %v4195 = vshrl.u32 %v4194, 7
        %v4196 = vsub.s32 3, %v4195
        %v4197 = vrot.slane %v741, %v4196
        %v4198 = vmul.f32 %v4192, %v4197
        %v4199 = vmul.f32 %v4193, %v4197
        %v4200 = vlaneseq
        %v4201 = vshrl.u32 %v4200, 7
        %v4202 = vsub.s32 3, %v4201
        %v4203 = vrot.slane %v742, %v4202
        %v4204 = vadd.f32 %v4198, %v4203
        %v4205 = vadd.f32 %v4199, %v4203
        %v4206 = vadd.f32 %v3409, %v3411
        %v4207 = vadd.f32 %v3410, %v3412
        %v4208 = vadd.f32 %v4206, %v3413
        %v4209 = vadd.f32 %v4207, %v3414
        %v4210 = vadd.f32 %v4208, %v3415
        %v4211 = vadd.f32 %v4209, %v3416
        %v4212 = vmul.f32 %v4210, 0.25
        %v4213 = vmul.f32 %v4211, 0.25
        %4214 = vst.msk [vmem:[%s725] sm:$0xff] %vm2321, %v4212
        %4215 = vst.msk [vmem:[%s725 + $0x8] sm:$0xff] %vm2321, %v4213
        %v4216 = vld [vmem:[#allocation13] sm:$0xff]
        %v4217 = vld [vmem:[#allocation13 + $0x8] sm:$0xff]
        %v4218 = vld [vmem:[#allocation13 + $0x10] sm:$0xff]
        %v4219 = vld [vmem:[#allocation13 + $0x18] sm:$0xff]
        %v4220 = vld [vmem:[%s15] sm:$0x1]
        %v4222 = vlaneseq
        %v4223 = vshrl.u32 %v4222, 7
        %v4224 = vsub.s32 0, %v4223
        %v4225 = vrot.slane %v4220, %v4224
        %v4228 = vsel %vm749, %v4204, 0
        %v4231 = vsel %vm749, %v4205, 0
        %4233 = vmatprep.subr.mxu0 0.0
        %4234 = vmatpush1.msra.mxu0 %v4216
        %4235 = vmatprep.subr.mxu0 0.0
        %4236 = vmatpush1.msra.mxu0 %v4217
        %4237 = vmatprep.subr.mxu0 0.0
        %4238 = vmatpush1.msra.mxu0 %v4218
        %4239 = vmatprep.subr.mxu0 0.0
        %4240 = vmatpush1.msra.mxu0 %v4219
        %4241 = vmatprep.subr.mxu0 0.0
        %4242 = vmatpush1.msra.mxu0 0.0
        %4243 = vmatprep.subr.mxu0 0.0
        %4244 = vmatpush1.msra.mxu0 0.0
        %4245 = vmatprep.subr.mxu0 0.0
        %4246 = vmatpush1.msra.mxu0 0.0
        %4247 = vmatprep.subr.mxu0 0.0
        %4248 = vmatpush1.msra.mxu0 0.0
        %4249 = vmatprep.subr.mxu0 0.0
        %4250 = vmatpush1.msra.mxu0 0.0
        %4251 = vmatprep.subr.mxu0 0.0
        %4252 = vmatpush1.msra.mxu0 0.0
        %4253 = vmatprep.subr.mxu0 0.0
        %4254 = vmatpush1.msra.mxu0 0.0
        %4255 = vmatprep.subr.mxu0 0.0
        %4256 = vmatpush1.msra.mxu0 0.0
        %4257 = vmatprep.subr.mxu0 0.0
        %4258 = vmatpush1.msra.mxu0 0.0
        %4259 = vmatprep.subr.mxu0 0.0
        %4260 = vmatpush1.msra.mxu0 0.0
        %4261 = vmatprep.subr.mxu0 0.0
        %4262 = vmatpush1.msra.mxu0 0.0
        %4263 = vmatprep.subr.mxu0 0.0
        %4264 = vmatpush1.msra.mxu0 0.0
        %4265 = vmatprep.subr.mxu0 0.0
        %4266 = vmatpush1.msra.mxu0 0.0
        %4267 = vmatprep.subr.mxu0 0.0
        %4268 = vmatpush1.msra.mxu0 0.0
        %4269 = vmatprep.subr.mxu0 0.0
        %4270 = vmatpush1.msra.mxu0 0.0
        %4271 = vmatprep.subr.mxu0 0.0
        %4272 = vmatpush1.msra.mxu0 0.0
        %4273 = vmatprep.subr.mxu0 0.0
        %4274 = vmatpush1.msra.mxu0 0.0
        %4275 = vmatprep.subr.mxu0 0.0
        %4276 = vmatpush1.msra.mxu0 0.0
        %4277 = vmatprep.subr.mxu0 0.0
        %4278 = vmatpush1.msra.mxu0 0.0
        %4279 = vmatprep.subr.mxu0 0.0
        %4280 = vmatpush1.msra.mxu0 0.0
        %4281 = vmatprep.subr.mxu0 0.0
        %4282 = vmatpush1.msra.mxu0 0.0
        %4283 = vmatprep.subr.mxu0 0.0
        %4284 = vmatpush1.msra.mxu0 0.0
        %4285 = vmatprep.subr.mxu0 0.0
        %4286 = vmatpush1.msra.mxu0 0.0
        %4287 = vmatprep.subr.mxu0 0.0
        %4288 = vmatpush1.msra.mxu0 0.0
        %4289 = vmatprep.subr.mxu0 0.0
        %4290 = vmatpush1.msra.mxu0 0.0
        %4291 = vmatprep.subr.mxu0 0.0
        %4292 = vmatpush1.msra.mxu0 0.0
        %4293 = vmatprep.subr.mxu0 0.0
        %4294 = vmatpush1.msra.mxu0 0.0
        %4295 = vmatprep.subr.mxu0 0.0
        %4296 = vmatpush1.msra.mxu0 0.0
        %4297 = vmatprep.mubr.f32.mxu0 0.0
        %4298 = vmatmul.mubr.f32.gmra.mrb[0].mxu0 %v4228
        %v4299 = vpop.f32.mrb[0].mxu0
        %v4300 = vadd.f32 %v4225, %v4299
        %v4301 = vpop.f32.mrb[0].mxu0
        %4302 = vmatprep.mubr.f32.mxu0 0.0
        %4303 = vmatmul.mubr.f32.gmra.mrb[0].mxu0 %v4231
        %v4304 = vpop.f32.mrb[0].mxu0
        %v4305 = vadd.f32 %v4225, %v4304
        %v4306 = vpop.f32.mrb[0].mxu0
        %4307 = vdwg.mxu0
        %v4308 = vmax.f32 %v4300, 0.0
        %v4309 = vmax.f32 %v4305, 0.0
        %v4310 = vld [vmem:[%s16] sm:$0xff]
        %v4311 = vld [vmem:[%s16 + $0x8] sm:$0xff]
        %v4312 = vld [vmem:[%s16 + $0x10] sm:$0xff]
        %v4313 = vld [vmem:[%s16 + $0x18] sm:$0xff]
        %v4314 = vld [vmem:[%s16 + $0x20] sm:$0xff]
        %v4315 = vld [vmem:[%s16 + $0x28] sm:$0xff]
        %v4316 = vld [vmem:[%s16 + $0x30] sm:$0xff]
        %v4317 = vld [vmem:[%s16 + $0x38] sm:$0xff]
        %v4318 = vld [vmem:[%s17] sm:$0x1]
        %v4320 = vlaneseq
        %v4321 = vshrl.u32 %v4320, 7
        %v4322 = vsub.s32 0, %v4321
        %v4323 = vrot.slane %v4318, %v4322
        %vm4325 = vcmask 523264
        %v4327 = vsel %vm4325, %v4308, 0
        %v4330 = vsel %vm4325, %v4309, 0
        %4332 = vmatprep.subr.mxu0 0.0
        %4333 = vmatpush1.msra.mxu0 %v4310
        %4334 = vmatprep.subr.mxu0 0.0
        %4335 = vmatpush1.msra.mxu0 %v4311
        %4336 = vmatprep.subr.mxu0 0.0
        %4337 = vmatpush1.msra.mxu0 %v4312
        %4338 = vmatprep.subr.mxu0 0.0
        %4339 = vmatpush1.msra.mxu0 %v4313
        %4340 = vmatprep.subr.mxu0 0.0
        %4341 = vmatpush1.msra.mxu0 %v4314
        %4342 = vmatprep.subr.mxu0 0.0
        %4343 = vmatpush1.msra.mxu0 %v4315
        %4344 = vmatprep.subr.mxu0 0.0
        %4345 = vmatpush1.msra.mxu0 %v4316
        %4346 = vmatprep.subr.mxu0 0.0
        %4347 = vmatpush1.msra.mxu0 %v4317
        %4348 = vmatprep.subr.mxu0 0.0
        %4349 = vmatpush1.msra.mxu0 0.0
        %4350 = vmatprep.subr.mxu0 0.0
        %4351 = vmatpush1.msra.mxu0 0.0
        %4352 = vmatprep.subr.mxu0 0.0
        %4353 = vmatpush1.msra.mxu0 0.0
        %4354 = vmatprep.subr.mxu0 0.0
        %4355 = vmatpush1.msra.mxu0 0.0
        %4356 = vmatprep.subr.mxu0 0.0
        %4357 = vmatpush1.msra.mxu0 0.0
        %4358 = vmatprep.subr.mxu0 0.0
        %4359 = vmatpush1.msra.mxu0 0.0
        %4360 = vmatprep.subr.mxu0 0.0
        %4361 = vmatpush1.msra.mxu0 0.0
        %4362 = vmatprep.subr.mxu0 0.0
        %4363 = vmatpush1.msra.mxu0 0.0
        %4364 = vmatprep.subr.mxu0 0.0
        %4365 = vmatpush1.msra.mxu0 0.0
        %4366 = vmatprep.subr.mxu0 0.0
        %4367 = vmatpush1.msra.mxu0 0.0
        %4368 = vmatprep.subr.mxu0 0.0
        %4369 = vmatpush1.msra.mxu0 0.0
        %4370 = vmatprep.subr.mxu0 0.0
        %4371 = vmatpush1.msra.mxu0 0.0
        %4372 = vmatprep.subr.mxu0 0.0
        %4373 = vmatpush1.msra.mxu0 0.0
        %4374 = vmatprep.subr.mxu0 0.0
        %4375 = vmatpush1.msra.mxu0 0.0
        %4376 = vmatprep.subr.mxu0 0.0
        %4377 = vmatpush1.msra.mxu0 0.0
        %4378 = vmatprep.subr.mxu0 0.0
        %4379 = vmatpush1.msra.mxu0 0.0
        %4380 = vmatprep.subr.mxu0 0.0
        %4381 = vmatpush1.msra.mxu0 0.0
        %4382 = vmatprep.subr.mxu0 0.0
        %4383 = vmatpush1.msra.mxu0 0.0
        %4384 = vmatprep.subr.mxu0 0.0
        %4385 = vmatpush1.msra.mxu0 0.0
        %4386 = vmatprep.subr.mxu0 0.0
        %4387 = vmatpush1.msra.mxu0 0.0
        %4388 = vmatprep.subr.mxu0 0.0
        %4389 = vmatpush1.msra.mxu0 0.0
        %4390 = vmatprep.subr.mxu0 0.0
        %4391 = vmatpush1.msra.mxu0 0.0
        %4392 = vmatprep.subr.mxu0 0.0
        %4393 = vmatpush1.msra.mxu0 0.0
        %4394 = vmatprep.subr.mxu0 0.0
        %4395 = vmatpush1.msra.mxu0 0.0
        %4396 = vmatprep.mubr.f32.mxu0 0.0
        %4397 = vmatmul.mubr.f32.gmra.mrb[0].mxu0 %v4327
        %v4398 = vpop.f32.mrb[0].mxu0
        %v4399 = vadd.f32 %v4323, %v4398
        %v4400 = vpop.f32.mrb[0].mxu0
        %4401 = vmatprep.mubr.f32.mxu0 0.0
        %4402 = vmatmul.mubr.f32.gmra.mrb[0].mxu0 %v4330
        %v4403 = vpop.f32.mrb[0].mxu0
        %v4404 = vadd.f32 %v4323, %v4403
        %v4405 = vpop.f32.mrb[0].mxu0
        %4406 = vdwg.mxu0
        %v4407 = vadd.f32 %v4204, %v4399
        %v4408 = vadd.f32 %v4205, %v4404
        %v4409 = vsel %vm749, %v4407, 0.0
        %4410 = vadd.xlane.f32.xlu0 %v4409
        %v4411 = vpop.xlane.xlu0 %4410
        %v4412 = vsel %vm749, %v4408, 0.0
        %4413 = vadd.xlane.f32.xlu0 %v4412
        %v4414 = vpop.xlane.xlu0 %4413
        %v4415 = vmul.f32 %v4411, %v756
        %v4416 = vmul.f32 %v4414, %v756
        %v4417 = vsub.f32 %v4407, %v4415
        %v4418 = vsub.f32 %v4408, %v4416
        %v4419 = vmul.f32 %v4417, %v4417
        %v4420 = vmul.f32 %v4418, %v4418
        %v4421 = vsel %vm749, %v4419, 0.0
        %4422 = vadd.xlane.f32.xlu0 %v4421
        %v4423 = vpop.xlane.xlu0 %4422
        %v4424 = vsel %vm749, %v4420, 0.0
        %4425 = vadd.xlane.f32.xlu0 %v4424
        %v4426 = vpop.xlane.xlu0 %4425
        %v4427 = vmul.f32 %v4423, %v756
        %v4428 = vmul.f32 %v4426, %v756
        %v4429 = vadd.f32 %v4427, 1e-05
        %v4430 = vadd.f32 %v4428, 1e-05
        %v4431 = vrsqrt.pop %v4429
        %v4432 = vrsqrt.pop %v4430
        %v4433 = vmul.f32 %v4417, %v4431
        %v4434 = vmul.f32 %v4418, %v4432
        %v4435 = vlaneseq
        %v4436 = vshrl.u32 %v4435, 7
        %v4437 = vsub.s32 4, %v4436
        %v4438 = vrot.slane %v741, %v4437
        %v4439 = vmul.f32 %v4433, %v4438
        %v4440 = vmul.f32 %v4434, %v4438
        %v4441 = vlaneseq
        %v4442 = vshrl.u32 %v4441, 7
        %v4443 = vsub.s32 4, %v4442
        %v4444 = vrot.slane %v742, %v4443
        %v4445 = vadd.f32 %v4439, %v4444
        %v4446 = vadd.f32 %v4440, %v4444
        %4447 = vst.msk [vmem:[%s718] sm:$0xff] %vm749, %v4445
        %4448 = vst.msk [vmem:[%s718 + $0x8] sm:$0xff] %vm749, %v4446
        %s4449 = sand.u32 %s437, 1
        %s4450 = scalar_lea.sflag [#allocation4], %s4449
        %s4451 = sand.u32 %s437, 1
        %s4452 = smul.addr %s4451, 16
        %s4453 = scalar_lea.vmem [#allocation14], %s4452
        %s4454 = sand.u32 %s463, 1
        %s4455 = scalar_lea.sflag [#allocation16], %s4454
        %s4456 = sand.u32 %s463, 1
        %s4457 = smul.addr %s4456, 16
        %s4458 = scalar_lea.vmem [#allocation15], %s4457
        // Predicated region
        $region121: #{tpu_custom_call.1} parent=91 // pred_check
          %p4459 = pneg %p447
        $region122: #{tpu_custom_call.1} parent=91 // pred_check_branch
          %4461 = sbr.rel (%p4459) target = $region124
        $region123: #{tpu_custom_call.1} parent=91 // pred_region
          %s4462 = smul.u32 2, %s41
          %s4464 = ssub.s32 256, 256
          %4465 = vsyncadd %s4450, %s4464
          %s4466 = smul.addr %s4462, 128
          %s4467 = scalar_lea.hbm %s18, %s4466
          %s4468 = sshll.u32 %s4453, 4
          %s4469 = int_to_ptr.vmem [resolvable:$true] %s4468
          %4474 = dma.vmem_to_hbm [thread:$0]  %s4469, 256, %s4467, %s4450, 128, 128, 8
        $region124: #{tpu_custom_call.1} parent=91 // pred_fallthru
          _
        // Predicated region
        $region125: #{tpu_custom_call.1} parent=91 // pred_check
          %p4475 = pneg %p473
        $region126: #{tpu_custom_call.1} parent=91 // pred_check_branch
          %4477 = sbr.rel (%p4475) target = $region128
        $region127: #{tpu_custom_call.1} parent=91 // pred_region
          %s4478 = smul.u32 2, %s41
          %s4480 = ssub.s32 256, 256
          %4481 = vsyncadd %s4455, %s4480
          %s4482 = smul.addr %s4478, 128
          %s4483 = scalar_lea.hbm %s19, %s4482
          %s4484 = sshll.u32 %s4458, 4
          %s4485 = int_to_ptr.vmem [resolvable:$true] %s4484
          %4490 = dma.vmem_to_hbm [thread:$0]  %s4485, 256, %s4483, %s4455, 128, 128, 8
        $region128: #{tpu_custom_call.1} parent=91 // pred_fallthru
          _
      $region92: #{tpu_custom_call.1} parent=5 // pred_fallthru
        _
      %p4491 = scmp.le.s32.totalorder 2, %s36
      // Predicated region
      $region129: #{tpu_custom_call.1} parent=5 // pred_check
        %p4492 = pneg %p4491
      $region130: #{tpu_custom_call.1} parent=5 // pred_check_branch
        %4494 = sbr.rel (%p4492) target = $region132
      $region131: #{tpu_custom_call.1} parent=5 // pred_region
        %s4495 = ssub.s32 %s36, 2
        // Predicated region
        $region133: #{tpu_custom_call.1} parent=131 // pred_check
          %p4496 = pneg %p453
        $region134: #{tpu_custom_call.1} parent=131 // pred_check_branch
          %4498 = sbr.rel (%p4496) target = $region136
        $region135: #{tpu_custom_call.1} parent=131 // pred_region
          %s4499 = sand.u32 %s438, 1
          %s4500 = scalar_lea.sflag [#allocation4], %s4499
          %s4501 = sand.u32 %s438, 1
          %s4502 = smul.addr %s4501, 16
          %s4503 = scalar_lea.vmem [#allocation14], %s4502
          %4504 = dma.done %s4500, 256
        $region136: #{tpu_custom_call.1} parent=131 // pred_fallthru
          _
        // Predicated region
        $region137: #{tpu_custom_call.1} parent=131 // pred_check
          %p4505 = pneg %p479
        $region138: #{tpu_custom_call.1} parent=131 // pred_check_branch
          %4507 = sbr.rel (%p4505) target = $region140
        $region139: #{tpu_custom_call.1} parent=131 // pred_region
          %s4508 = sand.u32 %s464, 1
          %s4509 = scalar_lea.sflag [#allocation16], %s4508
          %s4510 = sand.u32 %s464, 1
          %s4511 = smul.addr %s4510, 16
          %s4512 = scalar_lea.vmem [#allocation15], %s4511
          %4513 = dma.done %s4509, 256
        $region140: #{tpu_custom_call.1} parent=131 // pred_fallthru
          _
      $region132: #{tpu_custom_call.1} parent=5 // pred_fallthru
        _
    $region6: #{tpu_custom_call.1} parent=1 // loop_footer
      %s40 = sadd.s32 1, %s36
    $region7: #{tpu_custom_call.1} parent=1 // loop_footer_branch
      %35 = sbr.rel target = $region3
    $region8: #{tpu_custom_call.1} parent=1 // loop_exit
      _
    %4514 = vsyncpa [#allocation3], 1
    %s4515 = scalar_lea.sflag [#allocation3], 1
    %4516 = vsyncpa %s4515, 1
    %4517 = vsyncpa [#allocation6], 1
    %4518 = vsyncpa [#allocation9], 1
    %4519 = vsyncpa [#allocation12], 1
    %4520 = vsyncpa [#allocation4], 1
    %s4521 = scalar_lea.sflag [#allocation4], 1
    %4522 = vsyncpa %s4521, 1
    %4523 = vsyncpa [#allocation16], 1
    %s4524 = scalar_lea.sflag [#allocation16], 1
    %4525 = vsyncpa %s4524, 1

</llo_original>
